<compile_context>
chip_gen: v5e
topology: v5e:2x2
jax: 0.10.0
libtpu: 0.0.40
codegen_flags: <defaults>
</compile_context>

<pallas_src>
import functools

import jax
import jax.numpy as jnp
from jax import lax
from jax.experimental import pallas as pl
from jax.experimental.pallas import tpu as pltpu

_LANE = 128
_EPS = 1e-5                       # PyTorch LayerNorm default eps
_VMEM_LIMIT = 48 * 1024 * 1024    # stays below v7x's 64 MiB physical VMEM


def _round_up(x, m):
    return (x + m - 1) // m * m


def _masked_layernorm(y, gamma, beta, c_real, eps):
    # y: (M, Cp) f32; statistics over the first c_real (real) channels only,
    # so channel padding to 128 lanes does not change the LayerNorm math.
    cp = y.shape[-1]
    if c_real == cp:
        mu = jnp.mean(y, axis=-1, keepdims=True)
        var = jnp.mean(jnp.square(y - mu), axis=-1, keepdims=True)
    else:
        lane = lax.broadcasted_iota(jnp.int32, y.shape, y.ndim - 1)
        mask = (lane < c_real).astype(jnp.float32)
        mu = jnp.sum(y * mask, axis=-1, keepdims=True) / c_real
        var = jnp.sum(jnp.square(y - mu) * mask, axis=-1, keepdims=True) / c_real
    inv = lax.rsqrt(var + eps)
    return (y - mu) * inv * gamma + beta


# ----------------------------- tiled matmul ------------------------------

def _mm_kernel(x_ref, w_ref, b_ref, o_ref, acc_ref, *, n_k):
    k = pl.program_id(2)

    @pl.when(k == 0)
    def _():
        acc_ref[...] = jnp.zeros_like(acc_ref)

    acc_ref[...] += jnp.dot(x_ref[...].astype(jnp.bfloat16),
                            w_ref[...].astype(jnp.bfloat16),
                            preferred_element_type=jnp.float32)

    @pl.when(k == n_k - 1)
    def _():
        o_ref[...] = (acc_ref[...] + b_ref[...]).astype(o_ref.dtype)


def matmul_bias(x, w, b):
    # x: (M, K) @ w: (K, N) + b: (N,) -> (M, N) float32, tiled & pipelined.
    M, K = x.shape
    N = w.shape[1]
    Kp = _round_up(K, _LANE)
    Np = _round_up(N, _LANE)
    if M >= 256:
        TM = 256                              # v7x-safe tile (64 MiB VMEM)
        Mp = _round_up(M, TM)
    else:
        Mp = _round_up(M, 8)
        TM = Mp
    TK = Kp if Kp <= 512 else 512
    Kp = _round_up(Kp, TK)
    TN = Np if Np <= 512 else 512
    Np = _round_up(Np, TN)
    xp = jnp.pad(x, ((0, Mp - M), (0, Kp - K)))
    wp = jnp.pad(w, ((0, Kp - K), (0, Np - N)))
    bp = jnp.pad(b.reshape(1, N), ((0, 0), (0, Np - N)))
    n_k = Kp // TK
    out = pl.pallas_call(
        functools.partial(_mm_kernel, n_k=n_k),
        out_shape=jax.ShapeDtypeStruct((Mp, Np), jnp.float32),
        grid_spec=pltpu.PrefetchScalarGridSpec(
            num_scalar_prefetch=0,
            grid=(Mp // TM, Np // TN, n_k),
            in_specs=[
                pl.BlockSpec((TM, TK), lambda i, j, k: (i, k)),
                pl.BlockSpec((TK, TN), lambda i, j, k: (k, j)),
                pl.BlockSpec((1, TN), lambda i, j, k: (0, j)),
            ],
            out_specs=pl.BlockSpec((TM, TN), lambda i, j, k: (i, j)),
            scratch_shapes=[pltpu.VMEM((TM, TN), jnp.float32)],
        ),
        compiler_params=pltpu.CompilerParams(
            dimension_semantics=("parallel", "parallel", "arbitrary"),
            vmem_limit_bytes=_VMEM_LIMIT),
    )(xp, wp, bp)
    return out[:M, :N]


# ----------------------- fused stride-2 Conv1d + LN ------------------------

def _conv_ln_kernel(xe_ref, xo_ref, we_ref, wo_ref, b_ref, g_ref, bt_ref,
                    o_ref, *, c_real, eps):
    t_out = o_ref.shape[1]
    acc = jnp.zeros((t_out, o_ref.shape[2]), jnp.float32)
    xe = xe_ref[0]
    xo = xo_ref[0]
    for a in range(we_ref.shape[0]):              # even taps k = 2a
        acc += jnp.dot(xe[a:a + t_out, :].astype(jnp.bfloat16),
                       we_ref[a].astype(jnp.bfloat16),
                       preferred_element_type=jnp.float32)
    for a in range(wo_ref.shape[0]):              # odd taps k = 2a + 1
        acc += jnp.dot(xo[a:a + t_out, :].astype(jnp.bfloat16),
                       wo_ref[a].astype(jnp.bfloat16),
                       preferred_element_type=jnp.float32)
    y = acc + b_ref[...]
    o_ref[0] = _masked_layernorm(y, g_ref[...], bt_ref[...], c_real, eps)


def conv1d_ln(x, we, wo, bias, gamma, beta, *, pad, c_real, eps=_EPS):
    # Stride-2 Conv1d fused with LayerNorm.  The even/odd time split is done
    # once in the wrapper (1x input HBM traffic, not Kx im2col), the kernel
    # then only needs static contiguous window slices + per-tap MXU matmuls.
    # TODO(synk): per-batch full-time blocks; add T-tiling with a (K-1) halo
    # for extremely long utterances.
    B, T, cin = x.shape
    ke, _, coutp = we.shape
    ko = wo.shape[0]
    K = ke + ko
    t_out = (T + 2 * pad - K) // 2 + 1
    Le = t_out + ke - 1
    total = 2 * Le
    right = max(0, total - (T + pad))
    x_pad = jnp.pad(x, ((0, 0), (pad, right), (0, 0)))[:, :total, :]
    xe = x_pad[:, 0::2, :]
    xo = x_pad[:, 1::2, :]
    return pl.pallas_call(
        functools.partial(_conv_ln_kernel, c_real=c_real, eps=eps),
        out_shape=jax.ShapeDtypeStruct((B, t_out, coutp), jnp.float32),
        grid_spec=pltpu.PrefetchScalarGridSpec(
            num_scalar_prefetch=0,
            grid=(B,),
            in_specs=[
                pl.BlockSpec((1, Le, cin), lambda b: (b, 0, 0)),
                pl.BlockSpec((1, Le, cin), lambda b: (b, 0, 0)),
                pl.BlockSpec((ke, cin, coutp), lambda b: (0, 0, 0)),
                pl.BlockSpec((ko, cin, coutp), lambda b: (0, 0, 0)),
                pl.BlockSpec((1, coutp), lambda b: (0, 0)),
                pl.BlockSpec((1, coutp), lambda b: (0, 0)),
                pl.BlockSpec((1, coutp), lambda b: (0, 0)),
            ],
            out_specs=pl.BlockSpec((1, t_out, coutp), lambda b: (b, 0, 0)),
        ),
        compiler_params=pltpu.CompilerParams(
            dimension_semantics=("parallel",),
            vmem_limit_bytes=_VMEM_LIMIT),
    )(xe, xo, we, wo, bias, gamma, beta)


# ------------------------ fused LSTM recurrence + LN -----------------------

def _lstm_ln_kernel(xg_ref, whh_ref, g_ref, bt_ref, o_ref, h_sc, c_sc, out_buf,
                    *, h_real, eps):
    @pl.when(pl.program_id(1) == 0)
    def _():
        h_sc[...] = jnp.zeros_like(h_sc)
        c_sc[...] = jnp.zeros_like(c_sc)

    hp = h_sc.shape[-1]
    tc = out_buf.shape[0]
    xg = xg_ref[0]                                   # (tc, 4*hp)
    whh = whh_ref[...].astype(jnp.bfloat16)          # hoisted bf16 cast
    gamma = g_ref[...]
    beta = bt_ref[...]
    for s in range(tc):                              # unrolled time recurrence
        gates = xg[s:s + 1, :] + jnp.dot(h_sc[...].astype(jnp.bfloat16), whh,
                                         preferred_element_type=jnp.float32)
        # hp is a multiple of 128, so gate slices are lane-aligned vreg views.
        i = jax.nn.sigmoid(gates[:, 0 * hp:1 * hp])  # PyTorch order: i, f, g, o
        f = jax.nn.sigmoid(gates[:, 1 * hp:2 * hp])
        g = jnp.tanh(gates[:, 2 * hp:3 * hp])
        o = jax.nn.sigmoid(gates[:, 3 * hp:4 * hp])
        c = f * c_sc[...] + i * g
        h = o * jnp.tanh(c)
        c_sc[...] = c
        h_sc[...] = h
        out_buf[s:s + 1, :] = _masked_layernorm(h, gamma, beta, h_real, eps)
    o_ref[0] = out_buf[...]


def lstm_ln(x, wih, whh, bias, gamma, beta, *, h_real, eps=_EPS, max_chunk=32):
    # x: (B, T, Cp) -> LayerNorm(LSTM(x)) in (B, T, Hp); zero initial state.
    B, T, Cp = x.shape
    Hp = whh.shape[0]
    # Input projection for all steps at once (tiled MXU matmul, b_ih + b_hh).
    xg = matmul_bias(x.reshape(B * T, Cp), wih, bias).reshape(B, T, 4 * Hp)
    if T <= max_chunk:
        TC, Tp = T, T
    else:
        TC = max_chunk
        Tp = _round_up(T, TC)
        xg = jnp.pad(xg, ((0, 0), (0, Tp - T), (0, 0)))
    out = pl.pallas_call(
        functools.partial(_lstm_ln_kernel, h_real=h_real, eps=eps),
        out_shape=jax.ShapeDtypeStruct((B, Tp, Hp), jnp.float32),
        grid_spec=pltpu.PrefetchScalarGridSpec(
            num_scalar_prefetch=0,
            grid=(B, Tp // TC),
            in_specs=[
                pl.BlockSpec((1, TC, 4 * Hp), lambda b, t: (b, t, 0)),
                pl.BlockSpec((Hp, 4 * Hp), lambda b, t: (0, 0)),
                pl.BlockSpec((1, Hp), lambda b, t: (0, 0)),
                pl.BlockSpec((1, Hp), lambda b, t: (0, 0)),
            ],
            out_specs=pl.BlockSpec((1, TC, Hp), lambda b, t: (b, t, 0)),
            scratch_shapes=[pltpu.VMEM((1, Hp), jnp.float32),
                            pltpu.VMEM((1, Hp), jnp.float32),
                            pltpu.VMEM((TC, Hp), jnp.float32)],
        ),
        compiler_params=pltpu.CompilerParams(
            dimension_semantics=("parallel", "arbitrary"),
            vmem_limit_bytes=_VMEM_LIMIT),
    )(xg, whh, gamma, beta)
    return out[:, :T, :]


# --------------------------- fused DFSMN layer -----------------------------

def _dfsmn_layer_kernel(x_ref, wh_ref, bh_ref, wp_ref, coef_ref, o_ref, pbuf,
                        *, use_skip):
    t = pl.program_id(1)
    tt = o_ref.shape[1]
    taps = coef_ref.shape[0]
    mem = taps - 1

    x = x_ref[0]                                     # (tt, Cin_p)
    h = jnp.dot(x.astype(jnp.bfloat16), wh_ref[...].astype(jnp.bfloat16),
                preferred_element_type=jnp.float32) + bh_ref[...]
    h = jnp.maximum(h, 0.0)
    p = jnp.dot(h.astype(jnp.bfloat16), wp_ref[...].astype(jnp.bfloat16),
                preferred_element_type=jnp.float32)  # (tt, Pp)

    if mem > 0:
        @pl.when(t == 0)
        def _():
            pbuf[0:mem, :] = jnp.zeros((mem, pbuf.shape[1]), jnp.float32)
    pbuf[mem:mem + tt, :] = p
    win = pbuf[...]                                  # frames [t*tt - mem, t*tt + tt)

    acc = p
    if use_skip:
        acc = acc + x                                # identity skip from layer input
    coef = coef_ref[...]
    # TODO(synk): DFSMN class is not defined in the reference file; this follows
    # the standard DFSMN memory p_hat_t = skip + p_t + sum_{i=0..N} a_i * p_{t-i}.
    for i in range(taps):
        acc = acc + coef[i:i + 1, :] * win[mem - i:mem - i + tt, :]
    o_ref[0] = acc.astype(o_ref.dtype)

    if mem > 0:
        pbuf[0:mem, :] = win[tt:tt + mem, :]         # carry last `mem` frames


def dfsmn_layer(x, wh, bh, wp, coef, *, use_skip, max_tile=256):
    # One fused DFSMN layer: Linear+ReLU -> projection -> causal FIR + skip.
    B, T, cin_p = x.shape
    hh_p = wh.shape[1]
    taps, proj_p = coef.shape
    mem = taps - 1
    if T <= max_tile:
        TT, Tp = T, T
    else:
        TT = max_tile
        Tp = _round_up(T, TT)
        x = jnp.pad(x, ((0, 0), (0, Tp - T), (0, 0)))
    out = pl.pallas_call(
        functools.partial(_dfsmn_layer_kernel, use_skip=use_skip),
        out_shape=jax.ShapeDtypeStruct((B, Tp, proj_p), jnp.float32),
        grid_spec=pltpu.PrefetchScalarGridSpec(
            num_scalar_prefetch=0,
            grid=(B, Tp // TT),
            in_specs=[
                pl.BlockSpec((1, TT, cin_p), lambda b, t: (b, t, 0)),
                pl.BlockSpec((cin_p, hh_p), lambda b, t: (0, 0)),
                pl.BlockSpec((1, hh_p), lambda b, t: (0, 0)),
                pl.BlockSpec((hh_p, proj_p), lambda b, t: (0, 0)),
                pl.BlockSpec((taps, proj_p), lambda b, t: (0, 0)),
            ],
            out_specs=pl.BlockSpec((1, TT, proj_p), lambda b, t: (b, t, 0)),
            scratch_shapes=[pltpu.VMEM((mem + TT, proj_p), jnp.float32)],
        ),
        compiler_params=pltpu.CompilerParams(
            dimension_semantics=("parallel", "arbitrary"),
            vmem_limit_bytes=_VMEM_LIMIT),
    )(x, wh, bh, wp, coef)
    return out[:, :T, :]


# ------------------------------ model glue --------------------------------

def init_params(key, input_size, memory_size, hidden_size, output_size,
                projection_size, n_layers):
    keys = jax.random.split(key, 16 + n_layers)

    def w(k, shape, scale=0.1):
        return scale * jax.random.normal(k, shape, jnp.float32)

    p = {
        "conv1_w": w(keys[0], (output_size, input_size, 5)),
        "conv1_b": w(keys[1], (output_size,)),
        "conv2_w": w(keys[2], (output_size, output_size, 3)),
        "conv2_b": w(keys[3], (output_size,)),
        "ln1_g": jnp.ones((output_size,), jnp.float32),
        "ln1_b": jnp.zeros((output_size,), jnp.float32),
        "ln2_g": jnp.ones((output_size,), jnp.float32),
        "ln2_b": jnp.zeros((output_size,), jnp.float32),
        "ln3_g": jnp.ones((output_size,), jnp.float32),
        "ln3_b": jnp.zeros((output_size,), jnp.float32),
        "lstm_wih": w(keys[4], (4 * output_size, output_size)),
        "lstm_whh": w(keys[5], (4 * output_size, output_size)),
        "lstm_bih": w(keys[6], (4 * output_size,)),
        "lstm_bhh": w(keys[7], (4 * output_size,)),
        "dfsmn_Wo": w(keys[8], (projection_size, output_size)),
        "dfsmn_bo": w(keys[9], (output_size,)),
    }
    layers = []
    for l in range(n_layers):
        in_size = output_size if l == 0 else projection_size
        kk = jax.random.split(keys[16 + l], 4)
        layers.append(dict(
            Wh=w(kk[0], (in_size, hidden_size)),
            bh=w(kk[1], (hidden_size,)),
            Wp=w(kk[2], (hidden_size, projection_size)),
            coef=w(kk[3], (memory_size + 1, projection_size)),
        ))
    p["dfsmn_layers"] = layers
    return p


def make_encoder(*, input_size, memory_size, hidden_size, output_size,
                 projection_size, n_layers):
    del memory_size  # implied by coef shapes
    Cp = _round_up(output_size, _LANE)     # padded conv / LSTM channel dim
    Hp = Cp                                # LSTM hidden == output_size
    HHp = _round_up(hidden_size, _LANE)
    Pp = _round_up(projection_size, _LANE)

    def _prep_conv(w, b, g, bt, cin_target):
        cout, cin, _ = w.shape
        wq = jnp.pad(w, ((0, Cp - cout), (0, cin_target - cin), (0, 0)))
        we = jnp.transpose(wq[:, :, 0::2], (2, 1, 0))   # (ke, cin_target, Cp)
        wo = jnp.transpose(wq[:, :, 1::2], (2, 1, 0))   # (ko, cin_target, Cp)
        return dict(
            we=we, wo=wo,
            b=jnp.pad(b, (0, Cp - cout)).reshape(1, Cp),
            g=jnp.pad(g, (0, Cp - cout)).reshape(1, Cp),
            bt=jnp.pad(bt, (0, Cp - cout)).reshape(1, Cp),
        )

    def prepare(params):
        # One-time re-layout of PyTorch-format weights into padded, lane-dense
        # kernel-friendly layouts (runs once, outside the hot path).
        H = output_size
        prep = {
            "conv1": _prep_conv(params["conv1_w"], params["conv1_b"],
                                params["ln1_g"], params["ln1_b"], input_size),
            "conv2": _prep_conv(params["conv2_w"], params["conv2_b"],
                                params["ln2_g"], params["ln2_b"], Cp),
        }
        wih = jnp.pad(params["lstm_wih"].reshape(4, H, output_size),
                      ((0, 0), (0, Hp - H), (0, Cp - output_size)))
        prep["lstm_wih"] = jnp.transpose(wih, (2, 0, 1)).reshape(Cp, 4 * Hp)
        whh = jnp.pad(params["lstm_whh"].reshape(4, H, H),
                      ((0, 0), (0, Hp - H), (0, Hp - H)))
        prep["lstm_whh"] = jnp.transpose(whh, (2, 0, 1)).reshape(Hp, 4 * Hp)
        bias = (params["lstm_bih"] + params["lstm_bhh"]).reshape(4, H)
        prep["lstm_bias"] = jnp.pad(bias, ((0, 0), (0, Hp - H))).reshape(4 * Hp)
        prep["ln3_g"] = jnp.pad(params["ln3_g"], (0, Hp - H)).reshape(1, Hp)
        prep["ln3_b"] = jnp.pad(params["ln3_b"], (0, Hp - H)).reshape(1, Hp)
        layers = []
        for l, lp in enumerate(params["dfsmn_layers"]):
            in_size = output_size if l == 0 else projection_size
            in_p = Cp if l == 0 else Pp
            layers.append(dict(
                Wh=jnp.pad(lp["Wh"], ((0, in_p - in_size),
                                      (0, HHp - hidden_size))),
                bh=jnp.pad(lp["bh"], (0, HHp - hidden_size)).reshape(1, HHp),
                Wp=jnp.pad(lp["Wp"], ((0, HHp - hidden_size),
                                      (0, Pp - projection_size))),
                coef=jnp.pad(lp["coef"], ((0, 0), (0, Pp - projection_size))),
            ))
        prep["dfsmn_layers"] = layers
        prep["dfsmn_Wo"] = jnp.pad(params["dfsmn_Wo"],
                                   ((0, Pp - projection_size),
                                    (0, Cp - output_size)))
        prep["dfsmn_bo"] = jnp.pad(params["dfsmn_bo"], (0, Cp - output_size))
        return prep

    def forward(prep, x):
        # x: (B, T, input_size)
        c1 = prep["conv1"]
        out = conv1d_ln(x, c1["we"], c1["wo"], c1["b"], c1["g"], c1["bt"],
                        pad=2, c_real=output_size)                  # conv1 + LN1
        c2 = prep["conv2"]
        out = conv1d_ln(out, c2["we"], c2["wo"], c2["b"], c2["g"], c2["bt"],
                        pad=1, c_real=output_size)                  # conv2 + LN2
        out = lstm_ln(out, prep["lstm_wih"], prep["lstm_whh"],
                      prep["lstm_bias"], prep["ln3_g"], prep["ln3_b"],
                      h_real=output_size)                           # LSTM + LN3
        h = out
        for l, lp in enumerate(prep["dfsmn_layers"]):
            h = dfsmn_layer(h, lp["Wh"], lp["bh"], lp["Wp"], lp["coef"],
                            use_skip=(l > 0))
        B, T2, P = h.shape
        y = matmul_bias(h.reshape(B * T2, P), prep["dfsmn_Wo"],
                        prep["dfsmn_bo"])
        return y.reshape(B, T2, -1)[:, :, :output_size]

    return prepare, forward


if __name__ == "__main__":
    # small config consistent with the module's __init__ signature
    input_size, memory_size, hidden_size = 16, 4, 64
    output_size, projection_size, n_layers = 32, 48, 2
    B, T = 2, 16

    key = jax.random.PRNGKey(0)
    pkey, xkey = jax.random.split(key)
    params = init_params(pkey, input_size, memory_size, hidden_size,
                         output_size, projection_size, n_layers)
    prepare, forward = make_encoder(
        input_size=input_size, memory_size=memory_size,
        hidden_size=hidden_size, output_size=output_size,
        projection_size=projection_size, n_layers=n_layers)
    prepped = prepare(params)
    x = jax.random.normal(xkey, (B, T, input_size), jnp.float32)

    y = jax.jit(forward)(prepped, x)
    jax.block_until_ready(y)
    assert y.shape == (B, 4, output_size), y.shape  # T=16 -> 8 -> 4 after two stride-2 convs
    print("KERNEL_OK")
</pallas_src>

<mosaic_0001>
module attributes {stable_mosaic.version = 11 : i64} {
  func.func @_conv_ln_kernel(%arg0: i32, %arg1: memref<1x10x16xf32, #tpu.memory_space<vmem>>, %arg2: memref<1x10x16xf32, #tpu.memory_space<vmem>>, %arg3: memref<3x16x128xf32, #tpu.memory_space<vmem>>, %arg4: memref<2x16x128xf32, #tpu.memory_space<vmem>>, %arg5: memref<1x128xf32, #tpu.memory_space<vmem>>, %arg6: memref<1x128xf32, #tpu.memory_space<vmem>>, %arg7: memref<1x128xf32, #tpu.memory_space<vmem>>, %arg8: memref<1x8x128xf32, #tpu.memory_space<vmem>>) attributes {dimension_semantics = [#tpu.dimension_semantics<parallel>], iteration_bounds = array<i64: 2>, scalar_prefetch = 0 : i64, scratch_operands = 0 : i64, tpu.core_type = #tpu.core_type<tc>, window_params = [{transform_indices = @transform_0, window_bounds = array<i64: 1, 10, 16>}, {transform_indices = @transform_1, window_bounds = array<i64: 1, 10, 16>}, {pipeline_mode = #tpu.pipeline_mode<synchronous>, transform_indices = @transform_2, window_bounds = array<i64: 3, 16, 128>}, {pipeline_mode = #tpu.pipeline_mode<synchronous>, transform_indices = @transform_3, window_bounds = array<i64: 2, 16, 128>}, {pipeline_mode = #tpu.pipeline_mode<synchronous>, transform_indices = @transform_4, window_bounds = array<i64: 1, 128>}, {pipeline_mode = #tpu.pipeline_mode<synchronous>, transform_indices = @transform_5, window_bounds = array<i64: 1, 128>}, {pipeline_mode = #tpu.pipeline_mode<synchronous>, transform_indices = @transform_6, window_bounds = array<i64: 1, 128>}, {transform_indices = @transform_7, window_bounds = array<i64: 1, 8, 128>}]} {
    %cst = arith.constant 0.000000e+00 : f32
    %0 = vector.broadcast %cst : f32 to vector<8x128xf32>
    %c0 = arith.constant 0 : index
    %c0_0 = arith.constant 0 : index
    %c0_1 = arith.constant 0 : index
    %1 = vector.load %arg1[%c0, %c0_0, %c0_1] : memref<1x10x16xf32, #tpu.memory_space<vmem>>, vector<1x10x16xf32>
    %2 = vector.shape_cast %1 : vector<1x10x16xf32> to vector<10x16xf32>
    %c0_2 = arith.constant 0 : index
    %c0_3 = arith.constant 0 : index
    %c0_4 = arith.constant 0 : index
    %3 = vector.load %arg2[%c0_2, %c0_3, %c0_4] : memref<1x10x16xf32, #tpu.memory_space<vmem>>, vector<1x10x16xf32>
    %4 = vector.shape_cast %3 : vector<1x10x16xf32> to vector<10x16xf32>
    %5 = vector.extract_strided_slice %2 {offsets = [0, 0], sizes = [8, 16], strides = [1, 1]} : vector<10x16xf32> to vector<8x16xf32>
    %6 = arith.truncf %5 : vector<8x16xf32> to vector<8x16xbf16>
    %c0_5 = arith.constant 0 : index
    %c0_6 = arith.constant 0 : index
    %c0_7 = arith.constant 0 : index
    %7 = vector.load %arg3[%c0_5, %c0_6, %c0_7] : memref<3x16x128xf32, #tpu.memory_space<vmem>>, vector<1x16x128xf32>
    %8 = vector.shape_cast %7 : vector<1x16x128xf32> to vector<16x128xf32>
    %9 = arith.truncf %8 : vector<16x128xf32> to vector<16x128xbf16>
    %cst_8 = arith.constant dense<0.000000e+00> : vector<8x128xf32>
    %10 = tpu.matmul %6, %9, %cst_8 {dimension_numbers = #tpu.dot_dimension_numbers<[1], [0], [0], [1], [0, 0, 1, 1], [], []>} : vector<8x16xbf16>, vector<16x128xbf16>, vector<8x128xf32> -> vector<8x128xf32>
    %11 = arith.addf %0, %10 : vector<8x128xf32>
    %12 = vector.extract_strided_slice %2 {offsets = [1, 0], sizes = [8, 16], strides = [1, 1]} : vector<10x16xf32> to vector<8x16xf32>
    %13 = arith.truncf %12 : vector<8x16xf32> to vector<8x16xbf16>
    %c1 = arith.constant 1 : index
    %c0_9 = arith.constant 0 : index
    %c0_10 = arith.constant 0 : index
    %14 = vector.load %arg3[%c1, %c0_9, %c0_10] : memref<3x16x128xf32, #tpu.memory_space<vmem>>, vector<1x16x128xf32>
    %15 = vector.shape_cast %14 : vector<1x16x128xf32> to vector<16x128xf32>
    %16 = arith.truncf %15 : vector<16x128xf32> to vector<16x128xbf16>
    %cst_11 = arith.constant dense<0.000000e+00> : vector<8x128xf32>
    %17 = tpu.matmul %13, %16, %cst_11 {dimension_numbers = #tpu.dot_dimension_numbers<[1], [0], [0], [1], [0, 0, 1, 1], [], []>} : vector<8x16xbf16>, vector<16x128xbf16>, vector<8x128xf32> -> vector<8x128xf32>
    %18 = arith.addf %11, %17 : vector<8x128xf32>
    %19 = vector.extract_strided_slice %2 {offsets = [2, 0], sizes = [8, 16], strides = [1, 1]} : vector<10x16xf32> to vector<8x16xf32>
    %20 = arith.truncf %19 : vector<8x16xf32> to vector<8x16xbf16>
    %c2 = arith.constant 2 : index
    %c0_12 = arith.constant 0 : index
    %c0_13 = arith.constant 0 : index
    %21 = vector.load %arg3[%c2, %c0_12, %c0_13] : memref<3x16x128xf32, #tpu.memory_space<vmem>>, vector<1x16x128xf32>
    %22 = vector.shape_cast %21 : vector<1x16x128xf32> to vector<16x128xf32>
    %23 = arith.truncf %22 : vector<16x128xf32> to vector<16x128xbf16>
    %cst_14 = arith.constant dense<0.000000e+00> : vector<8x128xf32>
    %24 = tpu.matmul %20, %23, %cst_14 {dimension_numbers = #tpu.dot_dimension_numbers<[1], [0], [0], [1], [0, 0, 1, 1], [], []>} : vector<8x16xbf16>, vector<16x128xbf16>, vector<8x128xf32> -> vector<8x128xf32>
    %25 = arith.addf %18, %24 : vector<8x128xf32>
    %26 = vector.extract_strided_slice %4 {offsets = [0, 0], sizes = [8, 16], strides = [1, 1]} : vector<10x16xf32> to vector<8x16xf32>
    %27 = arith.truncf %26 : vector<8x16xf32> to vector<8x16xbf16>
    %c0_15 = arith.constant 0 : index
    %c0_16 = arith.constant 0 : index
    %c0_17 = arith.constant 0 : index
    %28 = vector.load %arg4[%c0_15, %c0_16, %c0_17] : memref<2x16x128xf32, #tpu.memory_space<vmem>>, vector<1x16x128xf32>
    %29 = vector.shape_cast %28 : vector<1x16x128xf32> to vector<16x128xf32>
    %30 = arith.truncf %29 : vector<16x128xf32> to vector<16x128xbf16>
    %cst_18 = arith.constant dense<0.000000e+00> : vector<8x128xf32>
    %31 = tpu.matmul %27, %30, %cst_18 {dimension_numbers = #tpu.dot_dimension_numbers<[1], [0], [0], [1], [0, 0, 1, 1], [], []>} : vector<8x16xbf16>, vector<16x128xbf16>, vector<8x128xf32> -> vector<8x128xf32>
    %32 = arith.addf %25, %31 : vector<8x128xf32>
    %33 = vector.extract_strided_slice %4 {offsets = [1, 0], sizes = [8, 16], strides = [1, 1]} : vector<10x16xf32> to vector<8x16xf32>
    %34 = arith.truncf %33 : vector<8x16xf32> to vector<8x16xbf16>
    %c1_19 = arith.constant 1 : index
    %c0_20 = arith.constant 0 : index
    %c0_21 = arith.constant 0 : index
    %35 = vector.load %arg4[%c1_19, %c0_20, %c0_21] : memref<2x16x128xf32, #tpu.memory_space<vmem>>, vector<1x16x128xf32>
    %36 = vector.shape_cast %35 : vector<1x16x128xf32> to vector<16x128xf32>
    %37 = arith.truncf %36 : vector<16x128xf32> to vector<16x128xbf16>
    %cst_22 = arith.constant dense<0.000000e+00> : vector<8x128xf32>
    %38 = tpu.matmul %34, %37, %cst_22 {dimension_numbers = #tpu.dot_dimension_numbers<[1], [0], [0], [1], [0, 0, 1, 1], [], []>} : vector<8x16xbf16>, vector<16x128xbf16>, vector<8x128xf32> -> vector<8x128xf32>
    %39 = arith.addf %32, %38 : vector<8x128xf32>
    %c0_23 = arith.constant 0 : index
    %c0_24 = arith.constant 0 : index
    %40 = vector.load %arg5[%c0_23, %c0_24] : memref<1x128xf32, #tpu.memory_space<vmem>>, vector<1x128xf32>
    %41 = vector.broadcast %40 : vector<1x128xf32> to vector<8x128xf32>
    %42 = arith.addf %39, %41 : vector<8x128xf32>
    %c0_25 = arith.constant 0 : index
    %c0_26 = arith.constant 0 : index
    %43 = vector.load %arg6[%c0_25, %c0_26] : memref<1x128xf32, #tpu.memory_space<vmem>>, vector<1x128xf32>
    %c0_27 = arith.constant 0 : index
    %c0_28 = arith.constant 0 : index
    %44 = vector.load %arg7[%c0_27, %c0_28] : memref<1x128xf32, #tpu.memory_space<vmem>>, vector<1x128xf32>
    %45 = tpu.iota {dimensions = array<i32: 1>} : vector<8x128xi32>
    %c32_i32 = arith.constant 32 : i32
    %46 = vector.broadcast %c32_i32 : i32 to vector<8x128xi32>
    %47 = arith.cmpi slt, %45, %46 : vector<8x128xi32>
    %48 = arith.extui %47 : vector<8x128xi1> to vector<8x128xi32>
    %49 = arith.sitofp %48 : vector<8x128xi32> to vector<8x128xf32>
    %50 = arith.mulf %42, %49 : vector<8x128xf32>
    %cst_29 = arith.constant dense<0.000000e+00> : vector<8xf32>
    %51 = vector.multi_reduction <add>, %50, %cst_29 [1] : vector<8x128xf32> to vector<8xf32>
    %52 = vector.shape_cast %51 : vector<8xf32> to vector<8x1xf32>
    %cst_30 = arith.constant 3.200000e+01 : f32
    %53 = vector.broadcast %cst_30 : f32 to vector<8x1xf32>
    %54 = arith.divf %52, %53 : vector<8x1xf32>
    %55 = vector.broadcast %54 : vector<8x1xf32> to vector<8x128xf32>
    %56 = arith.subf %42, %55 : vector<8x128xf32>
    %57 = arith.mulf %56, %56 : vector<8x128xf32>
    %58 = arith.mulf %57, %49 : vector<8x128xf32>
    %cst_31 = arith.constant dense<0.000000e+00> : vector<8xf32>
    %59 = vector.multi_reduction <add>, %58, %cst_31 [1] : vector<8x128xf32> to vector<8xf32>
    %60 = vector.shape_cast %59 : vector<8xf32> to vector<8x1xf32>
    %cst_32 = arith.constant 3.200000e+01 : f32
    %61 = vector.broadcast %cst_32 : f32 to vector<8x1xf32>
    %62 = arith.divf %60, %61 : vector<8x1xf32>
    %cst_33 = arith.constant 9.99999974E-6 : f32
    %63 = vector.broadcast %cst_33 : f32 to vector<8x1xf32>
    %64 = arith.addf %62, %63 : vector<8x1xf32>
    %65 = math.rsqrt %64 : vector<8x1xf32>
    %66 = vector.broadcast %54 : vector<8x1xf32> to vector<8x128xf32>
    %67 = arith.subf %42, %66 : vector<8x128xf32>
    %68 = vector.broadcast %65 : vector<8x1xf32> to vector<8x128xf32>
    %69 = arith.mulf %67, %68 : vector<8x128xf32>
    %70 = vector.broadcast %43 : vector<1x128xf32> to vector<8x128xf32>
    %71 = arith.mulf %69, %70 : vector<8x128xf32>
    %72 = vector.broadcast %44 : vector<1x128xf32> to vector<8x128xf32>
    %73 = arith.addf %71, %72 : vector<8x128xf32>
    %c0_34 = arith.constant 0 : index
    %c0_35 = arith.constant 0 : index
    %c0_36 = arith.constant 0 : index
    %74 = vector.load %arg8[%c0_34, %c0_35, %c0_36] : memref<1x8x128xf32, #tpu.memory_space<vmem>>, vector<1x8x128xf32>
    %75 = vector.shape_cast %74 : vector<1x8x128xf32> to vector<8x128xf32>
    %76 = vector.shape_cast %73 : vector<8x128xf32> to vector<1x8x128xf32>
    tpu.vector_store %arg8[%c0_34, %c0_35, %c0_36], %76 {strides = array<i32>} : memref<1x8x128xf32, #tpu.memory_space<vmem>>, vector<1x8x128xf32>,
    return
  }
  func.func @transform_0(%arg0: i32) -> (i32, i32, i32) {
    %c0_i32 = arith.constant 0 : i32
    %c0_i32_0 = arith.constant 0 : i32
    %c0_i32_1 = arith.constant 0 : i32
    return %arg0, %c0_i32, %c0_i32_0 : i32, i32, i32
  }
  func.func @transform_1(%arg0: i32) -> (i32, i32, i32) {
    %c0_i32 = arith.constant 0 : i32
    %c0_i32_0 = arith.constant 0 : i32
    %c0_i32_1 = arith.constant 0 : i32
    return %arg0, %c0_i32, %c0_i32_0 : i32, i32, i32
  }
  func.func @transform_2(%arg0: i32) -> (i32, i32, i32) {
    %c0_i32 = arith.constant 0 : i32
    %c0_i32_0 = arith.constant 0 : i32
    %c0_i32_1 = arith.constant 0 : i32
    %c0_i32_2 = arith.constant 0 : i32
    return %c0_i32, %c0_i32_0, %c0_i32_1 : i32, i32, i32
  }
  func.func @transform_3(%arg0: i32) -> (i32, i32, i32) {
    %c0_i32 = arith.constant 0 : i32
    %c0_i32_0 = arith.constant 0 : i32
    %c0_i32_1 = arith.constant 0 : i32
    %c0_i32_2 = arith.constant 0 : i32
    return %c0_i32, %c0_i32_0, %c0_i32_1 : i32, i32, i32
  }
  func.func @transform_4(%arg0: i32) -> (i32, i32) {
    %c0_i32 = arith.constant 0 : i32
    %c0_i32_0 = arith.constant 0 : i32
    %c0_i32_1 = arith.constant 0 : i32
    return %c0_i32, %c0_i32_0 : i32, i32
  }
  func.func @transform_5(%arg0: i32) -> (i32, i32) {
    %c0_i32 = arith.constant 0 : i32
    %c0_i32_0 = arith.constant 0 : i32
    %c0_i32_1 = arith.constant 0 : i32
    return %c0_i32, %c0_i32_0 : i32, i32
  }
  func.func @transform_6(%arg0: i32) -> (i32, i32) {
    %c0_i32 = arith.constant 0 : i32
    %c0_i32_0 = arith.constant 0 : i32
    %c0_i32_1 = arith.constant 0 : i32
    return %c0_i32, %c0_i32_0 : i32, i32
  }
  func.func @transform_7(%arg0: i32) -> (i32, i32, i32) {
    %c0_i32 = arith.constant 0 : i32
    %c0_i32_0 = arith.constant 0 : i32
    %c0_i32_1 = arith.constant 0 : i32
    return %arg0, %c0_i32, %c0_i32_0 : i32, i32, i32
  }
}

module attributes {stable_mosaic.version = 11 : i64} {
  func.func @_mm_kernel(%arg0: i32, %arg1: i32, %arg2: i32, %arg3: memref<8x128xf32, #tpu.memory_space<vmem>>, %arg4: memref<128x512xf32, #tpu.memory_space<vmem>>, %arg5: memref<1x512xf32, #tpu.memory_space<vmem>>, %arg6: memref<8x512xf32, #tpu.memory_space<vmem>>, %arg7: memref<8x512xf32, #tpu.memory_space<vmem>>) attributes {dimension_semantics = [#tpu.dimension_semantics<parallel>, #tpu.dimension_semantics<parallel>, #tpu.dimension_semantics<arbitrary>], iteration_bounds = array<i64: 1, 1, 1>, scalar_prefetch = 0 : i64, scratch_operands = 1 : i64, tpu.core_type = #tpu.core_type<tc>, window_params = [{transform_indices = @transform_0, window_bounds = array<i64: 8, 128>}, {transform_indices = @transform_1, window_bounds = array<i64: 128, 512>}, {transform_indices = @transform_2, window_bounds = array<i64: 1, 512>}, {transform_indices = @transform_3, window_bounds = array<i64: 8, 512>}]} {
    %c0_i32 = arith.constant 0 : i32
    %0 = arith.cmpi eq, %arg2, %c0_i32 : i32
    %1 = arith.extui %0 : i1 to i32
    %c0_i32_0 = arith.constant 0 : i32
    %2 = arith.cmpi ne, %1, %c0_i32_0 : i32
    scf.if %2 {
      %cst_10 = arith.constant 0.000000e+00 : f32
      %14 = vector.broadcast %cst_10 : f32 to vector<8x512xf32>
      %c0_11 = arith.constant 0 : index
      %c0_12 = arith.constant 0 : index
      %15 = vector.load %arg7[%c0_11, %c0_12] : memref<8x512xf32, #tpu.memory_space<vmem>>, vector<8x512xf32>
      tpu.vector_store %arg7[%c0_11, %c0_12], %14 {strides = array<i32>} : memref<8x512xf32, #tpu.memory_space<vmem>>, vector<8x512xf32>,
    } else {
    }
    %c0 = arith.constant 0 : index
    %c0_1 = arith.constant 0 : index
    %3 = vector.load %arg7[%c0, %c0_1] : memref<8x512xf32, #tpu.memory_space<vmem>>, vector<8x512xf32>
    %c0_2 = arith.constant 0 : index
    %c0_3 = arith.constant 0 : index
    %4 = vector.load %arg3[%c0_2, %c0_3] : memref<8x128xf32, #tpu.memory_space<vmem>>, vector<8x128xf32>
    %5 = arith.truncf %4 : vector<8x128xf32> to vector<8x128xbf16>
    %c0_4 = arith.constant 0 : index
    %c0_5 = arith.constant 0 : index
    %6 = vector.load %arg4[%c0_4, %c0_5] : memref<128x512xf32, #tpu.memory_space<vmem>>, vector<128x512xf32>
    %7 = arith.truncf %6 : vector<128x512xf32> to vector<128x512xbf16>
    %cst = arith.constant dense<0.000000e+00> : vector<8x512xf32>
    %8 = tpu.matmul %5, %7, %cst {dimension_numbers = #tpu.dot_dimension_numbers<[1], [0], [0], [1], [0, 0, 1, 1], [], []>} : vector<8x128xbf16>, vector<128x512xbf16>, vector<8x512xf32> -> vector<8x512xf32>
    %9 = arith.addf %3, %8 : vector<8x512xf32>
    %c0_6 = arith.constant 0 : index
    %c0_7 = arith.constant 0 : index
    %10 = vector.load %arg7[%c0_6, %c0_7] : memref<8x512xf32, #tpu.memory_space<vmem>>, vector<8x512xf32>
    tpu.vector_store %arg7[%c0_6, %c0_7], %9 {strides = array<i32>} : memref<8x512xf32, #tpu.memory_space<vmem>>, vector<8x512xf32>,
    %c0_i32_8 = arith.constant 0 : i32
    %11 = arith.cmpi eq, %arg2, %c0_i32_8 : i32
    %12 = arith.extui %11 : i1 to i32
    %c0_i32_9 = arith.constant 0 : i32
    %13 = arith.cmpi ne, %12, %c0_i32_9 : i32
    scf.if %13 {
      %c0_10 = arith.constant 0 : index
      %c0_11 = arith.constant 0 : index
      %14 = vector.load %arg7[%c0_10, %c0_11] : memref<8x512xf32, #tpu.memory_space<vmem>>, vector<8x512xf32>
      %c0_12 = arith.constant 0 : index
      %c0_13 = arith.constant 0 : index
      %15 = vector.load %arg5[%c0_12, %c0_13] : memref<1x512xf32, #tpu.memory_space<vmem>>, vector<1x512xf32>
      %16 = vector.broadcast %15 : vector<1x512xf32> to vector<8x512xf32>
      %17 = arith.addf %14, %16 : vector<8x512xf32>
      %c0_14 = arith.constant 0 : index
      %c0_15 = arith.constant 0 : index
      %18 = vector.load %arg6[%c0_14, %c0_15] : memref<8x512xf32, #tpu.memory_space<vmem>>, vector<8x512xf32>
      tpu.vector_store %arg6[%c0_14, %c0_15], %17 {strides = array<i32>} : memref<8x512xf32, #tpu.memory_space<vmem>>, vector<8x512xf32>,
    } else {
    }
    return
  }
  func.func @transform_0(%arg0: i32, %arg1: i32, %arg2: i32) -> (i32, i32) {
    %c0_i32 = arith.constant 0 : i32
    return %arg0, %arg2 : i32, i32
  }
  func.func @transform_1(%arg0: i32, %arg1: i32, %arg2: i32) -> (i32, i32) {
    %c0_i32 = arith.constant 0 : i32
    return %arg2, %arg1 : i32, i32
  }
  func.func @transform_2(%arg0: i32, %arg1: i32, %arg2: i32) -> (i32, i32) {
    %c0_i32 = arith.constant 0 : i32
    %c0_i32_0 = arith.constant 0 : i32
    return %c0_i32, %arg1 : i32, i32
  }
  func.func @transform_3(%arg0: i32, %arg1: i32, %arg2: i32) -> (i32, i32) {
    %c0_i32 = arith.constant 0 : i32
    return %arg0, %arg1 : i32, i32
  }
}

module attributes {stable_mosaic.version = 11 : i64} {
  func.func @_conv_ln_kernel(%arg0: i32, %arg1: memref<1x5x128xf32, #tpu.memory_space<vmem>>, %arg2: memref<1x5x128xf32, #tpu.memory_space<vmem>>, %arg3: memref<2x128x128xf32, #tpu.memory_space<vmem>>, %arg4: memref<1x128x128xf32, #tpu.memory_space<vmem>>, %arg5: memref<1x128xf32, #tpu.memory_space<vmem>>, %arg6: memref<1x128xf32, #tpu.memory_space<vmem>>, %arg7: memref<1x128xf32, #tpu.memory_space<vmem>>, %arg8: memref<1x4x128xf32, #tpu.memory_space<vmem>>) attributes {dimension_semantics = [#tpu.dimension_semantics<parallel>], iteration_bounds = array<i64: 2>, scalar_prefetch = 0 : i64, scratch_operands = 0 : i64, tpu.core_type = #tpu.core_type<tc>, window_params = [{transform_indices = @transform_0, window_bounds = array<i64: 1, 5, 128>}, {transform_indices = @transform_1, window_bounds = array<i64: 1, 5, 128>}, {pipeline_mode = #tpu.pipeline_mode<synchronous>, transform_indices = @transform_2, window_bounds = array<i64: 2, 128, 128>}, {pipeline_mode = #tpu.pipeline_mode<synchronous>, transform_indices = @transform_3, window_bounds = array<i64: 1, 128, 128>}, {pipeline_mode = #tpu.pipeline_mode<synchronous>, transform_indices = @transform_4, window_bounds = array<i64: 1, 128>}, {pipeline_mode = #tpu.pipeline_mode<synchronous>, transform_indices = @transform_5, window_bounds = array<i64: 1, 128>}, {pipeline_mode = #tpu.pipeline_mode<synchronous>, transform_indices = @transform_6, window_bounds = array<i64: 1, 128>}, {transform_indices = @transform_7, window_bounds = array<i64: 1, 4, 128>}]} {
    %cst = arith.constant 0.000000e+00 : f32
    %0 = vector.broadcast %cst : f32 to vector<4x128xf32>
    %c0 = arith.constant 0 : index
    %c0_0 = arith.constant 0 : index
    %c0_1 = arith.constant 0 : index
    %1 = vector.load %arg1[%c0, %c0_0, %c0_1] : memref<1x5x128xf32, #tpu.memory_space<vmem>>, vector<1x5x128xf32>
    %2 = vector.shape_cast %1 : vector<1x5x128xf32> to vector<5x128xf32>
    %c0_2 = arith.constant 0 : index
    %c0_3 = arith.constant 0 : index
    %c0_4 = arith.constant 0 : index
    %3 = vector.load %arg2[%c0_2, %c0_3, %c0_4] : memref<1x5x128xf32, #tpu.memory_space<vmem>>, vector<1x5x128xf32>
    %4 = vector.shape_cast %3 : vector<1x5x128xf32> to vector<5x128xf32>
    %5 = vector.extract_strided_slice %2 {offsets = [0, 0], sizes = [4, 128], strides = [1, 1]} : vector<5x128xf32> to vector<4x128xf32>
    %6 = arith.truncf %5 : vector<4x128xf32> to vector<4x128xbf16>
    %c0_5 = arith.constant 0 : index
    %c0_6 = arith.constant 0 : index
    %c0_7 = arith.constant 0 : index
    %7 = vector.load %arg3[%c0_5, %c0_6, %c0_7] : memref<2x128x128xf32, #tpu.memory_space<vmem>>, vector<1x128x128xf32>
    %8 = vector.shape_cast %7 : vector<1x128x128xf32> to vector<128x128xf32>
    %9 = arith.truncf %8 : vector<128x128xf32> to vector<128x128xbf16>
    %cst_8 = arith.constant dense<0.000000e+00> : vector<4x128xf32>
    %10 = tpu.matmul %6, %9, %cst_8 {dimension_numbers = #tpu.dot_dimension_numbers<[1], [0], [0], [1], [0, 0, 1, 1], [], []>} : vector<4x128xbf16>, vector<128x128xbf16>, vector<4x128xf32> -> vector<4x128xf32>
    %11 = arith.addf %0, %10 : vector<4x128xf32>
    %12 = vector.extract_strided_slice %2 {offsets = [1, 0], sizes = [4, 128], strides = [1, 1]} : vector<5x128xf32> to vector<4x128xf32>
    %13 = arith.truncf %12 : vector<4x128xf32> to vector<4x128xbf16>
    %c1 = arith.constant 1 : index
    %c0_9 = arith.constant 0 : index
    %c0_10 = arith.constant 0 : index
    %14 = vector.load %arg3[%c1, %c0_9, %c0_10] : memref<2x128x128xf32, #tpu.memory_space<vmem>>, vector<1x128x128xf32>
    %15 = vector.shape_cast %14 : vector<1x128x128xf32> to vector<128x128xf32>
    %16 = arith.truncf %15 : vector<128x128xf32> to vector<128x128xbf16>
    %cst_11 = arith.constant dense<0.000000e+00> : vector<4x128xf32>
    %17 = tpu.matmul %13, %16, %cst_11 {dimension_numbers = #tpu.dot_dimension_numbers<[1], [0], [0], [1], [0, 0, 1, 1], [], []>} : vector<4x128xbf16>, vector<128x128xbf16>, vector<4x128xf32> -> vector<4x128xf32>
    %18 = arith.addf %11, %17 : vector<4x128xf32>
    %19 = vector.extract_strided_slice %4 {offsets = [0, 0], sizes = [4, 128], strides = [1, 1]} : vector<5x128xf32> to vector<4x128xf32>
    %20 = arith.truncf %19 : vector<4x128xf32> to vector<4x128xbf16>
    %c0_12 = arith.constant 0 : index
    %c0_13 = arith.constant 0 : index
    %c0_14 = arith.constant 0 : index
    %21 = vector.load %arg4[%c0_12, %c0_13, %c0_14] : memref<1x128x128xf32, #tpu.memory_space<vmem>>, vector<1x128x128xf32>
    %22 = vector.shape_cast %21 : vector<1x128x128xf32> to vector<128x128xf32>
    %23 = arith.truncf %22 : vector<128x128xf32> to vector<128x128xbf16>
    %cst_15 = arith.constant dense<0.000000e+00> : vector<4x128xf32>
    %24 = tpu.matmul %20, %23, %cst_15 {dimension_numbers = #tpu.dot_dimension_numbers<[1], [0], [0], [1], [0, 0, 1, 1], [], []>} : vector<4x128xbf16>, vector<128x128xbf16>, vector<4x128xf32> -> vector<4x128xf32>
    %25 = arith.addf %18, %24 : vector<4x128xf32>
    %c0_16 = arith.constant 0 : index
    %c0_17 = arith.constant 0 : index
    %26 = vector.load %arg5[%c0_16, %c0_17] : memref<1x128xf32, #tpu.memory_space<vmem>>, vector<1x128xf32>
    %27 = vector.broadcast %26 : vector<1x128xf32> to vector<4x128xf32>
    %28 = arith.addf %25, %27 : vector<4x128xf32>
    %c0_18 = arith.constant 0 : index
    %c0_19 = arith.constant 0 : index
    %29 = vector.load %arg6[%c0_18, %c0_19] : memref<1x128xf32, #tpu.memory_space<vmem>>, vector<1x128xf32>
    %c0_20 = arith.constant 0 : index
    %c0_21 = arith.constant 0 : index
    %30 = vector.load %arg7[%c0_20, %c0_21] : memref<1x128xf32, #tpu.memory_space<vmem>>, vector<1x128xf32>
    %31 = tpu.iota {dimensions = array<i32: 1>} : vector<4x128xi32>
    %c32_i32 = arith.constant 32 : i32
    %32 = vector.broadcast %c32_i32 : i32 to vector<4x128xi32>
    %33 = arith.cmpi slt, %31, %32 : vector<4x128xi32>
    %34 = arith.extui %33 : vector<4x128xi1> to vector<4x128xi32>
    %35 = arith.sitofp %34 : vector<4x128xi32> to vector<4x128xf32>
    %36 = arith.mulf %28, %35 : vector<4x128xf32>
    %cst_22 = arith.constant dense<0.000000e+00> : vector<4xf32>
    %37 = vector.multi_reduction <add>, %36, %cst_22 [1] : vector<4x128xf32> to vector<4xf32>
    %38 = vector.shape_cast %37 : vector<4xf32> to vector<4x1xf32>
    %cst_23 = arith.constant 3.200000e+01 : f32
    %39 = vector.broadcast %cst_23 : f32 to vector<4x1xf32>
    %40 = arith.divf %38, %39 : vector<4x1xf32>
    %41 = vector.broadcast %40 : vector<4x1xf32> to vector<4x128xf32>
    %42 = arith.subf %28, %41 : vector<4x128xf32>
    %43 = arith.mulf %42, %42 : vector<4x128xf32>
    %44 = arith.mulf %43, %35 : vector<4x128xf32>
    %cst_24 = arith.constant dense<0.000000e+00> : vector<4xf32>
    %45 = vector.multi_reduction <add>, %44, %cst_24 [1] : vector<4x128xf32> to vector<4xf32>
    %46 = vector.shape_cast %45 : vector<4xf32> to vector<4x1xf32>
    %cst_25 = arith.constant 3.200000e+01 : f32
    %47 = vector.broadcast %cst_25 : f32 to vector<4x1xf32>
    %48 = arith.divf %46, %47 : vector<4x1xf32>
    %cst_26 = arith.constant 9.99999974E-6 : f32
    %49 = vector.broadcast %cst_26 : f32 to vector<4x1xf32>
    %50 = arith.addf %48, %49 : vector<4x1xf32>
    %51 = math.rsqrt %50 : vector<4x1xf32>
    %52 = vector.broadcast %40 : vector<4x1xf32> to vector<4x128xf32>
    %53 = arith.subf %28, %52 : vector<4x128xf32>
    %54 = vector.broadcast %51 : vector<4x1xf32> to vector<4x128xf32>
    %55 = arith.mulf %53, %54 : vector<4x128xf32>
    %56 = vector.broadcast %29 : vector<1x128xf32> to vector<4x128xf32>
    %57 = arith.mulf %55, %56 : vector<4x128xf32>
    %58 = vector.broadcast %30 : vector<1x128xf32> to vector<4x128xf32>
    %59 = arith.addf %57, %58 : vector<4x128xf32>
    %c0_27 = arith.constant 0 : index
    %c0_28 = arith.constant 0 : index
    %c0_29 = arith.constant 0 : index
    %60 = vector.load %arg8[%c0_27, %c0_28, %c0_29] : memref<1x4x128xf32, #tpu.memory_space<vmem>>, vector<1x4x128xf32>
    %61 = vector.shape_cast %60 : vector<1x4x128xf32> to vector<4x128xf32>
    %62 = vector.shape_cast %59 : vector<4x128xf32> to vector<1x4x128xf32>
    tpu.vector_store %arg8[%c0_27, %c0_28, %c0_29], %62 {strides = array<i32>} : memref<1x4x128xf32, #tpu.memory_space<vmem>>, vector<1x4x128xf32>,
    return
  }
  func.func @transform_0(%arg0: i32) -> (i32, i32, i32) {
    %c0_i32 = arith.constant 0 : i32
    %c0_i32_0 = arith.constant 0 : i32
    %c0_i32_1 = arith.constant 0 : i32
    return %arg0, %c0_i32, %c0_i32_0 : i32, i32, i32
  }
  func.func @transform_1(%arg0: i32) -> (i32, i32, i32) {
    %c0_i32 = arith.constant 0 : i32
    %c0_i32_0 = arith.constant 0 : i32
    %c0_i32_1 = arith.constant 0 : i32
    return %arg0, %c0_i32, %c0_i32_0 : i32, i32, i32
  }
  func.func @transform_2(%arg0: i32) -> (i32, i32, i32) {
    %c0_i32 = arith.constant 0 : i32
    %c0_i32_0 = arith.constant 0 : i32
    %c0_i32_1 = arith.constant 0 : i32
    %c0_i32_2 = arith.constant 0 : i32
    return %c0_i32, %c0_i32_0, %c0_i32_1 : i32, i32, i32
  }
  func.func @transform_3(%arg0: i32) -> (i32, i32, i32) {
    %c0_i32 = arith.constant 0 : i32
    %c0_i32_0 = arith.constant 0 : i32
    %c0_i32_1 = arith.constant 0 : i32
    %c0_i32_2 = arith.constant 0 : i32
    return %c0_i32, %c0_i32_0, %c0_i32_1 : i32, i32, i32
  }
  func.func @transform_4(%arg0: i32) -> (i32, i32) {
    %c0_i32 = arith.constant 0 : i32
    %c0_i32_0 = arith.constant 0 : i32
    %c0_i32_1 = arith.constant 0 : i32
    return %c0_i32, %c0_i32_0 : i32, i32
  }
  func.func @transform_5(%arg0: i32) -> (i32, i32) {
    %c0_i32 = arith.constant 0 : i32
    %c0_i32_0 = arith.constant 0 : i32
    %c0_i32_1 = arith.constant 0 : i32
    return %c0_i32, %c0_i32_0 : i32, i32
  }
  func.func @transform_6(%arg0: i32) -> (i32, i32) {
    %c0_i32 = arith.constant 0 : i32
    %c0_i32_0 = arith.constant 0 : i32
    %c0_i32_1 = arith.constant 0 : i32
    return %c0_i32, %c0_i32_0 : i32, i32
  }
  func.func @transform_7(%arg0: i32) -> (i32, i32, i32) {
    %c0_i32 = arith.constant 0 : i32
    %c0_i32_0 = arith.constant 0 : i32
    %c0_i32_1 = arith.constant 0 : i32
    return %arg0, %c0_i32, %c0_i32_0 : i32, i32, i32
  }
}

module attributes {stable_mosaic.version = 11 : i64} {
  func.func @_lstm_ln_kernel(%arg0: i32, %arg1: i32, %arg2: memref<1x4x512xf32, #tpu.memory_space<vmem>>, %arg3: memref<128x512xf32, #tpu.memory_space<vmem>>, %arg4: memref<1x128xf32, #tpu.memory_space<vmem>>, %arg5: memref<1x128xf32, #tpu.memory_space<vmem>>, %arg6: memref<1x4x128xf32, #tpu.memory_space<vmem>>, %arg7: memref<1x128xf32, #tpu.memory_space<vmem>>, %arg8: memref<1x128xf32, #tpu.memory_space<vmem>>, %arg9: memref<4x128xf32, #tpu.memory_space<vmem>>) attributes {dimension_semantics = [#tpu.dimension_semantics<parallel>, #tpu.dimension_semantics<arbitrary>], iteration_bounds = array<i64: 2, 1>, scalar_prefetch = 0 : i64, scratch_operands = 3 : i64, tpu.core_type = #tpu.core_type<tc>, window_params = [{transform_indices = @transform_0, window_bounds = array<i64: 1, 4, 512>}, {pipeline_mode = #tpu.pipeline_mode<synchronous>, transform_indices = @transform_1, window_bounds = array<i64: 128, 512>}, {pipeline_mode = #tpu.pipeline_mode<synchronous>, transform_indices = @transform_2, window_bounds = array<i64: 1, 128>}, {pipeline_mode = #tpu.pipeline_mode<synchronous>, transform_indices = @transform_3, window_bounds = array<i64: 1, 128>}, {transform_indices = @transform_4, window_bounds = array<i64: 1, 4, 128>}]} {
    %c0_i32 = arith.constant 0 : i32
    %0 = arith.cmpi eq, %arg1, %c0_i32 : i32
    %1 = arith.extui %0 : i1 to i32
    %c0_i32_0 = arith.constant 0 : i32
    %2 = arith.cmpi ne, %1, %c0_i32_0 : i32
    scf.if %2 {
      %cst_89 = arith.constant 0.000000e+00 : f32
      %257 = vector.broadcast %cst_89 : f32 to vector<1x128xf32>
      %c0_90 = arith.constant 0 : index
      %c0_91 = arith.constant 0 : index
      %258 = vector.load %arg7[%c0_90, %c0_91] : memref<1x128xf32, #tpu.memory_space<vmem>>, vector<1x128xf32>
      tpu.vector_store %arg7[%c0_90, %c0_91], %257 {strides = array<i32>} : memref<1x128xf32, #tpu.memory_space<vmem>>, vector<1x128xf32>,
      %cst_92 = arith.constant 0.000000e+00 : f32
      %259 = vector.broadcast %cst_92 : f32 to vector<1x128xf32>
      %c0_93 = arith.constant 0 : index
      %c0_94 = arith.constant 0 : index
      %260 = vector.load %arg8[%c0_93, %c0_94] : memref<1x128xf32, #tpu.memory_space<vmem>>, vector<1x128xf32>
      tpu.vector_store %arg8[%c0_93, %c0_94], %259 {strides = array<i32>} : memref<1x128xf32, #tpu.memory_space<vmem>>, vector<1x128xf32>,
    } else {
    }
    %c0 = arith.constant 0 : index
    %c0_1 = arith.constant 0 : index
    %c0_2 = arith.constant 0 : index
    %3 = vector.load %arg2[%c0, %c0_1, %c0_2] : memref<1x4x512xf32, #tpu.memory_space<vmem>>, vector<1x4x512xf32>
    %4 = vector.shape_cast %3 : vector<1x4x512xf32> to vector<4x512xf32>
    %c0_3 = arith.constant 0 : index
    %c0_4 = arith.constant 0 : index
    %5 = vector.load %arg3[%c0_3, %c0_4] : memref<128x512xf32, #tpu.memory_space<vmem>>, vector<128x512xf32>
    %6 = arith.truncf %5 : vector<128x512xf32> to vector<128x512xbf16>
    %c0_5 = arith.constant 0 : index
    %c0_6 = arith.constant 0 : index
    %7 = vector.load %arg4[%c0_5, %c0_6] : memref<1x128xf32, #tpu.memory_space<vmem>>, vector<1x128xf32>
    %c0_7 = arith.constant 0 : index
    %c0_8 = arith.constant 0 : index
    %8 = vector.load %arg5[%c0_7, %c0_8] : memref<1x128xf32, #tpu.memory_space<vmem>>, vector<1x128xf32>
    %9 = vector.extract_strided_slice %4 {offsets = [0, 0], sizes = [1, 512], strides = [1, 1]} : vector<4x512xf32> to vector<1x512xf32>
    %c0_9 = arith.constant 0 : index
    %c0_10 = arith.constant 0 : index
    %10 = vector.load %arg7[%c0_9, %c0_10] : memref<1x128xf32, #tpu.memory_space<vmem>>, vector<1x128xf32>
    %11 = arith.truncf %10 : vector<1x128xf32> to vector<1x128xbf16>
    %cst = arith.constant dense<0.000000e+00> : vector<1x512xf32>
    %12 = tpu.matmul %11, %6, %cst {dimension_numbers = #tpu.dot_dimension_numbers<[1], [0], [0], [1], [0, 0, 1, 1], [], []>} : vector<1x128xbf16>, vector<128x512xbf16>, vector<1x512xf32> -> vector<1x512xf32>
    %13 = arith.addf %9, %12 : vector<1x512xf32>
    %14 = vector.extract_strided_slice %13 {offsets = [0, 0], sizes = [1, 128], strides = [1, 1]} : vector<1x512xf32> to vector<1x128xf32>
    %15 = arith.negf %14 : vector<1x128xf32>
    %16 = math.exp %15 : vector<1x128xf32>
    %cst_11 = arith.constant 1.000000e+00 : f32
    %17 = vector.broadcast %cst_11 : f32 to vector<1x128xf32>
    %18 = arith.addf %17, %16 : vector<1x128xf32>
    %19 = arith.divf %17, %18 : vector<1x128xf32>
    %20 = vector.extract_strided_slice %13 {offsets = [0, 128], sizes = [1, 128], strides = [1, 1]} : vector<1x512xf32> to vector<1x128xf32>
    %21 = arith.negf %20 : vector<1x128xf32>
    %22 = math.exp %21 : vector<1x128xf32>
    %cst_12 = arith.constant 1.000000e+00 : f32
    %23 = vector.broadcast %cst_12 : f32 to vector<1x128xf32>
    %24 = arith.addf %23, %22 : vector<1x128xf32>
    %25 = arith.divf %23, %24 : vector<1x128xf32>
    %26 = vector.extract_strided_slice %13 {offsets = [0, 256], sizes = [1, 128], strides = [1, 1]} : vector<1x512xf32> to vector<1x128xf32>
    %27 = math.tanh %26 : vector<1x128xf32>
    %28 = vector.extract_strided_slice %13 {offsets = [0, 384], sizes = [1, 128], strides = [1, 1]} : vector<1x512xf32> to vector<1x128xf32>
    %29 = arith.negf %28 : vector<1x128xf32>
    %30 = math.exp %29 : vector<1x128xf32>
    %cst_13 = arith.constant 1.000000e+00 : f32
    %31 = vector.broadcast %cst_13 : f32 to vector<1x128xf32>
    %32 = arith.addf %31, %30 : vector<1x128xf32>
    %33 = arith.divf %31, %32 : vector<1x128xf32>
    %c0_14 = arith.constant 0 : index
    %c0_15 = arith.constant 0 : index
    %34 = vector.load %arg8[%c0_14, %c0_15] : memref<1x128xf32, #tpu.memory_space<vmem>>, vector<1x128xf32>
    %35 = arith.mulf %25, %34 : vector<1x128xf32>
    %36 = arith.mulf %19, %27 : vector<1x128xf32>
    %37 = arith.addf %35, %36 : vector<1x128xf32>
    %38 = math.tanh %37 : vector<1x128xf32>
    %39 = arith.mulf %33, %38 : vector<1x128xf32>
    %c0_16 = arith.constant 0 : index
    %c0_17 = arith.constant 0 : index
    %40 = vector.load %arg8[%c0_16, %c0_17] : memref<1x128xf32, #tpu.memory_space<vmem>>, vector<1x128xf32>
    tpu.vector_store %arg8[%c0_16, %c0_17], %37 {strides = array<i32>} : memref<1x128xf32, #tpu.memory_space<vmem>>, vector<1x128xf32>,
    %c0_18 = arith.constant 0 : index
    %c0_19 = arith.constant 0 : index
    %41 = vector.load %arg7[%c0_18, %c0_19] : memref<1x128xf32, #tpu.memory_space<vmem>>, vector<1x128xf32>
    tpu.vector_store %arg7[%c0_18, %c0_19], %39 {strides = array<i32>} : memref<1x128xf32, #tpu.memory_space<vmem>>, vector<1x128xf32>,
    %42 = tpu.iota {dimensions = array<i32: 1>} : vector<1x128xi32>
    %c32_i32 = arith.constant 32 : i32
    %43 = vector.broadcast %c32_i32 : i32 to vector<1x128xi32>
    %44 = arith.cmpi slt, %42, %43 : vector<1x128xi32>
    %45 = arith.extui %44 : vector<1x128xi1> to vector<1x128xi32>
    %46 = arith.sitofp %45 : vector<1x128xi32> to vector<1x128xf32>
    %47 = arith.mulf %39, %46 : vector<1x128xf32>
    %cst_20 = arith.constant dense<0.000000e+00> : vector<1xf32>
    %48 = vector.multi_reduction <add>, %47, %cst_20 [1] : vector<1x128xf32> to vector<1xf32>
    %49 = vector.shape_cast %48 : vector<1xf32> to vector<1x1xf32>
    %cst_21 = arith.constant 3.200000e+01 : f32
    %50 = vector.broadcast %cst_21 : f32 to vector<1x1xf32>
    %51 = arith.divf %49, %50 : vector<1x1xf32>
    %52 = vector.broadcast %51 : vector<1x1xf32> to vector<1x128xf32>
    %53 = arith.subf %39, %52 : vector<1x128xf32>
    %54 = arith.mulf %53, %53 : vector<1x128xf32>
    %55 = arith.mulf %54, %46 : vector<1x128xf32>
    %cst_22 = arith.constant dense<0.000000e+00> : vector<1xf32>
    %56 = vector.multi_reduction <add>, %55, %cst_22 [1] : vector<1x128xf32> to vector<1xf32>
    %57 = vector.shape_cast %56 : vector<1xf32> to vector<1x1xf32>
    %cst_23 = arith.constant 3.200000e+01 : f32
    %58 = vector.broadcast %cst_23 : f32 to vector<1x1xf32>
    %59 = arith.divf %57, %58 : vector<1x1xf32>
    %cst_24 = arith.constant 9.99999974E-6 : f32
    %60 = vector.broadcast %cst_24 : f32 to vector<1x1xf32>
    %61 = arith.addf %59, %60 : vector<1x1xf32>
    %62 = math.rsqrt %61 : vector<1x1xf32>
    %63 = vector.broadcast %51 : vector<1x1xf32> to vector<1x128xf32>
    %64 = arith.subf %39, %63 : vector<1x128xf32>
    %65 = vector.broadcast %62 : vector<1x1xf32> to vector<1x128xf32>
    %66 = arith.mulf %64, %65 : vector<1x128xf32>
    %67 = arith.mulf %66, %7 : vector<1x128xf32>
    %68 = arith.addf %67, %8 : vector<1x128xf32>
    %c0_25 = arith.constant 0 : index
    %c0_26 = arith.constant 0 : index
    %69 = vector.load %arg9[%c0_25, %c0_26] : memref<4x128xf32, #tpu.memory_space<vmem>>, vector<1x128xf32>
    tpu.vector_store %arg9[%c0_25, %c0_26], %68 {strides = array<i32>} : memref<4x128xf32, #tpu.memory_space<vmem>>, vector<1x128xf32>,
    %70 = vector.extract_strided_slice %4 {offsets = [1, 0], sizes = [1, 512], strides = [1, 1]} : vector<4x512xf32> to vector<1x512xf32>
    %c0_27 = arith.constant 0 : index
    %c0_28 = arith.constant 0 : index
    %71 = vector.load %arg7[%c0_27, %c0_28] : memref<1x128xf32, #tpu.memory_space<vmem>>, vector<1x128xf32>
    %72 = arith.truncf %71 : vector<1x128xf32> to vector<1x128xbf16>
    %cst_29 = arith.constant dense<0.000000e+00> : vector<1x512xf32>
    %73 = tpu.matmul %72, %6, %cst_29 {dimension_numbers = #tpu.dot_dimension_numbers<[1], [0], [0], [1], [0, 0, 1, 1], [], []>} : vector<1x128xbf16>, vector<128x512xbf16>, vector<1x512xf32> -> vector<1x512xf32>
    %74 = arith.addf %70, %73 : vector<1x512xf32>
    %75 = vector.extract_strided_slice %74 {offsets = [0, 0], sizes = [1, 128], strides = [1, 1]} : vector<1x512xf32> to vector<1x128xf32>
    %76 = arith.negf %75 : vector<1x128xf32>
    %77 = math.exp %76 : vector<1x128xf32>
    %cst_30 = arith.constant 1.000000e+00 : f32
    %78 = vector.broadcast %cst_30 : f32 to vector<1x128xf32>
    %79 = arith.addf %78, %77 : vector<1x128xf32>
    %80 = arith.divf %78, %79 : vector<1x128xf32>
    %81 = vector.extract_strided_slice %74 {offsets = [0, 128], sizes = [1, 128], strides = [1, 1]} : vector<1x512xf32> to vector<1x128xf32>
    %82 = arith.negf %81 : vector<1x128xf32>
    %83 = math.exp %82 : vector<1x128xf32>
    %cst_31 = arith.constant 1.000000e+00 : f32
    %84 = vector.broadcast %cst_31 : f32 to vector<1x128xf32>
    %85 = arith.addf %84, %83 : vector<1x128xf32>
    %86 = arith.divf %84, %85 : vector<1x128xf32>
    %87 = vector.extract_strided_slice %74 {offsets = [0, 256], sizes = [1, 128], strides = [1, 1]} : vector<1x512xf32> to vector<1x128xf32>
    %88 = math.tanh %87 : vector<1x128xf32>
    %89 = vector.extract_strided_slice %74 {offsets = [0, 384], sizes = [1, 128], strides = [1, 1]} : vector<1x512xf32> to vector<1x128xf32>
    %90 = arith.negf %89 : vector<1x128xf32>
    %91 = math.exp %90 : vector<1x128xf32>
    %cst_32 = arith.constant 1.000000e+00 : f32
    %92 = vector.broadcast %cst_32 : f32 to vector<1x128xf32>
    %93 = arith.addf %92, %91 : vector<1x128xf32>
    %94 = arith.divf %92, %93 : vector<1x128xf32>
    %c0_33 = arith.constant 0 : index
    %c0_34 = arith.constant 0 : index
    %95 = vector.load %arg8[%c0_33, %c0_34] : memref<1x128xf32, #tpu.memory_space<vmem>>, vector<1x128xf32>
    %96 = arith.mulf %86, %95 : vector<1x128xf32>
    %97 = arith.mulf %80, %88 : vector<1x128xf32>
    %98 = arith.addf %96, %97 : vector<1x128xf32>
    %99 = math.tanh %98 : vector<1x128xf32>
    %100 = arith.mulf %94, %99 : vector<1x128xf32>
    %c0_35 = arith.constant 0 : index
    %c0_36 = arith.constant 0 : index
    %101 = vector.load %arg8[%c0_35, %c0_36] : memref<1x128xf32, #tpu.memory_space<vmem>>, vector<1x128xf32>
    tpu.vector_store %arg8[%c0_35, %c0_36], %98 {strides = array<i32>} : memref<1x128xf32, #tpu.memory_space<vmem>>, vector<1x128xf32>,
    %c0_37 = arith.constant 0 : index
    %c0_38 = arith.constant 0 : index
    %102 = vector.load %arg7[%c0_37, %c0_38] : memref<1x128xf32, #tpu.memory_space<vmem>>, vector<1x128xf32>
    tpu.vector_store %arg7[%c0_37, %c0_38], %100 {strides = array<i32>} : memref<1x128xf32, #tpu.memory_space<vmem>>, vector<1x128xf32>,
    %103 = tpu.iota {dimensions = array<i32: 1>} : vector<1x128xi32>
    %c32_i32_39 = arith.constant 32 : i32
    %104 = vector.broadcast %c32_i32_39 : i32 to vector<1x128xi32>
    %105 = arith.cmpi slt, %103, %104 : vector<1x128xi32>
    %106 = arith.extui %105 : vector<1x128xi1> to vector<1x128xi32>
    %107 = arith.sitofp %106 : vector<1x128xi32> to vector<1x128xf32>
    %108 = arith.mulf %100, %107 : vector<1x128xf32>
    %cst_40 = arith.constant dense<0.000000e+00> : vector<1xf32>
    %109 = vector.multi_reduction <add>, %108, %cst_40 [1] : vector<1x128xf32> to vector<1xf32>
    %110 = vector.shape_cast %109 : vector<1xf32> to vector<1x1xf32>
    %cst_41 = arith.constant 3.200000e+01 : f32
    %111 = vector.broadcast %cst_41 : f32 to vector<1x1xf32>
    %112 = arith.divf %110, %111 : vector<1x1xf32>
    %113 = vector.broadcast %112 : vector<1x1xf32> to vector<1x128xf32>
    %114 = arith.subf %100, %113 : vector<1x128xf32>
    %115 = arith.mulf %114, %114 : vector<1x128xf32>
    %116 = arith.mulf %115, %107 : vector<1x128xf32>
    %cst_42 = arith.constant dense<0.000000e+00> : vector<1xf32>
    %117 = vector.multi_reduction <add>, %116, %cst_42 [1] : vector<1x128xf32> to vector<1xf32>
    %118 = vector.shape_cast %117 : vector<1xf32> to vector<1x1xf32>
    %cst_43 = arith.constant 3.200000e+01 : f32
    %119 = vector.broadcast %cst_43 : f32 to vector<1x1xf32>
    %120 = arith.divf %118, %119 : vector<1x1xf32>
    %cst_44 = arith.constant 9.99999974E-6 : f32
    %121 = vector.broadcast %cst_44 : f32 to vector<1x1xf32>
    %122 = arith.addf %120, %121 : vector<1x1xf32>
    %123 = math.rsqrt %122 : vector<1x1xf32>
    %124 = vector.broadcast %112 : vector<1x1xf32> to vector<1x128xf32>
    %125 = arith.subf %100, %124 : vector<1x128xf32>
    %126 = vector.broadcast %123 : vector<1x1xf32> to vector<1x128xf32>
    %127 = arith.mulf %125, %126 : vector<1x128xf32>
    %128 = arith.mulf %127, %7 : vector<1x128xf32>
    %129 = arith.addf %128, %8 : vector<1x128xf32>
    %c1 = arith.constant 1 : index
    %c0_45 = arith.constant 0 : index
    %130 = vector.load %arg9[%c1, %c0_45] : memref<4x128xf32, #tpu.memory_space<vmem>>, vector<1x128xf32>
    tpu.vector_store %arg9[%c1, %c0_45], %129 {strides = array<i32>} : memref<4x128xf32, #tpu.memory_space<vmem>>, vector<1x128xf32>,
    %131 = vector.extract_strided_slice %4 {offsets = [2, 0], sizes = [1, 512], strides = [1, 1]} : vector<4x512xf32> to vector<1x512xf32>
    %c0_46 = arith.constant 0 : index
    %c0_47 = arith.constant 0 : index
    %132 = vector.load %arg7[%c0_46, %c0_47] : memref<1x128xf32, #tpu.memory_space<vmem>>, vector<1x128xf32>
    %133 = arith.truncf %132 : vector<1x128xf32> to vector<1x128xbf16>
    %cst_48 = arith.constant dense<0.000000e+00> : vector<1x512xf32>
    %134 = tpu.matmul %133, %6, %cst_48 {dimension_numbers = #tpu.dot_dimension_numbers<[1], [0], [0], [1], [0, 0, 1, 1], [], []>} : vector<1x128xbf16>, vector<128x512xbf16>, vector<1x512xf32> -> vector<1x512xf32>
    %135 = arith.addf %131, %134 : vector<1x512xf32>
    %136 = vector.extract_strided_slice %135 {offsets = [0, 0], sizes = [1, 128], strides = [1, 1]} : vector<1x512xf32> to vector<1x128xf32>
    %137 = arith.negf %136 : vector<1x128xf32>
    %138 = math.exp %137 : vector<1x128xf32>
    %cst_49 = arith.constant 1.000000e+00 : f32
    %139 = vector.broadcast %cst_49 : f32 to vector<1x128xf32>
    %140 = arith.addf %139, %138 : vector<1x128xf32>
    %141 = arith.divf %139, %140 : vector<1x128xf32>
    %142 = vector.extract_strided_slice %135 {offsets = [0, 128], sizes = [1, 128], strides = [1, 1]} : vector<1x512xf32> to vector<1x128xf32>
    %143 = arith.negf %142 : vector<1x128xf32>
    %144 = math.exp %143 : vector<1x128xf32>
    %cst_50 = arith.constant 1.000000e+00 : f32
    %145 = vector.broadcast %cst_50 : f32 to vector<1x128xf32>
    %146 = arith.addf %145, %144 : vector<1x128xf32>
    %147 = arith.divf %145, %146 : vector<1x128xf32>
    %148 = vector.extract_strided_slice %135 {offsets = [0, 256], sizes = [1, 128], strides = [1, 1]} : vector<1x512xf32> to vector<1x128xf32>
    %149 = math.tanh %148 : vector<1x128xf32>
    %150 = vector.extract_strided_slice %135 {offsets = [0, 384], sizes = [1, 128], strides = [1, 1]} : vector<1x512xf32> to vector<1x128xf32>
    %151 = arith.negf %150 : vector<1x128xf32>
    %152 = math.exp %151 : vector<1x128xf32>
    %cst_51 = arith.constant 1.000000e+00 : f32
    %153 = vector.broadcast %cst_51 : f32 to vector<1x128xf32>
    %154 = arith.addf %153, %152 : vector<1x128xf32>
    %155 = arith.divf %153, %154 : vector<1x128xf32>
    %c0_52 = arith.constant 0 : index
    %c0_53 = arith.constant 0 : index
    %156 = vector.load %arg8[%c0_52, %c0_53] : memref<1x128xf32, #tpu.memory_space<vmem>>, vector<1x128xf32>
    %157 = arith.mulf %147, %156 : vector<1x128xf32>
    %158 = arith.mulf %141, %149 : vector<1x128xf32>
    %159 = arith.addf %157, %158 : vector<1x128xf32>
    %160 = math.tanh %159 : vector<1x128xf32>
    %161 = arith.mulf %155, %160 : vector<1x128xf32>
    %c0_54 = arith.constant 0 : index
    %c0_55 = arith.constant 0 : index
    %162 = vector.load %arg8[%c0_54, %c0_55] : memref<1x128xf32, #tpu.memory_space<vmem>>, vector<1x128xf32>
    tpu.vector_store %arg8[%c0_54, %c0_55], %159 {strides = array<i32>} : memref<1x128xf32, #tpu.memory_space<vmem>>, vector<1x128xf32>,
    %c0_56 = arith.constant 0 : index
    %c0_57 = arith.constant 0 : index
    %163 = vector.load %arg7[%c0_56, %c0_57] : memref<1x128xf32, #tpu.memory_space<vmem>>, vector<1x128xf32>
    tpu.vector_store %arg7[%c0_56, %c0_57], %161 {strides = array<i32>} : memref<1x128xf32, #tpu.memory_space<vmem>>, vector<1x128xf32>,
    %164 = tpu.iota {dimensions = array<i32: 1>} : vector<1x128xi32>
    %c32_i32_58 = arith.constant 32 : i32
    %165 = vector.broadcast %c32_i32_58 : i32 to vector<1x128xi32>
    %166 = arith.cmpi slt, %164, %165 : vector<1x128xi32>
    %167 = arith.extui %166 : vector<1x128xi1> to vector<1x128xi32>
    %168 = arith.sitofp %167 : vector<1x128xi32> to vector<1x128xf32>
    %169 = arith.mulf %161, %168 : vector<1x128xf32>
    %cst_59 = arith.constant dense<0.000000e+00> : vector<1xf32>
    %170 = vector.multi_reduction <add>, %169, %cst_59 [1] : vector<1x128xf32> to vector<1xf32>
    %171 = vector.shape_cast %170 : vector<1xf32> to vector<1x1xf32>
    %cst_60 = arith.constant 3.200000e+01 : f32
    %172 = vector.broadcast %cst_60 : f32 to vector<1x1xf32>
    %173 = arith.divf %171, %172 : vector<1x1xf32>
    %174 = vector.broadcast %173 : vector<1x1xf32> to vector<1x128xf32>
    %175 = arith.subf %161, %174 : vector<1x128xf32>
    %176 = arith.mulf %175, %175 : vector<1x128xf32>
    %177 = arith.mulf %176, %168 : vector<1x128xf32>
    %cst_61 = arith.constant dense<0.000000e+00> : vector<1xf32>
    %178 = vector.multi_reduction <add>, %177, %cst_61 [1] : vector<1x128xf32> to vector<1xf32>
    %179 = vector.shape_cast %178 : vector<1xf32> to vector<1x1xf32>
    %cst_62 = arith.constant 3.200000e+01 : f32
    %180 = vector.broadcast %cst_62 : f32 to vector<1x1xf32>
    %181 = arith.divf %179, %180 : vector<1x1xf32>
    %cst_63 = arith.constant 9.99999974E-6 : f32
    %182 = vector.broadcast %cst_63 : f32 to vector<1x1xf32>
    %183 = arith.addf %181, %182 : vector<1x1xf32>
    %184 = math.rsqrt %183 : vector<1x1xf32>
    %185 = vector.broadcast %173 : vector<1x1xf32> to vector<1x128xf32>
    %186 = arith.subf %161, %185 : vector<1x128xf32>
    %187 = vector.broadcast %184 : vector<1x1xf32> to vector<1x128xf32>
    %188 = arith.mulf %186, %187 : vector<1x128xf32>
    %189 = arith.mulf %188, %7 : vector<1x128xf32>
    %190 = arith.addf %189, %8 : vector<1x128xf32>
    %c2 = arith.constant 2 : index
    %c0_64 = arith.constant 0 : index
    %191 = vector.load %arg9[%c2, %c0_64] : memref<4x128xf32, #tpu.memory_space<vmem>>, vector<1x128xf32>
    tpu.vector_store %arg9[%c2, %c0_64], %190 {strides = array<i32>} : memref<4x128xf32, #tpu.memory_space<vmem>>, vector<1x128xf32>,
    %192 = vector.extract_strided_slice %4 {offsets = [3, 0], sizes = [1, 512], strides = [1, 1]} : vector<4x512xf32> to vector<1x512xf32>
    %c0_65 = arith.constant 0 : index
    %c0_66 = arith.constant 0 : index
    %193 = vector.load %arg7[%c0_65, %c0_66] : memref<1x128xf32, #tpu.memory_space<vmem>>, vector<1x128xf32>
    %194 = arith.truncf %193 : vector<1x128xf32> to vector<1x128xbf16>
    %cst_67 = arith.constant dense<0.000000e+00> : vector<1x512xf32>
    %195 = tpu.matmul %194, %6, %cst_67 {dimension_numbers = #tpu.dot_dimension_numbers<[1], [0], [0], [1], [0, 0, 1, 1], [], []>} : vector<1x128xbf16>, vector<128x512xbf16>, vector<1x512xf32> -> vector<1x512xf32>
    %196 = arith.addf %192, %195 : vector<1x512xf32>
    %197 = vector.extract_strided_slice %196 {offsets = [0, 0], sizes = [1, 128], strides = [1, 1]} : vector<1x512xf32> to vector<1x128xf32>
    %198 = arith.negf %197 : vector<1x128xf32>
    %199 = math.exp %198 : vector<1x128xf32>
    %cst_68 = arith.constant 1.000000e+00 : f32
    %200 = vector.broadcast %cst_68 : f32 to vector<1x128xf32>
    %201 = arith.addf %200, %199 : vector<1x128xf32>
    %202 = arith.divf %200, %201 : vector<1x128xf32>
    %203 = vector.extract_strided_slice %196 {offsets = [0, 128], sizes = [1, 128], strides = [1, 1]} : vector<1x512xf32> to vector<1x128xf32>
    %204 = arith.negf %203 : vector<1x128xf32>
    %205 = math.exp %204 : vector<1x128xf32>
    %cst_69 = arith.constant 1.000000e+00 : f32
    %206 = vector.broadcast %cst_69 : f32 to vector<1x128xf32>
    %207 = arith.addf %206, %205 : vector<1x128xf32>
    %208 = arith.divf %206, %207 : vector<1x128xf32>
    %209 = vector.extract_strided_slice %196 {offsets = [0, 256], sizes = [1, 128], strides = [1, 1]} : vector<1x512xf32> to vector<1x128xf32>
    %210 = math.tanh %209 : vector<1x128xf32>
    %211 = vector.extract_strided_slice %196 {offsets = [0, 384], sizes = [1, 128], strides = [1, 1]} : vector<1x512xf32> to vector<1x128xf32>
    %212 = arith.negf %211 : vector<1x128xf32>
    %213 = math.exp %212 : vector<1x128xf32>
    %cst_70 = arith.constant 1.000000e+00 : f32
    %214 = vector.broadcast %cst_70 : f32 to vector<1x128xf32>
    %215 = arith.addf %214, %213 : vector<1x128xf32>
    %216 = arith.divf %214, %215 : vector<1x128xf32>
    %c0_71 = arith.constant 0 : index
    %c0_72 = arith.constant 0 : index
    %217 = vector.load %arg8[%c0_71, %c0_72] : memref<1x128xf32, #tpu.memory_space<vmem>>, vector<1x128xf32>
    %218 = arith.mulf %208, %217 : vector<1x128xf32>
    %219 = arith.mulf %202, %210 : vector<1x128xf32>
    %220 = arith.addf %218, %219 : vector<1x128xf32>
    %221 = math.tanh %220 : vector<1x128xf32>
    %222 = arith.mulf %216, %221 : vector<1x128xf32>
    %c0_73 = arith.constant 0 : index
    %c0_74 = arith.constant 0 : index
    %223 = vector.load %arg8[%c0_73, %c0_74] : memref<1x128xf32, #tpu.memory_space<vmem>>, vector<1x128xf32>
    tpu.vector_store %arg8[%c0_73, %c0_74], %220 {strides = array<i32>} : memref<1x128xf32, #tpu.memory_space<vmem>>, vector<1x128xf32>,
    %c0_75 = arith.constant 0 : index
    %c0_76 = arith.constant 0 : index
    %224 = vector.load %arg7[%c0_75, %c0_76] : memref<1x128xf32, #tpu.memory_space<vmem>>, vector<1x128xf32>
    tpu.vector_store %arg7[%c0_75, %c0_76], %222 {strides = array<i32>} : memref<1x128xf32, #tpu.memory_space<vmem>>, vector<1x128xf32>,
    %225 = tpu.iota {dimensions = array<i32: 1>} : vector<1x128xi32>
    %c32_i32_77 = arith.constant 32 : i32
    %226 = vector.broadcast %c32_i32_77 : i32 to vector<1x128xi32>
    %227 = arith.cmpi slt, %225, %226 : vector<1x128xi32>
    %228 = arith.extui %227 : vector<1x128xi1> to vector<1x128xi32>
    %229 = arith.sitofp %228 : vector<1x128xi32> to vector<1x128xf32>
    %230 = arith.mulf %222, %229 : vector<1x128xf32>
    %cst_78 = arith.constant dense<0.000000e+00> : vector<1xf32>
    %231 = vector.multi_reduction <add>, %230, %cst_78 [1] : vector<1x128xf32> to vector<1xf32>
    %232 = vector.shape_cast %231 : vector<1xf32> to vector<1x1xf32>
    %cst_79 = arith.constant 3.200000e+01 : f32
    %233 = vector.broadcast %cst_79 : f32 to vector<1x1xf32>
    %234 = arith.divf %232, %233 : vector<1x1xf32>
    %235 = vector.broadcast %234 : vector<1x1xf32> to vector<1x128xf32>
    %236 = arith.subf %222, %235 : vector<1x128xf32>
    %237 = arith.mulf %236, %236 : vector<1x128xf32>
    %238 = arith.mulf %237, %229 : vector<1x128xf32>
    %cst_80 = arith.constant dense<0.000000e+00> : vector<1xf32>
    %239 = vector.multi_reduction <add>, %238, %cst_80 [1] : vector<1x128xf32> to vector<1xf32>
    %240 = vector.shape_cast %239 : vector<1xf32> to vector<1x1xf32>
    %cst_81 = arith.constant 3.200000e+01 : f32
    %241 = vector.broadcast %cst_81 : f32 to vector<1x1xf32>
    %242 = arith.divf %240, %241 : vector<1x1xf32>
    %cst_82 = arith.constant 9.99999974E-6 : f32
    %243 = vector.broadcast %cst_82 : f32 to vector<1x1xf32>
    %244 = arith.addf %242, %243 : vector<1x1xf32>
    %245 = math.rsqrt %244 : vector<1x1xf32>
    %246 = vector.broadcast %234 : vector<1x1xf32> to vector<1x128xf32>
    %247 = arith.subf %222, %246 : vector<1x128xf32>
    %248 = vector.broadcast %245 : vector<1x1xf32> to vector<1x128xf32>
    %249 = arith.mulf %247, %248 : vector<1x128xf32>
    %250 = arith.mulf %249, %7 : vector<1x128xf32>
    %251 = arith.addf %250, %8 : vector<1x128xf32>
    %c3 = arith.constant 3 : index
    %c0_83 = arith.constant 0 : index
    %252 = vector.load %arg9[%c3, %c0_83] : memref<4x128xf32, #tpu.memory_space<vmem>>, vector<1x128xf32>
    tpu.vector_store %arg9[%c3, %c0_83], %251 {strides = array<i32>} : memref<4x128xf32, #tpu.memory_space<vmem>>, vector<1x128xf32>,
    %c0_84 = arith.constant 0 : index
    %c0_85 = arith.constant 0 : index
    %253 = vector.load %arg9[%c0_84, %c0_85] : memref<4x128xf32, #tpu.memory_space<vmem>>, vector<4x128xf32>
    %c0_86 = arith.constant 0 : index
    %c0_87 = arith.constant 0 : index
    %c0_88 = arith.constant 0 : index
    %254 = vector.load %arg6[%c0_86, %c0_87, %c0_88] : memref<1x4x128xf32, #tpu.memory_space<vmem>>, vector<1x4x128xf32>
    %255 = vector.shape_cast %254 : vector<1x4x128xf32> to vector<4x128xf32>
    %256 = vector.shape_cast %253 : vector<4x128xf32> to vector<1x4x128xf32>
    tpu.vector_store %arg6[%c0_86, %c0_87, %c0_88], %256 {strides = array<i32>} : memref<1x4x128xf32, #tpu.memory_space<vmem>>, vector<1x4x128xf32>,
    return
  }
  func.func @transform_0(%arg0: i32, %arg1: i32) -> (i32, i32, i32) {
    %c0_i32 = arith.constant 0 : i32
    %c0_i32_0 = arith.constant 0 : i32
    return %arg0, %arg1, %c0_i32 : i32, i32, i32
  }
  func.func @transform_1(%arg0: i32, %arg1: i32) -> (i32, i32) {
    %c0_i32 = arith.constant 0 : i32
    %c0_i32_0 = arith.constant 0 : i32
    %c0_i32_1 = arith.constant 0 : i32
    return %c0_i32, %c0_i32_0 : i32, i32
  }
  func.func @transform_2(%arg0: i32, %arg1: i32) -> (i32, i32) {
    %c0_i32 = arith.constant 0 : i32
    %c0_i32_0 = arith.constant 0 : i32
    %c0_i32_1 = arith.constant 0 : i32
    return %c0_i32, %c0_i32_0 : i32, i32
  }
  func.func @transform_3(%arg0: i32, %arg1: i32) -> (i32, i32) {
    %c0_i32 = arith.constant 0 : i32
    %c0_i32_0 = arith.constant 0 : i32
    %c0_i32_1 = arith.constant 0 : i32
    return %c0_i32, %c0_i32_0 : i32, i32
  }
  func.func @transform_4(%arg0: i32, %arg1: i32) -> (i32, i32, i32) {
    %c0_i32 = arith.constant 0 : i32
    %c0_i32_0 = arith.constant 0 : i32
    return %arg0, %arg1, %c0_i32 : i32, i32, i32
  }
}

module attributes {stable_mosaic.version = 11 : i64} {
  func.func @_dfsmn_layer_kernel(%arg0: i32, %arg1: i32, %arg2: memref<1x4x128xf32, #tpu.memory_space<vmem>>, %arg3: memref<128x128xf32, #tpu.memory_space<vmem>>, %arg4: memref<1x128xf32, #tpu.memory_space<vmem>>, %arg5: memref<128x128xf32, #tpu.memory_space<vmem>>, %arg6: memref<5x128xf32, #tpu.memory_space<vmem>>, %arg7: memref<1x4x128xf32, #tpu.memory_space<vmem>>, %arg8: memref<8x128xf32, #tpu.memory_space<vmem>>) attributes {dimension_semantics = [#tpu.dimension_semantics<parallel>, #tpu.dimension_semantics<arbitrary>], iteration_bounds = array<i64: 2, 1>, scalar_prefetch = 0 : i64, scratch_operands = 1 : i64, tpu.core_type = #tpu.core_type<tc>, window_params = [{transform_indices = @transform_0, window_bounds = array<i64: 1, 4, 128>}, {pipeline_mode = #tpu.pipeline_mode<synchronous>, transform_indices = @transform_1, window_bounds = array<i64: 128, 128>}, {pipeline_mode = #tpu.pipeline_mode<synchronous>, transform_indices = @transform_2, window_bounds = array<i64: 1, 128>}, {pipeline_mode = #tpu.pipeline_mode<synchronous>, transform_indices = @transform_3, window_bounds = array<i64: 128, 128>}, {pipeline_mode = #tpu.pipeline_mode<synchronous>, transform_indices = @transform_4, window_bounds = array<i64: 5, 128>}, {transform_indices = @transform_5, window_bounds = array<i64: 1, 4, 128>}]} {
    %c0 = arith.constant 0 : index
    %c0_0 = arith.constant 0 : index
    %c0_1 = arith.constant 0 : index
    %0 = vector.load %arg2[%c0, %c0_0, %c0_1] : memref<1x4x128xf32, #tpu.memory_space<vmem>>, vector<1x4x128xf32>
    %1 = vector.shape_cast %0 : vector<1x4x128xf32> to vector<4x128xf32>
    %2 = arith.truncf %1 : vector<4x128xf32> to vector<4x128xbf16>
    %c0_2 = arith.constant 0 : index
    %c0_3 = arith.constant 0 : index
    %3 = vector.load %arg3[%c0_2, %c0_3] : memref<128x128xf32, #tpu.memory_space<vmem>>, vector<128x128xf32>
    %4 = arith.truncf %3 : vector<128x128xf32> to vector<128x128xbf16>
    %cst = arith.constant dense<0.000000e+00> : vector<4x128xf32>
    %5 = tpu.matmul %2, %4, %cst {dimension_numbers = #tpu.dot_dimension_numbers<[1], [0], [0], [1], [0, 0, 1, 1], [], []>} : vector<4x128xbf16>, vector<128x128xbf16>, vector<4x128xf32> -> vector<4x128xf32>
    %c0_4 = arith.constant 0 : index
    %c0_5 = arith.constant 0 : index
    %6 = vector.load %arg4[%c0_4, %c0_5] : memref<1x128xf32, #tpu.memory_space<vmem>>, vector<1x128xf32>
    %7 = vector.broadcast %6 : vector<1x128xf32> to vector<4x128xf32>
    %8 = arith.addf %5, %7 : vector<4x128xf32>
    %cst_6 = arith.constant 0.000000e+00 : f32
    %9 = vector.broadcast %cst_6 : f32 to vector<4x128xf32>
    %10 = arith.maximumf %8, %9 : vector<4x128xf32>
    %11 = arith.truncf %10 : vector<4x128xf32> to vector<4x128xbf16>
    %c0_7 = arith.constant 0 : index
    %c0_8 = arith.constant 0 : index
    %12 = vector.load %arg5[%c0_7, %c0_8] : memref<128x128xf32, #tpu.memory_space<vmem>>, vector<128x128xf32>
    %13 = arith.truncf %12 : vector<128x128xf32> to vector<128x128xbf16>
    %cst_9 = arith.constant dense<0.000000e+00> : vector<4x128xf32>
    %14 = tpu.matmul %11, %13, %cst_9 {dimension_numbers = #tpu.dot_dimension_numbers<[1], [0], [0], [1], [0, 0, 1, 1], [], []>} : vector<4x128xbf16>, vector<128x128xbf16>, vector<4x128xf32> -> vector<4x128xf32>
    %c0_i32 = arith.constant 0 : i32
    %15 = arith.cmpi eq, %arg1, %c0_i32 : i32
    %16 = arith.extui %15 : i1 to i32
    %c0_i32_10 = arith.constant 0 : i32
    %17 = arith.cmpi ne, %16, %c0_i32_10 : i32
    scf.if %17 {
      %cst_21 = arith.constant 0.000000e+00 : f32
      %51 = vector.broadcast %cst_21 : f32 to vector<4x128xf32>
      %c0_22 = arith.constant 0 : index
      %c0_23 = arith.constant 0 : index
      %52 = vector.load %arg8[%c0_22, %c0_23] : memref<8x128xf32, #tpu.memory_space<vmem>>, vector<4x128xf32>
      tpu.vector_store %arg8[%c0_22, %c0_23], %51 {strides = array<i32>} : memref<8x128xf32, #tpu.memory_space<vmem>>, vector<4x128xf32>,
    } else {
    }
    %c4 = arith.constant 4 : index
    %c0_11 = arith.constant 0 : index
    %18 = vector.load %arg8[%c4, %c0_11] : memref<8x128xf32, #tpu.memory_space<vmem>>, vector<4x128xf32>
    tpu.vector_store %arg8[%c4, %c0_11], %14 {strides = array<i32>} : memref<8x128xf32, #tpu.memory_space<vmem>>, vector<4x128xf32>,
    %c0_12 = arith.constant 0 : index
    %c0_13 = arith.constant 0 : index
    %19 = vector.load %arg8[%c0_12, %c0_13] : memref<8x128xf32, #tpu.memory_space<vmem>>, vector<8x128xf32>
    %c0_14 = arith.constant 0 : index
    %c0_15 = arith.constant 0 : index
    %20 = vector.load %arg6[%c0_14, %c0_15] : memref<5x128xf32, #tpu.memory_space<vmem>>, vector<5x128xf32>
    %21 = vector.extract_strided_slice %20 {offsets = [0, 0], sizes = [1, 128], strides = [1, 1]} : vector<5x128xf32> to vector<1x128xf32>
    %22 = vector.extract_strided_slice %19 {offsets = [4, 0], sizes = [4, 128], strides = [1, 1]} : vector<8x128xf32> to vector<4x128xf32>
    %23 = vector.broadcast %21 : vector<1x128xf32> to vector<4x128xf32>
    %24 = arith.mulf %23, %22 : vector<4x128xf32>
    %25 = arith.addf %14, %24 : vector<4x128xf32>
    %26 = vector.extract_strided_slice %20 {offsets = [1, 0], sizes = [1, 128], strides = [1, 1]} : vector<5x128xf32> to vector<1x128xf32>
    %27 = vector.extract_strided_slice %19 {offsets = [3, 0], sizes = [4, 128], strides = [1, 1]} : vector<8x128xf32> to vector<4x128xf32>
    %28 = vector.broadcast %26 : vector<1x128xf32> to vector<4x128xf32>
    %29 = arith.mulf %28, %27 : vector<4x128xf32>
    %30 = arith.addf %25, %29 : vector<4x128xf32>
    %31 = vector.extract_strided_slice %20 {offsets = [2, 0], sizes = [1, 128], strides = [1, 1]} : vector<5x128xf32> to vector<1x128xf32>
    %32 = vector.extract_strided_slice %19 {offsets = [2, 0], sizes = [4, 128], strides = [1, 1]} : vector<8x128xf32> to vector<4x128xf32>
    %33 = vector.broadcast %31 : vector<1x128xf32> to vector<4x128xf32>
    %34 = arith.mulf %33, %32 : vector<4x128xf32>
    %35 = arith.addf %30, %34 : vector<4x128xf32>
    %36 = vector.extract_strided_slice %20 {offsets = [3, 0], sizes = [1, 128], strides = [1, 1]} : vector<5x128xf32> to vector<1x128xf32>
    %37 = vector.extract_strided_slice %19 {offsets = [1, 0], sizes = [4, 128], strides = [1, 1]} : vector<8x128xf32> to vector<4x128xf32>
    %38 = vector.broadcast %36 : vector<1x128xf32> to vector<4x128xf32>
    %39 = arith.mulf %38, %37 : vector<4x128xf32>
    %40 = arith.addf %35, %39 : vector<4x128xf32>
    %41 = vector.extract_strided_slice %20 {offsets = [4, 0], sizes = [1, 128], strides = [1, 1]} : vector<5x128xf32> to vector<1x128xf32>
    %42 = vector.extract_strided_slice %19 {offsets = [0, 0], sizes = [4, 128], strides = [1, 1]} : vector<8x128xf32> to vector<4x128xf32>
    %43 = vector.broadcast %41 : vector<1x128xf32> to vector<4x128xf32>
    %44 = arith.mulf %43, %42 : vector<4x128xf32>
    %45 = arith.addf %40, %44 : vector<4x128xf32>
    %c0_16 = arith.constant 0 : index
    %c0_17 = arith.constant 0 : index
    %c0_18 = arith.constant 0 : index
    %46 = vector.load %arg7[%c0_16, %c0_17, %c0_18] : memref<1x4x128xf32, #tpu.memory_space<vmem>>, vector<1x4x128xf32>
    %47 = vector.shape_cast %46 : vector<1x4x128xf32> to vector<4x128xf32>
    %48 = vector.shape_cast %45 : vector<4x128xf32> to vector<1x4x128xf32>
    tpu.vector_store %arg7[%c0_16, %c0_17, %c0_18], %48 {strides = array<i32>} : memref<1x4x128xf32, #tpu.memory_space<vmem>>, vector<1x4x128xf32>,
    %49 = vector.extract_strided_slice %19 {offsets = [4, 0], sizes = [4, 128], strides = [1, 1]} : vector<8x128xf32> to vector<4x128xf32>
    %c0_19 = arith.constant 0 : index
    %c0_20 = arith.constant 0 : index
    %50 = vector.load %arg8[%c0_19, %c0_20] : memref<8x128xf32, #tpu.memory_space<vmem>>, vector<4x128xf32>
    tpu.vector_store %arg8[%c0_19, %c0_20], %49 {strides = array<i32>} : memref<8x128xf32, #tpu.memory_space<vmem>>, vector<4x128xf32>,
    return
  }
  func.func @transform_0(%arg0: i32, %arg1: i32) -> (i32, i32, i32) {
    %c0_i32 = arith.constant 0 : i32
    %c0_i32_0 = arith.constant 0 : i32
    return %arg0, %arg1, %c0_i32 : i32, i32, i32
  }
  func.func @transform_1(%arg0: i32, %arg1: i32) -> (i32, i32) {
    %c0_i32 = arith.constant 0 : i32
    %c0_i32_0 = arith.constant 0 : i32
    %c0_i32_1 = arith.constant 0 : i32
    return %c0_i32, %c0_i32_0 : i32, i32
  }
  func.func @transform_2(%arg0: i32, %arg1: i32) -> (i32, i32) {
    %c0_i32 = arith.constant 0 : i32
    %c0_i32_0 = arith.constant 0 : i32
    %c0_i32_1 = arith.constant 0 : i32
    return %c0_i32, %c0_i32_0 : i32, i32
  }
  func.func @transform_3(%arg0: i32, %arg1: i32) -> (i32, i32) {
    %c0_i32 = arith.constant 0 : i32
    %c0_i32_0 = arith.constant 0 : i32
    %c0_i32_1 = arith.constant 0 : i32
    return %c0_i32, %c0_i32_0 : i32, i32
  }
  func.func @transform_4(%arg0: i32, %arg1: i32) -> (i32, i32) {
    %c0_i32 = arith.constant 0 : i32
    %c0_i32_0 = arith.constant 0 : i32
    %c0_i32_1 = arith.constant 0 : i32
    return %c0_i32, %c0_i32_0 : i32, i32
  }
  func.func @transform_5(%arg0: i32, %arg1: i32) -> (i32, i32, i32) {
    %c0_i32 = arith.constant 0 : i32
    %c0_i32_0 = arith.constant 0 : i32
    return %arg0, %arg1, %c0_i32 : i32, i32, i32
  }
}

module attributes {stable_mosaic.version = 11 : i64} {
  func.func @_mm_kernel(%arg0: i32, %arg1: i32, %arg2: i32, %arg3: memref<8x128xf32, #tpu.memory_space<vmem>>, %arg4: memref<128x128xf32, #tpu.memory_space<vmem>>, %arg5: memref<1x128xf32, #tpu.memory_space<vmem>>, %arg6: memref<8x128xf32, #tpu.memory_space<vmem>>, %arg7: memref<8x128xf32, #tpu.memory_space<vmem>>) attributes {dimension_semantics = [#tpu.dimension_semantics<parallel>, #tpu.dimension_semantics<parallel>, #tpu.dimension_semantics<arbitrary>], iteration_bounds = array<i64: 1, 1, 1>, scalar_prefetch = 0 : i64, scratch_operands = 1 : i64, tpu.core_type = #tpu.core_type<tc>, window_params = [{transform_indices = @transform_0, window_bounds = array<i64: 8, 128>}, {transform_indices = @transform_1, window_bounds = array<i64: 128, 128>}, {transform_indices = @transform_2, window_bounds = array<i64: 1, 128>}, {transform_indices = @transform_3, window_bounds = array<i64: 8, 128>}]} {
    %c0_i32 = arith.constant 0 : i32
    %0 = arith.cmpi eq, %arg2, %c0_i32 : i32
    %1 = arith.extui %0 : i1 to i32
    %c0_i32_0 = arith.constant 0 : i32
    %2 = arith.cmpi ne, %1, %c0_i32_0 : i32
    scf.if %2 {
      %cst_10 = arith.constant 0.000000e+00 : f32
      %14 = vector.broadcast %cst_10 : f32 to vector<8x128xf32>
      %c0_11 = arith.constant 0 : index
      %c0_12 = arith.constant 0 : index
      %15 = vector.load %arg7[%c0_11, %c0_12] : memref<8x128xf32, #tpu.memory_space<vmem>>, vector<8x128xf32>
      tpu.vector_store %arg7[%c0_11, %c0_12], %14 {strides = array<i32>} : memref<8x128xf32, #tpu.memory_space<vmem>>, vector<8x128xf32>,
    } else {
    }
    %c0 = arith.constant 0 : index
    %c0_1 = arith.constant 0 : index
    %3 = vector.load %arg7[%c0, %c0_1] : memref<8x128xf32, #tpu.memory_space<vmem>>, vector<8x128xf32>
    %c0_2 = arith.constant 0 : index
    %c0_3 = arith.constant 0 : index
    %4 = vector.load %arg3[%c0_2, %c0_3] : memref<8x128xf32, #tpu.memory_space<vmem>>, vector<8x128xf32>
    %5 = arith.truncf %4 : vector<8x128xf32> to vector<8x128xbf16>
    %c0_4 = arith.constant 0 : index
    %c0_5 = arith.constant 0 : index
    %6 = vector.load %arg4[%c0_4, %c0_5] : memref<128x128xf32, #tpu.memory_space<vmem>>, vector<128x128xf32>
    %7 = arith.truncf %6 : vector<128x128xf32> to vector<128x128xbf16>
    %cst = arith.constant dense<0.000000e+00> : vector<8x128xf32>
    %8 = tpu.matmul %5, %7, %cst {dimension_numbers = #tpu.dot_dimension_numbers<[1], [0], [0], [1], [0, 0, 1, 1], [], []>} : vector<8x128xbf16>, vector<128x128xbf16>, vector<8x128xf32> -> vector<8x128xf32>
    %9 = arith.addf %3, %8 : vector<8x128xf32>
    %c0_6 = arith.constant 0 : index
    %c0_7 = arith.constant 0 : index
    %10 = vector.load %arg7[%c0_6, %c0_7] : memref<8x128xf32, #tpu.memory_space<vmem>>, vector<8x128xf32>
    tpu.vector_store %arg7[%c0_6, %c0_7], %9 {strides = array<i32>} : memref<8x128xf32, #tpu.memory_space<vmem>>, vector<8x128xf32>,
    %c0_i32_8 = arith.constant 0 : i32
    %11 = arith.cmpi eq, %arg2, %c0_i32_8 : i32
    %12 = arith.extui %11 : i1 to i32
    %c0_i32_9 = arith.constant 0 : i32
    %13 = arith.cmpi ne, %12, %c0_i32_9 : i32
    scf.if %13 {
      %c0_10 = arith.constant 0 : index
      %c0_11 = arith.constant 0 : index
      %14 = vector.load %arg7[%c0_10, %c0_11] : memref<8x128xf32, #tpu.memory_space<vmem>>, vector<8x128xf32>
      %c0_12 = arith.constant 0 : index
      %c0_13 = arith.constant 0 : index
      %15 = vector.load %arg5[%c0_12, %c0_13] : memref<1x128xf32, #tpu.memory_space<vmem>>, vector<1x128xf32>
      %16 = vector.broadcast %15 : vector<1x128xf32> to vector<8x128xf32>
      %17 = arith.addf %14, %16 : vector<8x128xf32>
      %c0_14 = arith.constant 0 : index
      %c0_15 = arith.constant 0 : index
      %18 = vector.load %arg6[%c0_14, %c0_15] : memref<8x128xf32, #tpu.memory_space<vmem>>, vector<8x128xf32>
      tpu.vector_store %arg6[%c0_14, %c0_15], %17 {strides = array<i32>} : memref<8x128xf32, #tpu.memory_space<vmem>>, vector<8x128xf32>,
    } else {
    }
    return
  }
  func.func @transform_0(%arg0: i32, %arg1: i32, %arg2: i32) -> (i32, i32) {
    %c0_i32 = arith.constant 0 : i32
    return %arg0, %arg2 : i32, i32
  }
  func.func @transform_1(%arg0: i32, %arg1: i32, %arg2: i32) -> (i32, i32) {
    %c0_i32 = arith.constant 0 : i32
    return %arg2, %arg1 : i32, i32
  }
  func.func @transform_2(%arg0: i32, %arg1: i32, %arg2: i32) -> (i32, i32) {
    %c0_i32 = arith.constant 0 : i32
    %c0_i32_0 = arith.constant 0 : i32
    return %c0_i32, %arg1 : i32, i32
  }
  func.func @transform_3(%arg0: i32, %arg1: i32, %arg2: i32) -> (i32, i32) {
    %c0_i32 = arith.constant 0 : i32
    return %arg0, %arg1 : i32, i32
  }
}

module attributes {stable_mosaic.version = 11 : i64} {
  func.func @_dfsmn_layer_kernel(%arg0: i32, %arg1: i32, %arg2: memref<1x4x128xf32, #tpu.memory_space<vmem>>, %arg3: memref<128x128xf32, #tpu.memory_space<vmem>>, %arg4: memref<1x128xf32, #tpu.memory_space<vmem>>, %arg5: memref<128x128xf32, #tpu.memory_space<vmem>>, %arg6: memref<5x128xf32, #tpu.memory_space<vmem>>, %arg7: memref<1x4x128xf32, #tpu.memory_space<vmem>>, %arg8: memref<8x128xf32, #tpu.memory_space<vmem>>) attributes {dimension_semantics = [#tpu.dimension_semantics<parallel>, #tpu.dimension_semantics<arbitrary>], iteration_bounds = array<i64: 2, 1>, scalar_prefetch = 0 : i64, scratch_operands = 1 : i64, tpu.core_type = #tpu.core_type<tc>, window_params = [{transform_indices = @transform_0, window_bounds = array<i64: 1, 4, 128>}, {pipeline_mode = #tpu.pipeline_mode<synchronous>, transform_indices = @transform_1, window_bounds = array<i64: 128, 128>}, {pipeline_mode = #tpu.pipeline_mode<synchronous>, transform_indices = @transform_2, window_bounds = array<i64: 1, 128>}, {pipeline_mode = #tpu.pipeline_mode<synchronous>, transform_indices = @transform_3, window_bounds = array<i64: 128, 128>}, {pipeline_mode = #tpu.pipeline_mode<synchronous>, transform_indices = @transform_4, window_bounds = array<i64: 5, 128>}, {transform_indices = @transform_5, window_bounds = array<i64: 1, 4, 128>}]} {
    %c0 = arith.constant 0 : index
    %c0_0 = arith.constant 0 : index
    %c0_1 = arith.constant 0 : index
    %0 = vector.load %arg2[%c0, %c0_0, %c0_1] : memref<1x4x128xf32, #tpu.memory_space<vmem>>, vector<1x4x128xf32>
    %1 = vector.shape_cast %0 : vector<1x4x128xf32> to vector<4x128xf32>
    %2 = arith.truncf %1 : vector<4x128xf32> to vector<4x128xbf16>
    %c0_2 = arith.constant 0 : index
    %c0_3 = arith.constant 0 : index
    %3 = vector.load %arg3[%c0_2, %c0_3] : memref<128x128xf32, #tpu.memory_space<vmem>>, vector<128x128xf32>
    %4 = arith.truncf %3 : vector<128x128xf32> to vector<128x128xbf16>
    %cst = arith.constant dense<0.000000e+00> : vector<4x128xf32>
    %5 = tpu.matmul %2, %4, %cst {dimension_numbers = #tpu.dot_dimension_numbers<[1], [0], [0], [1], [0, 0, 1, 1], [], []>} : vector<4x128xbf16>, vector<128x128xbf16>, vector<4x128xf32> -> vector<4x128xf32>
    %c0_4 = arith.constant 0 : index
    %c0_5 = arith.constant 0 : index
    %6 = vector.load %arg4[%c0_4, %c0_5] : memref<1x128xf32, #tpu.memory_space<vmem>>, vector<1x128xf32>
    %7 = vector.broadcast %6 : vector<1x128xf32> to vector<4x128xf32>
    %8 = arith.addf %5, %7 : vector<4x128xf32>
    %cst_6 = arith.constant 0.000000e+00 : f32
    %9 = vector.broadcast %cst_6 : f32 to vector<4x128xf32>
    %10 = arith.maximumf %8, %9 : vector<4x128xf32>
    %11 = arith.truncf %10 : vector<4x128xf32> to vector<4x128xbf16>
    %c0_7 = arith.constant 0 : index
    %c0_8 = arith.constant 0 : index
    %12 = vector.load %arg5[%c0_7, %c0_8] : memref<128x128xf32, #tpu.memory_space<vmem>>, vector<128x128xf32>
    %13 = arith.truncf %12 : vector<128x128xf32> to vector<128x128xbf16>
    %cst_9 = arith.constant dense<0.000000e+00> : vector<4x128xf32>
    %14 = tpu.matmul %11, %13, %cst_9 {dimension_numbers = #tpu.dot_dimension_numbers<[1], [0], [0], [1], [0, 0, 1, 1], [], []>} : vector<4x128xbf16>, vector<128x128xbf16>, vector<4x128xf32> -> vector<4x128xf32>
    %c0_i32 = arith.constant 0 : i32
    %15 = arith.cmpi eq, %arg1, %c0_i32 : i32
    %16 = arith.extui %15 : i1 to i32
    %c0_i32_10 = arith.constant 0 : i32
    %17 = arith.cmpi ne, %16, %c0_i32_10 : i32
    scf.if %17 {
      %cst_21 = arith.constant 0.000000e+00 : f32
      %52 = vector.broadcast %cst_21 : f32 to vector<4x128xf32>
      %c0_22 = arith.constant 0 : index
      %c0_23 = arith.constant 0 : index
      %53 = vector.load %arg8[%c0_22, %c0_23] : memref<8x128xf32, #tpu.memory_space<vmem>>, vector<4x128xf32>
      tpu.vector_store %arg8[%c0_22, %c0_23], %52 {strides = array<i32>} : memref<8x128xf32, #tpu.memory_space<vmem>>, vector<4x128xf32>,
    } else {
    }
    %c4 = arith.constant 4 : index
    %c0_11 = arith.constant 0 : index
    %18 = vector.load %arg8[%c4, %c0_11] : memref<8x128xf32, #tpu.memory_space<vmem>>, vector<4x128xf32>
    tpu.vector_store %arg8[%c4, %c0_11], %14 {strides = array<i32>} : memref<8x128xf32, #tpu.memory_space<vmem>>, vector<4x128xf32>,
    %c0_12 = arith.constant 0 : index
    %c0_13 = arith.constant 0 : index
    %19 = vector.load %arg8[%c0_12, %c0_13] : memref<8x128xf32, #tpu.memory_space<vmem>>, vector<8x128xf32>
    %20 = arith.addf %14, %1 : vector<4x128xf32>
    %c0_14 = arith.constant 0 : index
    %c0_15 = arith.constant 0 : index
    %21 = vector.load %arg6[%c0_14, %c0_15] : memref<5x128xf32, #tpu.memory_space<vmem>>, vector<5x128xf32>
    %22 = vector.extract_strided_slice %21 {offsets = [0, 0], sizes = [1, 128], strides = [1, 1]} : vector<5x128xf32> to vector<1x128xf32>
    %23 = vector.extract_strided_slice %19 {offsets = [4, 0], sizes = [4, 128], strides = [1, 1]} : vector<8x128xf32> to vector<4x128xf32>
    %24 = vector.broadcast %22 : vector<1x128xf32> to vector<4x128xf32>
    %25 = arith.mulf %24, %23 : vector<4x128xf32>
    %26 = arith.addf %20, %25 : vector<4x128xf32>
    %27 = vector.extract_strided_slice %21 {offsets = [1, 0], sizes = [1, 128], strides = [1, 1]} : vector<5x128xf32> to vector<1x128xf32>
    %28 = vector.extract_strided_slice %19 {offsets = [3, 0], sizes = [4, 128], strides = [1, 1]} : vector<8x128xf32> to vector<4x128xf32>
    %29 = vector.broadcast %27 : vector<1x128xf32> to vector<4x128xf32>
    %30 = arith.mulf %29, %28 : vector<4x128xf32>
    %31 = arith.addf %26, %30 : vector<4x128xf32>
    %32 = vector.extract_strided_slice %21 {offsets = [2, 0], sizes = [1, 128], strides = [1, 1]} : vector<5x128xf32> to vector<1x128xf32>
    %33 = vector.extract_strided_slice %19 {offsets = [2, 0], sizes = [4, 128], strides = [1, 1]} : vector<8x128xf32> to vector<4x128xf32>
    %34 = vector.broadcast %32 : vector<1x128xf32> to vector<4x128xf32>
    %35 = arith.mulf %34, %33 : vector<4x128xf32>
    %36 = arith.addf %31, %35 : vector<4x128xf32>
    %37 = vector.extract_strided_slice %21 {offsets = [3, 0], sizes = [1, 128], strides = [1, 1]} : vector<5x128xf32> to vector<1x128xf32>
    %38 = vector.extract_strided_slice %19 {offsets = [1, 0], sizes = [4, 128], strides = [1, 1]} : vector<8x128xf32> to vector<4x128xf32>
    %39 = vector.broadcast %37 : vector<1x128xf32> to vector<4x128xf32>
    %40 = arith.mulf %39, %38 : vector<4x128xf32>
    %41 = arith.addf %36, %40 : vector<4x128xf32>
    %42 = vector.extract_strided_slice %21 {offsets = [4, 0], sizes = [1, 128], strides = [1, 1]} : vector<5x128xf32> to vector<1x128xf32>
    %43 = vector.extract_strided_slice %19 {offsets = [0, 0], sizes = [4, 128], strides = [1, 1]} : vector<8x128xf32> to vector<4x128xf32>
    %44 = vector.broadcast %42 : vector<1x128xf32> to vector<4x128xf32>
    %45 = arith.mulf %44, %43 : vector<4x128xf32>
    %46 = arith.addf %41, %45 : vector<4x128xf32>
    %c0_16 = arith.constant 0 : index
    %c0_17 = arith.constant 0 : index
    %c0_18 = arith.constant 0 : index
    %47 = vector.load %arg7[%c0_16, %c0_17, %c0_18] : memref<1x4x128xf32, #tpu.memory_space<vmem>>, vector<1x4x128xf32>
    %48 = vector.shape_cast %47 : vector<1x4x128xf32> to vector<4x128xf32>
    %49 = vector.shape_cast %46 : vector<4x128xf32> to vector<1x4x128xf32>
    tpu.vector_store %arg7[%c0_16, %c0_17, %c0_18], %49 {strides = array<i32>} : memref<1x4x128xf32, #tpu.memory_space<vmem>>, vector<1x4x128xf32>,
    %50 = vector.extract_strided_slice %19 {offsets = [4, 0], sizes = [4, 128], strides = [1, 1]} : vector<8x128xf32> to vector<4x128xf32>
    %c0_19 = arith.constant 0 : index
    %c0_20 = arith.constant 0 : index
    %51 = vector.load %arg8[%c0_19, %c0_20] : memref<8x128xf32, #tpu.memory_space<vmem>>, vector<4x128xf32>
    tpu.vector_store %arg8[%c0_19, %c0_20], %50 {strides = array<i32>} : memref<8x128xf32, #tpu.memory_space<vmem>>, vector<4x128xf32>,
    return
  }
  func.func @transform_0(%arg0: i32, %arg1: i32) -> (i32, i32, i32) {
    %c0_i32 = arith.constant 0 : i32
    %c0_i32_0 = arith.constant 0 : i32
    return %arg0, %arg1, %c0_i32 : i32, i32, i32
  }
  func.func @transform_1(%arg0: i32, %arg1: i32) -> (i32, i32) {
    %c0_i32 = arith.constant 0 : i32
    %c0_i32_0 = arith.constant 0 : i32
    %c0_i32_1 = arith.constant 0 : i32
    return %c0_i32, %c0_i32_0 : i32, i32
  }
  func.func @transform_2(%arg0: i32, %arg1: i32) -> (i32, i32) {
    %c0_i32 = arith.constant 0 : i32
    %c0_i32_0 = arith.constant 0 : i32
    %c0_i32_1 = arith.constant 0 : i32
    return %c0_i32, %c0_i32_0 : i32, i32
  }
  func.func @transform_3(%arg0: i32, %arg1: i32) -> (i32, i32) {
    %c0_i32 = arith.constant 0 : i32
    %c0_i32_0 = arith.constant 0 : i32
    %c0_i32_1 = arith.constant 0 : i32
    return %c0_i32, %c0_i32_0 : i32, i32
  }
  func.func @transform_4(%arg0: i32, %arg1: i32) -> (i32, i32) {
    %c0_i32 = arith.constant 0 : i32
    %c0_i32_0 = arith.constant 0 : i32
    %c0_i32_1 = arith.constant 0 : i32
    return %c0_i32, %c0_i32_0 : i32, i32
  }
  func.func @transform_5(%arg0: i32, %arg1: i32) -> (i32, i32, i32) {
    %c0_i32 = arith.constant 0 : i32
    %c0_i32_0 = arith.constant 0 : i32
    return %arg0, %arg1, %c0_i32 : i32, i32, i32
  }
}

</mosaic_0001>

<llo_original>
// kernel: forward.7
$region0: #{forward.7}
  #allocation0 [shape = 'u32[]', space=smem, size = 0x4, offset = 0x4, fixed_abs, tag = 'smem constant byte address 0x4 - core index']
  #allocation1 [shape = 'u32[72,128]{1,0:T(1,128)}', space=vmem, size = 0x9000, scoped, tag = 'internal scratch']
  %s0 = inlined_call_operand.vmem [shape: f32[2,10,16], index: 0, kind: input, shape index: {}]
  %s1 = inlined_call_operand.vmem [shape: f32[2,10,16], index: 1, kind: input, shape index: {}]
  %s2 = inlined_call_operand.hbm [shape: f32[3,16,128], index: 2, kind: input, shape index: {}]
  %s3 = inlined_call_operand.hbm [shape: f32[2,16,128], index: 3, kind: input, shape index: {}]
  %s4 = inlined_call_operand.hbm [shape: f32[1,128], index: 4, kind: input, shape index: {}]
  %s5 = inlined_call_operand.hbm [shape: f32[1,128], index: 5, kind: input, shape index: {}]
  %s6 = inlined_call_operand.hbm [shape: f32[1,128], index: 6, kind: input, shape index: {}]
  %s7 = inlined_call_operand.vmem [shape: f32[2,8,128], index: 7, kind: output, shape index: {}]
  %s8 = sld [smem:[#allocation0]]
  $region81: #{forward.7} parent=0
    _
  %s10 = ssub.s32 1, %s8
  %s11 = scalar_select 0, %s10, %s8
  $region1: #{forward.7} parent=0
    #allocation2 [shape = 'u8[24576]{0}', space=vmem, size = 0x6000, scoped, tag = 'input window, operand 2, single buffered']
    #allocation3 [shape = 's32[2]{0}', space=sflag, size = 0x8, scoped, tag = 'scoped memory for forward.7']
    #allocation4 [shape = 'u8[16384]{0}', space=vmem, size = 0x4000, scoped, tag = 'input window, operand 3, single buffered']
    #allocation5 [shape = 's32[1]{0}', space=sflag, size = 0x4, scoped, tag = 'scoped memory for forward.7']
    #allocation6 [shape = 'u8[512]{0}', space=vmem, size = 0x400, scoped, tag = 'input window, operand 4, single buffered']
    #allocation7 [shape = 'u8[512]{0}', space=vmem, size = 0x400, scoped, tag = 'input window, operand 5, single buffered']
    #allocation8 [shape = 's32[1]{0}', space=sflag, size = 0x4, scoped, tag = 'scoped memory for forward.7']
    #allocation9 [shape = 'u8[512]{0}', space=vmem, size = 0x400, scoped, tag = 'input window, operand 6, single buffered']
    %12 = vsyncpa [#allocation3], 0
    %13 = vsyncpa [#allocation5], 0
    %14 = vsyncpa [#allocation8], 0
    loop: start=0, step=1, limit=4
    $region2: #{forward.7} parent=1 // loop_pre_header
      _
    $region3: #{forward.7} parent=1 // loop_header
      %s16 = sphi 0, %s20
      %p17 = scmp.ge.s32.totalorder %s16, 4
      %s26 = sphi 0, %s28
      %s29 = sphi 0, %s26
      %s30 = sphi 0, %s29
      %s46 = sphi 0, %s30
      %s52 = sphi 0, %s54
      %s55 = sphi 0, %s52
      %s56 = sphi 0, %s55
      %s72 = sphi 0, %s56
      %s76 = sphi 0, %s76
      %s78 = sphi 0, %s76
      %s79 = sphi 0, %s78
      %s93 = sphi 0, %s79
      %s97 = sphi 0, %s97
      %s99 = sphi 0, %s97
      %s100 = sphi 0, %s99
      %s114 = sphi 0, %s100
      %s118 = sphi 0, %s118
      %s120 = sphi 0, %s118
      %s121 = sphi 0, %s120
      %s135 = sphi 0, %s121
      %s139 = sphi 0, %s139
      %s141 = sphi 0, %s139
      %s142 = sphi 0, %s141
      %s156 = sphi 0, %s142
      %s160 = sphi 0, %s160
      %s162 = sphi 0, %s160
      %s163 = sphi 0, %s162
      %s177 = sphi 0, %s163
      %s183 = sphi 0, %s185
      %s186 = sphi 0, %s183
      %s187 = sphi 0, %s186
      %s203 = sphi 0, %s187
    $region4: #{forward.7} parent=1 // loop_header_branch
      %19 = sbr.rel (%p17) target = $region8
    $region5: #{forward.7} parent=1 // loop_body
      %s21 = ssub.s32 %s16, 1
      %s22 = ssub.s32 %s16, 2
      %s23 = sadd.s32 %s16, 1
      %s24 = ssub.s32 %s16, %s23
      %p25 = scmp.eq.s32.totalorder %s24, 0
      %s27 = sadd.s32 %s26, 1
      %s28 = scalar_select %p25, %s26, %s27
      %p31 = pneg %p25
      %p32 = scmp.eq.s32.totalorder %s16, 1
      %p33 = por %p31, %p32
      %p34 = scmp.ne.s32.totalorder %s26, %s29
      %p35 = scmp.eq.s32.totalorder %s16, 0
      %p36 = por %p34, %p35
      %p37 = scmp.ne.s32.totalorder %s26, %s29
      %p38 = scmp.eq.s32.totalorder %s21, 1
      %p39 = por %p37, %p38
      %p40 = scmp.ne.s32.totalorder %s29, %s30
      %p41 = scmp.eq.s32.totalorder %s21, 0
      %p42 = por %p40, %p41
      %p43 = scmp.ne.s32.totalorder %s29, %s30
      %p44 = scmp.eq.s32.totalorder %s22, 1
      %p45 = por %p43, %p44
      %p47 = scmp.ne.s32.totalorder %s30, %s46
      %p48 = scmp.eq.s32.totalorder %s22, 0
      %p49 = por %p47, %p48
      %s50 = ssub.s32 %s16, %s23
      %p51 = scmp.eq.s32.totalorder %s50, 0
      %s53 = sadd.s32 %s52, 1
      %s54 = scalar_select %p51, %s52, %s53
      %p57 = pneg %p51
      %p58 = scmp.eq.s32.totalorder %s16, 1
      %p59 = por %p57, %p58
      %p60 = scmp.ne.s32.totalorder %s52, %s55
      %p61 = scmp.eq.s32.totalorder %s16, 0
      %p62 = por %p60, %p61
      %p63 = scmp.ne.s32.totalorder %s52, %s55
      %p64 = scmp.eq.s32.totalorder %s21, 1
      %p65 = por %p63, %p64
      %p66 = scmp.ne.s32.totalorder %s55, %s56
      %p67 = scmp.eq.s32.totalorder %s21, 0
      %p68 = por %p66, %p67
      %p69 = scmp.ne.s32.totalorder %s55, %s56
      %p70 = scmp.eq.s32.totalorder %s22, 1
      %p71 = por %p69, %p70
      %p73 = scmp.ne.s32.totalorder %s56, %s72
      %p74 = scmp.eq.s32.totalorder %s22, 0
      %p75 = por %p73, %p74
      %s77 = sadd.s32 %s76, 1
      %p80 = scmp.eq.s32.totalorder %s16, 1
      %p81 = scmp.ne.s32.totalorder %s76, %s78
      %p82 = scmp.eq.s32.totalorder %s16, 0
      %p83 = por %p81, %p82
      %p84 = scmp.ne.s32.totalorder %s76, %s78
      %p85 = scmp.eq.s32.totalorder %s21, 1
      %p86 = por %p84, %p85
      %p87 = scmp.ne.s32.totalorder %s78, %s79
      %p88 = scmp.eq.s32.totalorder %s21, 0
      %p89 = por %p87, %p88
      %p90 = scmp.ne.s32.totalorder %s78, %s79
      %p91 = scmp.eq.s32.totalorder %s22, 1
      %p92 = por %p90, %p91
      %p94 = scmp.ne.s32.totalorder %s79, %s93
      %p95 = scmp.eq.s32.totalorder %s22, 0
      %p96 = por %p94, %p95
      %s98 = sadd.s32 %s97, 1
      %p101 = scmp.eq.s32.totalorder %s16, 1
      %p102 = scmp.ne.s32.totalorder %s97, %s99
      %p103 = scmp.eq.s32.totalorder %s16, 0
      %p104 = por %p102, %p103
      %p105 = scmp.ne.s32.totalorder %s97, %s99
      %p106 = scmp.eq.s32.totalorder %s21, 1
      %p107 = por %p105, %p106
      %p108 = scmp.ne.s32.totalorder %s99, %s100
      %p109 = scmp.eq.s32.totalorder %s21, 0
      %p110 = por %p108, %p109
      %p111 = scmp.ne.s32.totalorder %s99, %s100
      %p112 = scmp.eq.s32.totalorder %s22, 1
      %p113 = por %p111, %p112
      %p115 = scmp.ne.s32.totalorder %s100, %s114
      %p116 = scmp.eq.s32.totalorder %s22, 0
      %p117 = por %p115, %p116
      %s119 = sadd.s32 %s118, 1
      %p122 = scmp.eq.s32.totalorder %s16, 1
      %p123 = scmp.ne.s32.totalorder %s118, %s120
      %p124 = scmp.eq.s32.totalorder %s16, 0
      %p125 = por %p123, %p124
      %p126 = scmp.ne.s32.totalorder %s118, %s120
      %p127 = scmp.eq.s32.totalorder %s21, 1
      %p128 = por %p126, %p127
      %p129 = scmp.ne.s32.totalorder %s120, %s121
      %p130 = scmp.eq.s32.totalorder %s21, 0
      %p131 = por %p129, %p130
      %p132 = scmp.ne.s32.totalorder %s120, %s121
      %p133 = scmp.eq.s32.totalorder %s22, 1
      %p134 = por %p132, %p133
      %p136 = scmp.ne.s32.totalorder %s121, %s135
      %p137 = scmp.eq.s32.totalorder %s22, 0
      %p138 = por %p136, %p137
      %s140 = sadd.s32 %s139, 1
      %p143 = scmp.eq.s32.totalorder %s16, 1
      %p144 = scmp.ne.s32.totalorder %s139, %s141
      %p145 = scmp.eq.s32.totalorder %s16, 0
      %p146 = por %p144, %p145
      %p147 = scmp.ne.s32.totalorder %s139, %s141
      %p148 = scmp.eq.s32.totalorder %s21, 1
      %p149 = por %p147, %p148
      %p150 = scmp.ne.s32.totalorder %s141, %s142
      %p151 = scmp.eq.s32.totalorder %s21, 0
      %p152 = por %p150, %p151
      %p153 = scmp.ne.s32.totalorder %s141, %s142
      %p154 = scmp.eq.s32.totalorder %s22, 1
      %p155 = por %p153, %p154
      %p157 = scmp.ne.s32.totalorder %s142, %s156
      %p158 = scmp.eq.s32.totalorder %s22, 0
      %p159 = por %p157, %p158
      %s161 = sadd.s32 %s160, 1
      %p164 = scmp.eq.s32.totalorder %s16, 1
      %p165 = scmp.ne.s32.totalorder %s160, %s162
      %p166 = scmp.eq.s32.totalorder %s16, 0
      %p167 = por %p165, %p166
      %p168 = scmp.ne.s32.totalorder %s160, %s162
      %p169 = scmp.eq.s32.totalorder %s21, 1
      %p170 = por %p168, %p169
      %p171 = scmp.ne.s32.totalorder %s162, %s163
      %p172 = scmp.eq.s32.totalorder %s21, 0
      %p173 = por %p171, %p172
      %p174 = scmp.ne.s32.totalorder %s162, %s163
      %p175 = scmp.eq.s32.totalorder %s22, 1
      %p176 = por %p174, %p175
      %p178 = scmp.ne.s32.totalorder %s163, %s177
      %p179 = scmp.eq.s32.totalorder %s22, 0
      %p180 = por %p178, %p179
      %s181 = ssub.s32 %s16, %s23
      %p182 = scmp.eq.s32.totalorder %s181, 0
      %s184 = sadd.s32 %s183, 1
      %s185 = scalar_select %p182, %s183, %s184
      %p188 = pneg %p182
      %p189 = scmp.eq.s32.totalorder %s16, 1
      %p190 = por %p188, %p189
      %p191 = scmp.ne.s32.totalorder %s183, %s186
      %p192 = scmp.eq.s32.totalorder %s16, 0
      %p193 = por %p191, %p192
      %p194 = scmp.ne.s32.totalorder %s183, %s186
      %p195 = scmp.eq.s32.totalorder %s21, 1
      %p196 = por %p194, %p195
      %p197 = scmp.ne.s32.totalorder %s186, %s187
      %p198 = scmp.eq.s32.totalorder %s21, 0
      %p199 = por %p197, %p198
      %p200 = scmp.ne.s32.totalorder %s186, %s187
      %p201 = scmp.eq.s32.totalorder %s22, 1
      %p202 = por %p200, %p201
      %p204 = scmp.ne.s32.totalorder %s187, %s203
      %p205 = scmp.eq.s32.totalorder %s22, 0
      %p206 = por %p204, %p205
      %p207 = scmp.le.s32.totalorder 1, %s16
      %p208 = scmp.lt.s32.totalorder %s16, 3
      %p209 = pnand %p207, %p208
      %p210 = pneg %p209
      // Predicated region
      $region9: #{forward.7} parent=5 // pred_check
        _
      $region10: #{forward.7} parent=5 // pred_check_branch
        %212 = sbr.rel (%p209) target = $region12
      $region11: #{forward.7} parent=5 // pred_region
        %s213 = ssub.s32 %s16, 1
        // Predicated region
        $region13: #{forward.7} parent=11 // pred_check
          %p214 = pneg %p89
        $region14: #{forward.7} parent=11 // pred_check_branch
          %216 = sbr.rel (%p214) target = $region16
        $region15: #{forward.7} parent=11 // pred_region
          %218 = vsyncadd [#allocation3], 0
          %s219 = sshll.u32 %s2, 4
          %s220 = int_to_ptr.hbm [resolvable:$true] %s219
          %s221 = sshll.u32 [#allocation2], 4
          %s222 = int_to_ptr.vmem [resolvable:$true] %s221
          %227 = dma.hbm_to_vmem [thread:$0]  %s220, 768, %s222, [#allocation3], 128, 128, 8
        $region16: #{forward.7} parent=11 // pred_fallthru
          _
        // Predicated region
        $region17: #{forward.7} parent=11 // pred_check
          %p228 = pneg %p110
        $region18: #{forward.7} parent=11 // pred_check_branch
          %230 = sbr.rel (%p228) target = $region20
        $region19: #{forward.7} parent=11 // pred_region
          %232 = vsyncadd [#allocation5], 0
          %s233 = sshll.u32 %s3, 4
          %s234 = int_to_ptr.hbm [resolvable:$true] %s233
          %s235 = sshll.u32 [#allocation4], 4
          %s236 = int_to_ptr.vmem [resolvable:$true] %s235
          %241 = dma.hbm_to_vmem [thread:$0]  %s234, 512, %s236, [#allocation5], 128, 128, 8
        $region20: #{forward.7} parent=11 // pred_fallthru
          _
        // Predicated region
        $region21: #{forward.7} parent=11 // pred_check
          %p242 = pneg %p131
        $region22: #{forward.7} parent=11 // pred_check_branch
          %244 = sbr.rel (%p242) target = $region24
        $region23: #{forward.7} parent=11 // pred_region
          %246 = vsyncadd [#allocation5], 0
          %s248 = sshll.u32 %s4, 4
          %s249 = int_to_ptr.hbm [resolvable:$true] %s248
          %s250 = sshll.u32 [#allocation6], 4
          %s251 = int_to_ptr.vmem [resolvable:$true] %s250
          %253 = dma.hbm_to_vmem [thread:$0]  %s249, 16, %s251, [#allocation5]
        $region24: #{forward.7} parent=11 // pred_fallthru
          _
        // Predicated region
        $region25: #{forward.7} parent=11 // pred_check
          %p254 = pneg %p152
        $region26: #{forward.7} parent=11 // pred_check_branch
          %256 = sbr.rel (%p254) target = $region28
        $region27: #{forward.7} parent=11 // pred_region
          %258 = vsyncadd [#allocation8], 0
          %s260 = sshll.u32 %s5, 4
          %s261 = int_to_ptr.hbm [resolvable:$true] %s260
          %s262 = sshll.u32 [#allocation7], 4
          %s263 = int_to_ptr.vmem [resolvable:$true] %s262
          %265 = dma.hbm_to_vmem [thread:$0]  %s261, 16, %s263, [#allocation8]
        $region28: #{forward.7} parent=11 // pred_fallthru
          _
        // Predicated region
        $region29: #{forward.7} parent=11 // pred_check
          %p266 = pneg %p173
        $region30: #{forward.7} parent=11 // pred_check_branch
          %268 = sbr.rel (%p266) target = $region32
        $region31: #{forward.7} parent=11 // pred_region
          %270 = vsyncadd [#allocation8], 0
          %s272 = sshll.u32 %s6, 4
          %s273 = int_to_ptr.hbm [resolvable:$true] %s272
          %s274 = sshll.u32 [#allocation9], 4
          %s275 = int_to_ptr.vmem [resolvable:$true] %s274
          %277 = dma.hbm_to_vmem [thread:$0]  %s273, 16, %s275, [#allocation8]
        $region32: #{forward.7} parent=11 // pred_fallthru
          _
      $region12: #{forward.7} parent=5 // pred_fallthru
        _
      %p278 = scmp.lt.s32.totalorder %s16, 2
      // Predicated region
      $region33: #{forward.7} parent=5 // pred_check
        %p279 = pneg %p278
      $region34: #{forward.7} parent=5 // pred_check_branch
        %281 = sbr.rel (%p279) target = $region36
      $region35: #{forward.7} parent=5 // pred_region
        // Predicated region
        $region37: #{forward.7} parent=35 // pred_check
          %p282 = pneg %p36
        $region38: #{forward.7} parent=35 // pred_check_branch
          %284 = sbr.rel (%p282) target = $region40
        $region39: #{forward.7} parent=35 // pred_region
          %p285 = scmp.lt.s32.totalorder %s16, 1
          %s286 = scalar_select %p285, %s16, 1
          %s287 = smul.addr %s286, 2
          %s288 = smul.addr %s287, 8
          %s289 = scalar_lea.vmem %s0, %s288
        $region40: #{forward.7} parent=35 // pred_fallthru
          _
        // Predicated region
        $region41: #{forward.7} parent=35 // pred_check
          %p290 = pneg %p62
        $region42: #{forward.7} parent=35 // pred_check_branch
          %292 = sbr.rel (%p290) target = $region44
        $region43: #{forward.7} parent=35 // pred_region
          %p293 = scmp.lt.s32.totalorder %s16, 1
          %s294 = scalar_select %p293, %s16, 1
          %s295 = smul.addr %s294, 2
          %s296 = smul.addr %s295, 8
          %s297 = scalar_lea.vmem %s1, %s296
        $region44: #{forward.7} parent=35 // pred_fallthru
          _
      $region36: #{forward.7} parent=5 // pred_fallthru
        _
      %p298 = scmp.le.s32.totalorder 1, %s16
      %p299 = scmp.lt.s32.totalorder %s16, 3
      %p300 = pnand %p298, %p299
      %p301 = pneg %p300
      // Predicated region
      $region45: #{forward.7} parent=5 // pred_check
        _
      $region46: #{forward.7} parent=5 // pred_check_branch
        %303 = sbr.rel (%p300) target = $region48
      $region47: #{forward.7} parent=5 // pred_region
        %s304 = ssub.s32 %s16, 1
        // Predicated region
        $region49: #{forward.7} parent=47 // pred_check
          %p305 = pneg %p89
        $region50: #{forward.7} parent=47 // pred_check_branch
          %307 = sbr.rel (%p305) target = $region52
        $region51: #{forward.7} parent=47 // pred_region
          %309 = dma.done [#allocation3], 768
        $region52: #{forward.7} parent=47 // pred_fallthru
          _
        // Predicated region
        $region53: #{forward.7} parent=47 // pred_check
          %p310 = pneg %p110
        $region54: #{forward.7} parent=47 // pred_check_branch
          %312 = sbr.rel (%p310) target = $region56
        $region55: #{forward.7} parent=47 // pred_region
          %314 = dma.done [#allocation5], 512
        $region56: #{forward.7} parent=47 // pred_fallthru
          _
        // Predicated region
        $region57: #{forward.7} parent=47 // pred_check
          %p315 = pneg %p131
        $region58: #{forward.7} parent=47 // pred_check_branch
          %317 = sbr.rel (%p315) target = $region60
        $region59: #{forward.7} parent=47 // pred_region
          %319 = dma.done [#allocation5], 16
        $region60: #{forward.7} parent=47 // pred_fallthru
          _
        // Predicated region
        $region61: #{forward.7} parent=47 // pred_check
          %p320 = pneg %p152
        $region62: #{forward.7} parent=47 // pred_check_branch
          %322 = sbr.rel (%p320) target = $region64
        $region63: #{forward.7} parent=47 // pred_region
          %324 = dma.done [#allocation8], 16
        $region64: #{forward.7} parent=47 // pred_fallthru
          _
        // Predicated region
        $region65: #{forward.7} parent=47 // pred_check
          %p325 = pneg %p173
        $region66: #{forward.7} parent=47 // pred_check_branch
          %327 = sbr.rel (%p325) target = $region68
        $region67: #{forward.7} parent=47 // pred_region
          %329 = dma.done [#allocation8], 16
        $region68: #{forward.7} parent=47 // pred_fallthru
          _
        %p330 = scmp.lt.s32.totalorder %s21, 1
        %s331 = scalar_select %p330, %s21, 1
        %s332 = smul.addr %s331, 2
        %s333 = smul.addr %s332, 8
        %s334 = scalar_lea.vmem %s0, %s333
        %p335 = pneg %p42
        %p336 = pneg %p39
        %p337 = scmp.lt.s32.totalorder %s21, 1
        %s338 = scalar_select %p337, %s21, 1
        %s339 = smul.addr %s338, 2
        %s340 = smul.addr %s339, 8
        %s341 = scalar_lea.vmem %s1, %s340
        %p342 = pneg %p68
        %p343 = pneg %p65
        %p344 = pneg %p89
        %p345 = pneg %p86
        %p346 = pneg %p110
        %p347 = pneg %p107
        %p348 = pneg %p131
        %p349 = pneg %p128
        %p350 = pneg %p152
        %p351 = pneg %p149
        %p352 = pneg %p173
        %p353 = pneg %p170
        %p354 = pneg %p199
        %p355 = pneg %p196
        %p356 = scmp.lt.s32.totalorder %s21, 1
        %s357 = scalar_select %p356, %s21, 1
        %s358 = smul.addr %s357, 8
        %s359 = scalar_lea.vmem %s7, %s358
        %p360 = scmp.lt.s32.totalorder %s21, 1
        %s361 = scalar_select %p360, %s21, 1
        %s362 = smul.addr %s361, 2
        %s363 = smul.addr %s362, 8
        %s364 = scalar_lea.vmem %s0, %s363
        %p365 = scmp.lt.s32.totalorder %s21, 1
        %s366 = scalar_select %p365, %s21, 1
        %s367 = smul.addr %s366, 2
        %s368 = smul.addr %s367, 8
        %s369 = scalar_lea.vmem %s1, %s368
        %p370 = scmp.lt.s32.totalorder %s21, 1
        %s371 = scalar_select %p370, %s21, 1
        %s372 = smul.addr %s371, 8
        %s373 = scalar_lea.vmem %s7, %s372
        %v375 = vld [vmem:[%s364] sm:$0xff]
        %v376 = vld [vmem:[%s364 + $0x8] sm:$0x3]
        %v377 = vld [vmem:[%s369] sm:$0xff]
        %v378 = vld [vmem:[%s369 + $0x8] sm:$0x3]
        %v379 = vpack.c.bf16 %v375, %v375
        %v380 = vld [vmem:[#allocation2] sm:$0xff]
        %v381 = vld [vmem:[#allocation2 + $0x8] sm:$0xff]
        %v382 = vpack.c.bf16 %v381, %v380
        %v383 = vpack.c.bf16 %v376, %v375
        %s384 = scalar_lea.vmem [#allocation2], 16
        %v385 = vld [vmem:[%s384] sm:$0xff]
        %v386 = vld [vmem:[%s384 + $0x8] sm:$0xff]
        %v387 = vpack.c.bf16 %v386, %v385
        %v389 = vshrl.u32 %v383, 16
        %v391 = vshll.u32 %v383, 16
        %v393 = vrot.slane %v391, 1
        %v394 = vor.u32 %v389, %v393
        %vm395 = vcmask 130048
        %v397 = vsel %vm395, %v394, 0
        %399 = vmatpush.bf16.msra.mxu0 0
        %400 = vmatpush.bf16.msra.mxu0 0
        %401 = vmatpush.bf16.msra.mxu0 0
        %402 = vmatpush.bf16.msra.mxu0 0
        %403 = vmatpush.bf16.msra.mxu0 0
        %404 = vmatpush.bf16.msra.mxu0 0
        %405 = vmatpush.bf16.msra.mxu0 0
        %406 = vmatpush.bf16.msra.mxu0 %v387
        %407 = vmatmul.bf16.gmra.mxu0 %v397
        %v408 = vpop.f32.mrf.mxu0
        %v409 = vadd.f32 0.0, %v408
        %v410 = vpop.f32.mrf.mxu0
        %411 = vdwg.mxu0
        %v413 = vsel %vm395, %v379, 0
        %415 = vmatpush.bf16.msra.mxu0 0
        %416 = vmatpush.bf16.msra.mxu0 0
        %417 = vmatpush.bf16.msra.mxu0 0
        %418 = vmatpush.bf16.msra.mxu0 0
        %419 = vmatpush.bf16.msra.mxu0 0
        %420 = vmatpush.bf16.msra.mxu0 0
        %421 = vmatpush.bf16.msra.mxu0 0
        %422 = vmatpush.bf16.msra.mxu0 %v382
        %423 = vmatmul.bf16.gmra.mxu0 %v413
        %v424 = vpop.f32.mrf.mxu0
        %v425 = vadd.f32 %v409, %v424
        %v426 = vpop.f32.mrf.mxu0
        %427 = vdwg.mxu0
        %s428 = scalar_lea.vmem [#allocation2], 32
        %v429 = vld [vmem:[%s428] sm:$0xff]
        %v430 = vld [vmem:[%s428 + $0x8] sm:$0xff]
        %v431 = vpack.c.bf16 %v430, %v429
        %v433 = vrot.slane %v383, 1
        %v435 = vsel %vm395, %v433, 0
        %437 = vmatpush.bf16.msra.mxu0 0
        %438 = vmatpush.bf16.msra.mxu0 0
        %439 = vmatpush.bf16.msra.mxu0 0
        %440 = vmatpush.bf16.msra.mxu0 0
        %441 = vmatpush.bf16.msra.mxu0 0
        %442 = vmatpush.bf16.msra.mxu0 0
        %443 = vmatpush.bf16.msra.mxu0 0
        %444 = vmatpush.bf16.msra.mxu0 %v431
        %445 = vmatmul.bf16.gmra.mxu0 %v435
        %v446 = vpop.f32.mrf.mxu0
        %v447 = vadd.f32 0.0, %v446
        %v448 = vpop.f32.mrf.mxu0
        %449 = vdwg.mxu0
        %v450 = vadd.f32 %v425, %v447
        %v451 = vpack.c.bf16 %v377, %v377
        %v452 = vld [vmem:[#allocation4] sm:$0xff]
        %v453 = vld [vmem:[#allocation4 + $0x8] sm:$0xff]
        %v454 = vpack.c.bf16 %v453, %v452
        %v456 = vsel %vm395, %v451, 0
        %458 = vmatpush.bf16.msra.mxu0 0
        %459 = vmatpush.bf16.msra.mxu0 0
        %460 = vmatpush.bf16.msra.mxu0 0
        %461 = vmatpush.bf16.msra.mxu0 0
        %462 = vmatpush.bf16.msra.mxu0 0
        %463 = vmatpush.bf16.msra.mxu0 0
        %464 = vmatpush.bf16.msra.mxu0 0
        %465 = vmatpush.bf16.msra.mxu0 %v454
        %466 = vmatmul.bf16.gmra.mxu0 %v456
        %v467 = vpop.f32.mrf.mxu0
        %v468 = vadd.f32 0.0, %v467
        %v469 = vpop.f32.mrf.mxu0
        %470 = vdwg.mxu0
        %v471 = vadd.f32 %v450, %v468
        %v472 = vpack.c.bf16 %v378, %v377
        %s473 = scalar_lea.vmem [#allocation4], 16
        %v474 = vld [vmem:[%s473] sm:$0xff]
        %v475 = vld [vmem:[%s473 + $0x8] sm:$0xff]
        %v476 = vpack.c.bf16 %v475, %v474
        %v478 = vshrl.u32 %v472, 16
        %v480 = vshll.u32 %v472, 16
        %v482 = vrot.slane %v480, 1
        %v483 = vor.u32 %v478, %v482
        %v485 = vsel %vm395, %v483, 0
        %487 = vmatpush.bf16.msra.mxu0 0
        %488 = vmatpush.bf16.msra.mxu0 0
        %489 = vmatpush.bf16.msra.mxu0 0
        %490 = vmatpush.bf16.msra.mxu0 0
        %491 = vmatpush.bf16.msra.mxu0 0
        %492 = vmatpush.bf16.msra.mxu0 0
        %493 = vmatpush.bf16.msra.mxu0 0
        %494 = vmatpush.bf16.msra.mxu0 %v476
        %495 = vmatmul.bf16.gmra.mxu0 %v485
        %v496 = vpop.f32.mrf.mxu0
        %v497 = vadd.f32 0.0, %v496
        %v498 = vpop.f32.mrf.mxu0
        %499 = vdwg.mxu0
        %v500 = vadd.f32 %v471, %v497
        %v501 = vld [vmem:[#allocation6] sm:$0x1]
        %v503 = vperm.slane %v501, 0
        %v505 = vadd.f32 %v500, %v503
        %v506 = vld [vmem:[#allocation7] sm:$0x1]
        %v507 = vld [vmem:[#allocation9] sm:$0x1]
        %v508 = vlaneseq
        %v509 = vand.u32 %v508, 127
        %vm510 = vcmp.lt.s32.totalorder %v509, 32
        %v511 = vsel %vm510, 1, 0
        %v512 = vcvt.s32.f32 %v511
        %v513 = vmul.f32 %v505, %v512
        %514 = vadd.xlane.f32.xlu0 %v513
        %v515 = vpop.xlane.xlu0 %514
        %v516 = vrcp.pop 32.0
        %v517 = vmul.f32 32.0, %v516
        %v518 = vsub.f32 1.0, %v517
        %v519 = vmul.f32 %v516, %v518
        %v520 = vadd.f32 %v516, %v519
        %vm521 = vweird.f32 %v516
        %v522 = vsel %vm521, %v516, %v520
        %v523 = vmul.f32 %v515, %v522
        %v524 = vsub.f32 %v505, %v523
        %v525 = vmul.f32 %v524, %v524
        %v526 = vmul.f32 %v525, %v512
        %527 = vadd.xlane.f32.xlu0 %v526
        %v528 = vpop.xlane.xlu0 %527
        %v529 = vmul.f32 %v528, %v522
        %v530 = vadd.f32 %v529, 1e-05
        %v531 = vrsqrt.pop %v530
        %v532 = vmul.f32 %v531, %v530
        %v533 = vmul.f32 %v532, %v531
        %v534 = vmul.f32 0.5, %v533
        %v535 = vsub.f32 1.5, %v534
        %v536 = vmul.f32 %v531, %v535
        %vm537 = vweird.f32 %v530
        %vm538 = vweird.f32 %v531
        %vm539 = vmor %vm537, %vm538
        %v540 = vsel %vm539, %v531, %v536
        %v541 = vmul.f32 %v524, %v540
        %v543 = vperm.slane %v506, 0
        %v545 = vmul.f32 %v541, %v543
        %v547 = vperm.slane %v507, 0
        %v549 = vadd.f32 %v545, %v547
        %550 = vst [vmem:[%s373] sm:$0xff] %v549
        %p551 = scmp.lt.s32.totalorder %s21, 1
        %s552 = scalar_select %p551, %s21, 1
        %s553 = smul.addr %s552, 8
        %s554 = scalar_lea.vmem %s7, %s553
        // Predicated region
        $region69: #{forward.7} parent=47 // pred_check
          %p555 = pneg %p196
        $region70: #{forward.7} parent=47 // pred_check_branch
          %557 = sbr.rel (%p555) target = $region72
        $region71: #{forward.7} parent=47 // pred_region
          _
        $region72: #{forward.7} parent=47 // pred_fallthru
          _
      $region48: #{forward.7} parent=5 // pred_fallthru
        _
      %p558 = scmp.le.s32.totalorder 2, %s16
      // Predicated region
      $region73: #{forward.7} parent=5 // pred_check
        %p559 = pneg %p558
      $region74: #{forward.7} parent=5 // pred_check_branch
        %561 = sbr.rel (%p559) target = $region76
      $region75: #{forward.7} parent=5 // pred_region
        %s562 = ssub.s32 %s16, 2
        // Predicated region
        $region77: #{forward.7} parent=75 // pred_check
          %p563 = pneg %p202
        $region78: #{forward.7} parent=75 // pred_check_branch
          %565 = sbr.rel (%p563) target = $region80
        $region79: #{forward.7} parent=75 // pred_region
          %p566 = scmp.lt.s32.totalorder %s22, 1
          %s567 = scalar_select %p566, %s22, 1
          %s568 = smul.addr %s567, 8
          %s569 = scalar_lea.vmem %s7, %s568
        $region80: #{forward.7} parent=75 // pred_fallthru
          _
      $region76: #{forward.7} parent=5 // pred_fallthru
        _
    $region6: #{forward.7} parent=1 // loop_footer
      %s20 = sadd.s32 1, %s16
    $region7: #{forward.7} parent=1 // loop_footer_branch
      %15 = sbr.rel target = $region3
    $region8: #{forward.7} parent=1 // loop_exit
      _
    %570 = vsyncpa [#allocation3], 1
    %s571 = scalar_lea.sflag [#allocation3], 1
    %572 = vsyncpa %s571, 1
    %573 = vsyncpa [#allocation5], 1
    %574 = vsyncpa [#allocation8], 1

// kernel: forward.9
$region0: #{forward.9}
  #allocation0 [shape = 'u32[]', space=smem, size = 0x4, offset = 0x4, fixed_abs, tag = 'smem constant byte address 0x4 - core index']
  #allocation1 [shape = 'u32[72,128]{1,0:T(1,128)}', space=vmem, size = 0x9000, scoped, tag = 'internal scratch']
  #allocation2 [shape = 'f32[8,512]{1,0:T(8,128)}', space=vmem, size = 0x4000, scoped, tag = 'scratch operand']
  %s0 = inlined_call_operand.vmem [shape: f32[8,128], index: 0, kind: input, shape index: {}]
  %s1 = inlined_call_operand.hbm [shape: f32[128,512], index: 1, kind: input, shape index: {}]
  %s2 = inlined_call_operand.vmem [shape: f32[1,512], index: 2, kind: input, shape index: {}]
  %s3 = inlined_call_operand.vmem [shape: f32[8,512], index: 3, kind: output, shape index: {}]
  %s4 = sld [smem:[#allocation0]]
  $region34: #{forward.9} parent=0
    _
  %s6 = ssub.s32 1, %s4
  %s7 = scalar_select 0, %s6, %s4
  $region1: #{forward.9} parent=0
    #allocation3 [shape = 'u8[262144]{0}', space=vmem, size = 0x40000, scoped, tag = 'input window, operand 1, single buffered']
    #allocation4 [shape = 's32[1]{0}', space=sflag, size = 0x4, scoped, tag = 'scoped memory for forward.9']
    %8 = vsyncpa [#allocation4], 0
    // Predicated region
    $region2: #{forward.9} parent=1 // pred_check
      _
    $region3: #{forward.9} parent=1 // pred_check_branch
      %10 = sbr.rel (0) target = $region5
    $region4: #{forward.9} parent=1 // pred_region
      _
    $region5: #{forward.9} parent=1 // pred_fallthru
      _
    // Predicated region
    $region6: #{forward.9} parent=1 // pred_check
      _
    $region7: #{forward.9} parent=1 // pred_check_branch
      %12 = sbr.rel (0) target = $region9
    $region8: #{forward.9} parent=1 // pred_region
      %14 = vsyncadd [#allocation4], 0
      %s15 = sshll.u32 %s1, 4
      %s16 = int_to_ptr.hbm [resolvable:$true] %s15
      %s17 = sshll.u32 [#allocation3], 4
      %s18 = int_to_ptr.vmem [resolvable:$true] %s17
      %23 = dma.hbm_to_vmem [thread:$0]  %s16, 8192, %s18, [#allocation4], 512, 512, 32
    $region9: #{forward.9} parent=1 // pred_fallthru
      _
    // Predicated region
    $region10: #{forward.9} parent=1 // pred_check
      _
    $region11: #{forward.9} parent=1 // pred_check_branch
      %25 = sbr.rel (0) target = $region13
    $region12: #{forward.9} parent=1 // pred_region
      _
    $region13: #{forward.9} parent=1 // pred_fallthru
      _
    // Predicated region
    $region14: #{forward.9} parent=1 // pred_check
      _
    $region15: #{forward.9} parent=1 // pred_check_branch
      %27 = sbr.rel (0) target = $region17
    $region16: #{forward.9} parent=1 // pred_region
      %29 = dma.done [#allocation4], 8192
    $region17: #{forward.9} parent=1 // pred_fallthru
      _
    %p30 = scmp.eq.s32.totalorder 0, 0
    // Predicated region
    $region18: #{forward.9} parent=1 // pred_check
      %p31 = pneg %p30
    $region19: #{forward.9} parent=1 // pred_check_branch
      %33 = sbr.rel (%p31) target = $region21
    $region20: #{forward.9} parent=1 // pred_region
      %34 = vst [vmem:[#allocation2] sm:$0xff] 0.0
      %35 = vst [vmem:[#allocation2 + $0x8] sm:$0xff] 0.0
      %36 = vst [vmem:[#allocation2 + $0x10] sm:$0xff] 0.0
      %37 = vst [vmem:[#allocation2 + $0x18] sm:$0xff] 0.0
    $region21: #{forward.9} parent=1 // pred_fallthru
      _
    %v38 = vld [vmem:[#allocation2] sm:$0xff]
    %v39 = vld [vmem:[#allocation2 + $0x8] sm:$0xff]
    %v40 = vld [vmem:[#allocation2 + $0x10] sm:$0xff]
    %v41 = vld [vmem:[#allocation2 + $0x18] sm:$0xff]
    %v42 = vld [vmem:[%s0] sm:$0xff]
    %v43 = vpack.c.bf16 %v42, %v42
    %v44 = vld [vmem:[#allocation3] sm:$0xff]
    %v45 = vld [vmem:[#allocation3 + $0x8] sm:$0xff]
    %v46 = vld [vmem:[#allocation3 + $0x10] sm:$0xff]
    %v47 = vld [vmem:[#allocation3 + $0x18] sm:$0xff]
    %v48 = vld [vmem:[#allocation3 + $0x20] sm:$0xff]
    %v49 = vld [vmem:[#allocation3 + $0x28] sm:$0xff]
    %v50 = vld [vmem:[#allocation3 + $0x30] sm:$0xff]
    %v51 = vld [vmem:[#allocation3 + $0x38] sm:$0xff]
    %v52 = vld [vmem:[#allocation3 + $0x40] sm:$0xff]
    %v53 = vld [vmem:[#allocation3 + $0x48] sm:$0xff]
    %v54 = vld [vmem:[#allocation3 + $0x50] sm:$0xff]
    %v55 = vld [vmem:[#allocation3 + $0x58] sm:$0xff]
    %v56 = vld [vmem:[#allocation3 + $0x60] sm:$0xff]
    %v57 = vld [vmem:[#allocation3 + $0x68] sm:$0xff]
    %v58 = vld [vmem:[#allocation3 + $0x70] sm:$0xff]
    %v59 = vld [vmem:[#allocation3 + $0x78] sm:$0xff]
    %v60 = vld [vmem:[#allocation3 + $0x80] sm:$0xff]
    %v61 = vld [vmem:[#allocation3 + $0x88] sm:$0xff]
    %v62 = vld [vmem:[#allocation3 + $0x90] sm:$0xff]
    %v63 = vld [vmem:[#allocation3 + $0x98] sm:$0xff]
    %v64 = vld [vmem:[#allocation3 + $0xa0] sm:$0xff]
    %v65 = vld [vmem:[#allocation3 + $0xa8] sm:$0xff]
    %v66 = vld [vmem:[#allocation3 + $0xb0] sm:$0xff]
    %v67 = vld [vmem:[#allocation3 + $0xb8] sm:$0xff]
    %v68 = vld [vmem:[#allocation3 + $0xc0] sm:$0xff]
    %v69 = vld [vmem:[#allocation3 + $0xc8] sm:$0xff]
    %v70 = vld [vmem:[#allocation3 + $0xd0] sm:$0xff]
    %v71 = vld [vmem:[#allocation3 + $0xd8] sm:$0xff]
    %v72 = vld [vmem:[#allocation3 + $0xe0] sm:$0xff]
    %v73 = vld [vmem:[#allocation3 + $0xe8] sm:$0xff]
    %v74 = vld [vmem:[#allocation3 + $0xf0] sm:$0xff]
    %v75 = vld [vmem:[#allocation3 + $0xf8] sm:$0xff]
    %v76 = vld [vmem:[#allocation3 + $0x100] sm:$0xff]
    %v77 = vld [vmem:[#allocation3 + $0x108] sm:$0xff]
    %v78 = vld [vmem:[#allocation3 + $0x110] sm:$0xff]
    %v79 = vld [vmem:[#allocation3 + $0x118] sm:$0xff]
    %v80 = vld [vmem:[#allocation3 + $0x120] sm:$0xff]
    %v81 = vld [vmem:[#allocation3 + $0x128] sm:$0xff]
    %v82 = vld [vmem:[#allocation3 + $0x130] sm:$0xff]
    %v83 = vld [vmem:[#allocation3 + $0x138] sm:$0xff]
    %v84 = vld [vmem:[#allocation3 + $0x140] sm:$0xff]
    %v85 = vld [vmem:[#allocation3 + $0x148] sm:$0xff]
    %v86 = vld [vmem:[#allocation3 + $0x150] sm:$0xff]
    %v87 = vld [vmem:[#allocation3 + $0x158] sm:$0xff]
    %v88 = vld [vmem:[#allocation3 + $0x160] sm:$0xff]
    %v89 = vld [vmem:[#allocation3 + $0x168] sm:$0xff]
    %v90 = vld [vmem:[#allocation3 + $0x170] sm:$0xff]
    %v91 = vld [vmem:[#allocation3 + $0x178] sm:$0xff]
    %v92 = vld [vmem:[#allocation3 + $0x180] sm:$0xff]
    %v93 = vld [vmem:[#allocation3 + $0x188] sm:$0xff]
    %v94 = vld [vmem:[#allocation3 + $0x190] sm:$0xff]
    %v95 = vld [vmem:[#allocation3 + $0x198] sm:$0xff]
    %v96 = vld [vmem:[#allocation3 + $0x1a0] sm:$0xff]
    %v97 = vld [vmem:[#allocation3 + $0x1a8] sm:$0xff]
    %v98 = vld [vmem:[#allocation3 + $0x1b0] sm:$0xff]
    %v99 = vld [vmem:[#allocation3 + $0x1b8] sm:$0xff]
    %v100 = vld [vmem:[#allocation3 + $0x1c0] sm:$0xff]
    %v101 = vld [vmem:[#allocation3 + $0x1c8] sm:$0xff]
    %v102 = vld [vmem:[#allocation3 + $0x1d0] sm:$0xff]
    %v103 = vld [vmem:[#allocation3 + $0x1d8] sm:$0xff]
    %v104 = vld [vmem:[#allocation3 + $0x1e0] sm:$0xff]
    %v105 = vld [vmem:[#allocation3 + $0x1e8] sm:$0xff]
    %v106 = vld [vmem:[#allocation3 + $0x1f0] sm:$0xff]
    %v107 = vld [vmem:[#allocation3 + $0x1f8] sm:$0xff]
    %v108 = vpack.c.bf16 %v48, %v44
    %v109 = vpack.c.bf16 %v49, %v45
    %v110 = vpack.c.bf16 %v50, %v46
    %v111 = vpack.c.bf16 %v51, %v47
    %v112 = vpack.c.bf16 %v56, %v52
    %v113 = vpack.c.bf16 %v57, %v53
    %v114 = vpack.c.bf16 %v58, %v54
    %v115 = vpack.c.bf16 %v59, %v55
    %v116 = vpack.c.bf16 %v64, %v60
    %v117 = vpack.c.bf16 %v65, %v61
    %v118 = vpack.c.bf16 %v66, %v62
    %v119 = vpack.c.bf16 %v67, %v63
    %v120 = vpack.c.bf16 %v72, %v68
    %v121 = vpack.c.bf16 %v73, %v69
    %v122 = vpack.c.bf16 %v74, %v70
    %v123 = vpack.c.bf16 %v75, %v71
    %v124 = vpack.c.bf16 %v80, %v76
    %v125 = vpack.c.bf16 %v81, %v77
    %v126 = vpack.c.bf16 %v82, %v78
    %v127 = vpack.c.bf16 %v83, %v79
    %v128 = vpack.c.bf16 %v88, %v84
    %v129 = vpack.c.bf16 %v89, %v85
    %v130 = vpack.c.bf16 %v90, %v86
    %v131 = vpack.c.bf16 %v91, %v87
    %v132 = vpack.c.bf16 %v96, %v92
    %v133 = vpack.c.bf16 %v97, %v93
    %v134 = vpack.c.bf16 %v98, %v94
    %v135 = vpack.c.bf16 %v99, %v95
    %v136 = vpack.c.bf16 %v104, %v100
    %v137 = vpack.c.bf16 %v105, %v101
    %v138 = vpack.c.bf16 %v106, %v102
    %v139 = vpack.c.bf16 %v107, %v103
    %140 = vmatpush.bf16.msra.mxu0 %v136
    %141 = vmatpush.bf16.msra.mxu0 %v132
    %142 = vmatpush.bf16.msra.mxu0 %v128
    %143 = vmatpush.bf16.msra.mxu0 %v124
    %144 = vmatpush.bf16.msra.mxu0 %v120
    %145 = vmatpush.bf16.msra.mxu0 %v116
    %146 = vmatpush.bf16.msra.mxu0 %v112
    %147 = vmatpush.bf16.msra.mxu0 %v108
    %148 = vmatmul.bf16.gmra.mxu0 %v43
    %v149 = vpop.f32.mrf.mxu0
    %v150 = vadd.f32 0.0, %v149
    %v151 = vpop.f32.mrf.mxu0
    %152 = vdwg.mxu0
    %153 = vmatpush.bf16.msra.mxu0 %v137
    %154 = vmatpush.bf16.msra.mxu0 %v133
    %155 = vmatpush.bf16.msra.mxu0 %v129
    %156 = vmatpush.bf16.msra.mxu0 %v125
    %157 = vmatpush.bf16.msra.mxu0 %v121
    %158 = vmatpush.bf16.msra.mxu0 %v117
    %159 = vmatpush.bf16.msra.mxu0 %v113
    %160 = vmatpush.bf16.msra.mxu0 %v109
    %161 = vmatmul.bf16.gmra.mxu0 %v43
    %v162 = vpop.f32.mrf.mxu0
    %v163 = vadd.f32 0.0, %v162
    %v164 = vpop.f32.mrf.mxu0
    %165 = vdwg.mxu0
    %166 = vmatpush.bf16.msra.mxu0 %v138
    %167 = vmatpush.bf16.msra.mxu0 %v134
    %168 = vmatpush.bf16.msra.mxu0 %v130
    %169 = vmatpush.bf16.msra.mxu0 %v126
    %170 = vmatpush.bf16.msra.mxu0 %v122
    %171 = vmatpush.bf16.msra.mxu0 %v118
    %172 = vmatpush.bf16.msra.mxu0 %v114
    %173 = vmatpush.bf16.msra.mxu0 %v110
    %174 = vmatmul.bf16.gmra.mxu0 %v43
    %v175 = vpop.f32.mrf.mxu0
    %v176 = vadd.f32 0.0, %v175
    %v177 = vpop.f32.mrf.mxu0
    %178 = vdwg.mxu0
    %179 = vmatpush.bf16.msra.mxu0 %v139
    %180 = vmatpush.bf16.msra.mxu0 %v135
    %181 = vmatpush.bf16.msra.mxu0 %v131
    %182 = vmatpush.bf16.msra.mxu0 %v127
    %183 = vmatpush.bf16.msra.mxu0 %v123
    %184 = vmatpush.bf16.msra.mxu0 %v119
    %185 = vmatpush.bf16.msra.mxu0 %v115
    %186 = vmatpush.bf16.msra.mxu0 %v111
    %187 = vmatmul.bf16.gmra.mxu0 %v43
    %v188 = vpop.f32.mrf.mxu0
    %v189 = vadd.f32 0.0, %v188
    %v190 = vpop.f32.mrf.mxu0
    %191 = vdwg.mxu0
    %v192 = vadd.f32 %v38, %v150
    %v193 = vadd.f32 %v39, %v163
    %v194 = vadd.f32 %v40, %v176
    %v195 = vadd.f32 %v41, %v189
    %196 = vst [vmem:[#allocation2] sm:$0xff] %v192
    %197 = vst [vmem:[#allocation2 + $0x8] sm:$0xff] %v193
    %198 = vst [vmem:[#allocation2 + $0x10] sm:$0xff] %v194
    %199 = vst [vmem:[#allocation2 + $0x18] sm:$0xff] %v195
    // Predicated region
    $region22: #{forward.9} parent=1 // pred_check
      %p200 = pneg %p30
    $region23: #{forward.9} parent=1 // pred_check_branch
      %202 = sbr.rel (%p200) target = $region25
    $region24: #{forward.9} parent=1 // pred_region
      %v203 = vld [vmem:[#allocation2] sm:$0xff]
      %v204 = vld [vmem:[#allocation2 + $0x8] sm:$0xff]
      %v205 = vld [vmem:[#allocation2 + $0x10] sm:$0xff]
      %v206 = vld [vmem:[#allocation2 + $0x18] sm:$0xff]
      %v207 = vld [vmem:[%s2] sm:$0xf]
      %v209 = vperm.slane %v207, 0
      %v210 = vperm.slane %v207, 1
      %v211 = vperm.slane %v207, 2
      %v212 = vperm.slane %v207, 3
      %v217 = vadd.f32 %v203, %v209
      %v218 = vadd.f32 %v204, %v210
      %v219 = vadd.f32 %v205, %v211
      %v220 = vadd.f32 %v206, %v212
      %221 = vst [vmem:[%s3] sm:$0xff] %v217
      %222 = vst [vmem:[%s3 + $0x8] sm:$0xff] %v218
      %223 = vst [vmem:[%s3 + $0x10] sm:$0xff] %v219
      %224 = vst [vmem:[%s3 + $0x18] sm:$0xff] %v220
    $region25: #{forward.9} parent=1 // pred_fallthru
      _
    // Predicated region
    $region26: #{forward.9} parent=1 // pred_check
      _
    $region27: #{forward.9} parent=1 // pred_check_branch
      %226 = sbr.rel (0) target = $region29
    $region28: #{forward.9} parent=1 // pred_region
      _
    $region29: #{forward.9} parent=1 // pred_fallthru
      _
    // Predicated region
    $region30: #{forward.9} parent=1 // pred_check
      _
    $region31: #{forward.9} parent=1 // pred_check_branch
      %228 = sbr.rel (0) target = $region33
    $region32: #{forward.9} parent=1 // pred_region
      _
    $region33: #{forward.9} parent=1 // pred_fallthru
      _
    %229 = vsyncpa [#allocation4], 1

// kernel: forward.8
$region0: #{forward.8}
  #allocation0 [shape = 'u32[]', space=smem, size = 0x4, offset = 0x4, fixed_abs, tag = 'smem constant byte address 0x4 - core index']
  #allocation1 [shape = 'u32[72,128]{1,0:T(1,128)}', space=vmem, size = 0x9000, scoped, tag = 'internal scratch']
  %s0 = inlined_call_operand.vmem [shape: f32[2,5,128], index: 0, kind: input, shape index: {}]
  %s1 = inlined_call_operand.vmem [shape: f32[2,5,128], index: 1, kind: input, shape index: {}]
  %s2 = inlined_call_operand.vmem [shape: f32[2,128,128], index: 2, kind: input, shape index: {}]
  %s3 = inlined_call_operand.hbm [shape: f32[1,128,128], index: 3, kind: input, shape index: {}]
  %s4 = inlined_call_operand.vmem [shape: f32[1,128], index: 4, kind: input, shape index: {}]
  %s5 = inlined_call_operand.hbm [shape: f32[1,128], index: 5, kind: input, shape index: {}]
  %s6 = inlined_call_operand.hbm [shape: f32[1,128], index: 6, kind: input, shape index: {}]
  %s7 = inlined_call_operand.vmem [shape: f32[2,4,128], index: 7, kind: output, shape index: {}]
  %s8 = sld [smem:[#allocation0]]
  $region73: #{forward.8} parent=0
    _
  %s10 = ssub.s32 1, %s8
  %s11 = scalar_select 0, %s10, %s8
  $region1: #{forward.8} parent=0
    #allocation2 [shape = 'u8[65536]{0}', space=vmem, size = 0x10000, scoped, tag = 'input window, operand 3, single buffered']
    #allocation3 [shape = 's32[2]{0}', space=sflag, size = 0x8, scoped, tag = 'scoped memory for forward.8']
    #allocation4 [shape = 'u8[512]{0}', space=vmem, size = 0x400, scoped, tag = 'input window, operand 5, single buffered']
    #allocation5 [shape = 's32[1]{0}', space=sflag, size = 0x4, scoped, tag = 'scoped memory for forward.8']
    #allocation6 [shape = 'u8[512]{0}', space=vmem, size = 0x400, scoped, tag = 'input window, operand 6, single buffered']
    %12 = vsyncpa [#allocation3], 0
    %13 = vsyncpa [#allocation5], 0
    loop: start=0, step=1, limit=4
    $region2: #{forward.8} parent=1 // loop_pre_header
      _
    $region3: #{forward.8} parent=1 // loop_header
      %s15 = sphi 0, %s19
      %p16 = scmp.ge.s32.totalorder %s15, 4
      %s25 = sphi 0, %s27
      %s28 = sphi 0, %s25
      %s29 = sphi 0, %s28
      %s45 = sphi 0, %s29
      %s51 = sphi 0, %s53
      %s54 = sphi 0, %s51
      %s55 = sphi 0, %s54
      %s71 = sphi 0, %s55
      %s75 = sphi 0, %s75
      %s77 = sphi 0, %s75
      %s78 = sphi 0, %s77
      %s92 = sphi 0, %s78
      %s96 = sphi 0, %s96
      %s98 = sphi 0, %s96
      %s99 = sphi 0, %s98
      %s113 = sphi 0, %s99
      %s117 = sphi 0, %s117
      %s119 = sphi 0, %s117
      %s120 = sphi 0, %s119
      %s134 = sphi 0, %s120
      %s138 = sphi 0, %s138
      %s140 = sphi 0, %s138
      %s141 = sphi 0, %s140
      %s155 = sphi 0, %s141
      %s159 = sphi 0, %s159
      %s161 = sphi 0, %s159
      %s162 = sphi 0, %s161
      %s176 = sphi 0, %s162
      %s182 = sphi 0, %s184
      %s185 = sphi 0, %s182
      %s186 = sphi 0, %s185
      %s202 = sphi 0, %s186
    $region4: #{forward.8} parent=1 // loop_header_branch
      %18 = sbr.rel (%p16) target = $region8
    $region5: #{forward.8} parent=1 // loop_body
      %s20 = ssub.s32 %s15, 1
      %s21 = ssub.s32 %s15, 2
      %s22 = sadd.s32 %s15, 1
      %s23 = ssub.s32 %s15, %s22
      %p24 = scmp.eq.s32.totalorder %s23, 0
      %s26 = sadd.s32 %s25, 1
      %s27 = scalar_select %p24, %s25, %s26
      %p30 = pneg %p24
      %p31 = scmp.eq.s32.totalorder %s15, 1
      %p32 = por %p30, %p31
      %p33 = scmp.ne.s32.totalorder %s25, %s28
      %p34 = scmp.eq.s32.totalorder %s15, 0
      %p35 = por %p33, %p34
      %p36 = scmp.ne.s32.totalorder %s25, %s28
      %p37 = scmp.eq.s32.totalorder %s20, 1
      %p38 = por %p36, %p37
      %p39 = scmp.ne.s32.totalorder %s28, %s29
      %p40 = scmp.eq.s32.totalorder %s20, 0
      %p41 = por %p39, %p40
      %p42 = scmp.ne.s32.totalorder %s28, %s29
      %p43 = scmp.eq.s32.totalorder %s21, 1
      %p44 = por %p42, %p43
      %p46 = scmp.ne.s32.totalorder %s29, %s45
      %p47 = scmp.eq.s32.totalorder %s21, 0
      %p48 = por %p46, %p47
      %s49 = ssub.s32 %s15, %s22
      %p50 = scmp.eq.s32.totalorder %s49, 0
      %s52 = sadd.s32 %s51, 1
      %s53 = scalar_select %p50, %s51, %s52
      %p56 = pneg %p50
      %p57 = scmp.eq.s32.totalorder %s15, 1
      %p58 = por %p56, %p57
      %p59 = scmp.ne.s32.totalorder %s51, %s54
      %p60 = scmp.eq.s32.totalorder %s15, 0
      %p61 = por %p59, %p60
      %p62 = scmp.ne.s32.totalorder %s51, %s54
      %p63 = scmp.eq.s32.totalorder %s20, 1
      %p64 = por %p62, %p63
      %p65 = scmp.ne.s32.totalorder %s54, %s55
      %p66 = scmp.eq.s32.totalorder %s20, 0
      %p67 = por %p65, %p66
      %p68 = scmp.ne.s32.totalorder %s54, %s55
      %p69 = scmp.eq.s32.totalorder %s21, 1
      %p70 = por %p68, %p69
      %p72 = scmp.ne.s32.totalorder %s55, %s71
      %p73 = scmp.eq.s32.totalorder %s21, 0
      %p74 = por %p72, %p73
      %s76 = sadd.s32 %s75, 1
      %p79 = scmp.eq.s32.totalorder %s15, 1
      %p80 = scmp.ne.s32.totalorder %s75, %s77
      %p81 = scmp.eq.s32.totalorder %s15, 0
      %p82 = por %p80, %p81
      %p83 = scmp.ne.s32.totalorder %s75, %s77
      %p84 = scmp.eq.s32.totalorder %s20, 1
      %p85 = por %p83, %p84
      %p86 = scmp.ne.s32.totalorder %s77, %s78
      %p87 = scmp.eq.s32.totalorder %s20, 0
      %p88 = por %p86, %p87
      %p89 = scmp.ne.s32.totalorder %s77, %s78
      %p90 = scmp.eq.s32.totalorder %s21, 1
      %p91 = por %p89, %p90
      %p93 = scmp.ne.s32.totalorder %s78, %s92
      %p94 = scmp.eq.s32.totalorder %s21, 0
      %p95 = por %p93, %p94
      %s97 = sadd.s32 %s96, 1
      %p100 = scmp.eq.s32.totalorder %s15, 1
      %p101 = scmp.ne.s32.totalorder %s96, %s98
      %p102 = scmp.eq.s32.totalorder %s15, 0
      %p103 = por %p101, %p102
      %p104 = scmp.ne.s32.totalorder %s96, %s98
      %p105 = scmp.eq.s32.totalorder %s20, 1
      %p106 = por %p104, %p105
      %p107 = scmp.ne.s32.totalorder %s98, %s99
      %p108 = scmp.eq.s32.totalorder %s20, 0
      %p109 = por %p107, %p108
      %p110 = scmp.ne.s32.totalorder %s98, %s99
      %p111 = scmp.eq.s32.totalorder %s21, 1
      %p112 = por %p110, %p111
      %p114 = scmp.ne.s32.totalorder %s99, %s113
      %p115 = scmp.eq.s32.totalorder %s21, 0
      %p116 = por %p114, %p115
      %s118 = sadd.s32 %s117, 1
      %p121 = scmp.eq.s32.totalorder %s15, 1
      %p122 = scmp.ne.s32.totalorder %s117, %s119
      %p123 = scmp.eq.s32.totalorder %s15, 0
      %p124 = por %p122, %p123
      %p125 = scmp.ne.s32.totalorder %s117, %s119
      %p126 = scmp.eq.s32.totalorder %s20, 1
      %p127 = por %p125, %p126
      %p128 = scmp.ne.s32.totalorder %s119, %s120
      %p129 = scmp.eq.s32.totalorder %s20, 0
      %p130 = por %p128, %p129
      %p131 = scmp.ne.s32.totalorder %s119, %s120
      %p132 = scmp.eq.s32.totalorder %s21, 1
      %p133 = por %p131, %p132
      %p135 = scmp.ne.s32.totalorder %s120, %s134
      %p136 = scmp.eq.s32.totalorder %s21, 0
      %p137 = por %p135, %p136
      %s139 = sadd.s32 %s138, 1
      %p142 = scmp.eq.s32.totalorder %s15, 1
      %p143 = scmp.ne.s32.totalorder %s138, %s140
      %p144 = scmp.eq.s32.totalorder %s15, 0
      %p145 = por %p143, %p144
      %p146 = scmp.ne.s32.totalorder %s138, %s140
      %p147 = scmp.eq.s32.totalorder %s20, 1
      %p148 = por %p146, %p147
      %p149 = scmp.ne.s32.totalorder %s140, %s141
      %p150 = scmp.eq.s32.totalorder %s20, 0
      %p151 = por %p149, %p150
      %p152 = scmp.ne.s32.totalorder %s140, %s141
      %p153 = scmp.eq.s32.totalorder %s21, 1
      %p154 = por %p152, %p153
      %p156 = scmp.ne.s32.totalorder %s141, %s155
      %p157 = scmp.eq.s32.totalorder %s21, 0
      %p158 = por %p156, %p157
      %s160 = sadd.s32 %s159, 1
      %p163 = scmp.eq.s32.totalorder %s15, 1
      %p164 = scmp.ne.s32.totalorder %s159, %s161
      %p165 = scmp.eq.s32.totalorder %s15, 0
      %p166 = por %p164, %p165
      %p167 = scmp.ne.s32.totalorder %s159, %s161
      %p168 = scmp.eq.s32.totalorder %s20, 1
      %p169 = por %p167, %p168
      %p170 = scmp.ne.s32.totalorder %s161, %s162
      %p171 = scmp.eq.s32.totalorder %s20, 0
      %p172 = por %p170, %p171
      %p173 = scmp.ne.s32.totalorder %s161, %s162
      %p174 = scmp.eq.s32.totalorder %s21, 1
      %p175 = por %p173, %p174
      %p177 = scmp.ne.s32.totalorder %s162, %s176
      %p178 = scmp.eq.s32.totalorder %s21, 0
      %p179 = por %p177, %p178
      %s180 = ssub.s32 %s15, %s22
      %p181 = scmp.eq.s32.totalorder %s180, 0
      %s183 = sadd.s32 %s182, 1
      %s184 = scalar_select %p181, %s182, %s183
      %p187 = pneg %p181
      %p188 = scmp.eq.s32.totalorder %s15, 1
      %p189 = por %p187, %p188
      %p190 = scmp.ne.s32.totalorder %s182, %s185
      %p191 = scmp.eq.s32.totalorder %s15, 0
      %p192 = por %p190, %p191
      %p193 = scmp.ne.s32.totalorder %s182, %s185
      %p194 = scmp.eq.s32.totalorder %s20, 1
      %p195 = por %p193, %p194
      %p196 = scmp.ne.s32.totalorder %s185, %s186
      %p197 = scmp.eq.s32.totalorder %s20, 0
      %p198 = por %p196, %p197
      %p199 = scmp.ne.s32.totalorder %s185, %s186
      %p200 = scmp.eq.s32.totalorder %s21, 1
      %p201 = por %p199, %p200
      %p203 = scmp.ne.s32.totalorder %s186, %s202
      %p204 = scmp.eq.s32.totalorder %s21, 0
      %p205 = por %p203, %p204
      %p206 = scmp.le.s32.totalorder 1, %s15
      %p207 = scmp.lt.s32.totalorder %s15, 3
      %p208 = pnand %p206, %p207
      %p209 = pneg %p208
      // Predicated region
      $region9: #{forward.8} parent=5 // pred_check
        _
      $region10: #{forward.8} parent=5 // pred_check_branch
        %211 = sbr.rel (%p208) target = $region12
      $region11: #{forward.8} parent=5 // pred_region
        %s212 = ssub.s32 %s15, 1
        // Predicated region
        $region13: #{forward.8} parent=11 // pred_check
          %p213 = pneg %p88
        $region14: #{forward.8} parent=11 // pred_check_branch
          %215 = sbr.rel (%p213) target = $region16
        $region15: #{forward.8} parent=11 // pred_region
          _
        $region16: #{forward.8} parent=11 // pred_fallthru
          _
        // Predicated region
        $region17: #{forward.8} parent=11 // pred_check
          %p216 = pneg %p109
        $region18: #{forward.8} parent=11 // pred_check_branch
          %218 = sbr.rel (%p216) target = $region20
        $region19: #{forward.8} parent=11 // pred_region
          %220 = vsyncadd [#allocation3], 0
          %s221 = sshll.u32 %s3, 4
          %s222 = int_to_ptr.hbm [resolvable:$true] %s221
          %s223 = sshll.u32 [#allocation2], 4
          %s224 = int_to_ptr.vmem [resolvable:$true] %s223
          %229 = dma.hbm_to_vmem [thread:$0]  %s222, 2048, %s224, [#allocation3], 128, 128, 8
        $region20: #{forward.8} parent=11 // pred_fallthru
          _
        // Predicated region
        $region21: #{forward.8} parent=11 // pred_check
          %p230 = pneg %p130
        $region22: #{forward.8} parent=11 // pred_check_branch
          %232 = sbr.rel (%p230) target = $region24
        $region23: #{forward.8} parent=11 // pred_region
          _
        $region24: #{forward.8} parent=11 // pred_fallthru
          _
        // Predicated region
        $region25: #{forward.8} parent=11 // pred_check
          %p233 = pneg %p151
        $region26: #{forward.8} parent=11 // pred_check_branch
          %235 = sbr.rel (%p233) target = $region28
        $region27: #{forward.8} parent=11 // pred_region
          %237 = vsyncadd [#allocation5], 0
          %s239 = sshll.u32 %s5, 4
          %s240 = int_to_ptr.hbm [resolvable:$true] %s239
          %s241 = sshll.u32 [#allocation4], 4
          %s242 = int_to_ptr.vmem [resolvable:$true] %s241
          %244 = dma.hbm_to_vmem [thread:$0]  %s240, 16, %s242, [#allocation5]
        $region28: #{forward.8} parent=11 // pred_fallthru
          _
        // Predicated region
        $region29: #{forward.8} parent=11 // pred_check
          %p245 = pneg %p172
        $region30: #{forward.8} parent=11 // pred_check_branch
          %247 = sbr.rel (%p245) target = $region32
        $region31: #{forward.8} parent=11 // pred_region
          %249 = vsyncadd [#allocation5], 0
          %s251 = sshll.u32 %s6, 4
          %s252 = int_to_ptr.hbm [resolvable:$true] %s251
          %s253 = sshll.u32 [#allocation6], 4
          %s254 = int_to_ptr.vmem [resolvable:$true] %s253
          %256 = dma.hbm_to_vmem [thread:$0]  %s252, 16, %s254, [#allocation5]
        $region32: #{forward.8} parent=11 // pred_fallthru
          _
      $region12: #{forward.8} parent=5 // pred_fallthru
        _
      %p257 = scmp.lt.s32.totalorder %s15, 2
      // Predicated region
      $region33: #{forward.8} parent=5 // pred_check
        %p258 = pneg %p257
      $region34: #{forward.8} parent=5 // pred_check_branch
        %260 = sbr.rel (%p258) target = $region36
      $region35: #{forward.8} parent=5 // pred_region
        // Predicated region
        $region37: #{forward.8} parent=35 // pred_check
          %p261 = pneg %p35
        $region38: #{forward.8} parent=35 // pred_check_branch
          %263 = sbr.rel (%p261) target = $region40
        $region39: #{forward.8} parent=35 // pred_region
          %p264 = scmp.lt.s32.totalorder %s15, 1
          %s265 = scalar_select %p264, %s15, 1
          %s266 = smul.addr %s265, 8
          %s267 = scalar_lea.vmem %s0, %s266
        $region40: #{forward.8} parent=35 // pred_fallthru
          _
        // Predicated region
        $region41: #{forward.8} parent=35 // pred_check
          %p268 = pneg %p61
        $region42: #{forward.8} parent=35 // pred_check_branch
          %270 = sbr.rel (%p268) target = $region44
        $region43: #{forward.8} parent=35 // pred_region
          %p271 = scmp.lt.s32.totalorder %s15, 1
          %s272 = scalar_select %p271, %s15, 1
          %s273 = smul.addr %s272, 8
          %s274 = scalar_lea.vmem %s1, %s273
        $region44: #{forward.8} parent=35 // pred_fallthru
          _
      $region36: #{forward.8} parent=5 // pred_fallthru
        _
      %p275 = scmp.le.s32.totalorder 1, %s15
      %p276 = scmp.lt.s32.totalorder %s15, 3
      %p277 = pnand %p275, %p276
      %p278 = pneg %p277
      // Predicated region
      $region45: #{forward.8} parent=5 // pred_check
        _
      $region46: #{forward.8} parent=5 // pred_check_branch
        %280 = sbr.rel (%p277) target = $region48
      $region47: #{forward.8} parent=5 // pred_region
        %s281 = ssub.s32 %s15, 1
        // Predicated region
        $region49: #{forward.8} parent=47 // pred_check
          %p282 = pneg %p109
        $region50: #{forward.8} parent=47 // pred_check_branch
          %284 = sbr.rel (%p282) target = $region52
        $region51: #{forward.8} parent=47 // pred_region
          %286 = dma.done [#allocation3], 2048
        $region52: #{forward.8} parent=47 // pred_fallthru
          _
        // Predicated region
        $region53: #{forward.8} parent=47 // pred_check
          %p287 = pneg %p151
        $region54: #{forward.8} parent=47 // pred_check_branch
          %289 = sbr.rel (%p287) target = $region56
        $region55: #{forward.8} parent=47 // pred_region
          %291 = dma.done [#allocation5], 16
        $region56: #{forward.8} parent=47 // pred_fallthru
          _
        // Predicated region
        $region57: #{forward.8} parent=47 // pred_check
          %p292 = pneg %p172
        $region58: #{forward.8} parent=47 // pred_check_branch
          %294 = sbr.rel (%p292) target = $region60
        $region59: #{forward.8} parent=47 // pred_region
          %296 = dma.done [#allocation5], 16
        $region60: #{forward.8} parent=47 // pred_fallthru
          _
        %p297 = scmp.lt.s32.totalorder %s20, 1
        %s298 = scalar_select %p297, %s20, 1
        %s299 = smul.addr %s298, 8
        %s300 = scalar_lea.vmem %s0, %s299
        %p301 = pneg %p41
        %p302 = pneg %p38
        %p303 = scmp.lt.s32.totalorder %s20, 1
        %s304 = scalar_select %p303, %s20, 1
        %s305 = smul.addr %s304, 8
        %s306 = scalar_lea.vmem %s1, %s305
        %p307 = pneg %p67
        %p308 = pneg %p64
        %p309 = pneg %p88
        %p310 = pneg %p85
        %p311 = pneg %p109
        %p312 = pneg %p106
        %p313 = pneg %p130
        %p314 = pneg %p127
        %p315 = pneg %p151
        %p316 = pneg %p148
        %p317 = pneg %p172
        %p318 = pneg %p169
        %p319 = pneg %p198
        %p320 = pneg %p195
        %p321 = scmp.lt.s32.totalorder %s20, 1
        %s322 = scalar_select %p321, %s20, 1
        %s323 = smul.addr %s322, 4
        %s324 = scalar_lea.vmem %s7, %s323
        %p325 = scmp.lt.s32.totalorder %s20, 1
        %s326 = scalar_select %p325, %s20, 1
        %s327 = smul.addr %s326, 8
        %s328 = scalar_lea.vmem %s0, %s327
        %p329 = scmp.lt.s32.totalorder %s20, 1
        %s330 = scalar_select %p329, %s20, 1
        %s331 = smul.addr %s330, 8
        %s332 = scalar_lea.vmem %s1, %s331
        %p333 = scmp.lt.s32.totalorder %s20, 1
        %s334 = scalar_select %p333, %s20, 1
        %s335 = smul.addr %s334, 4
        %s336 = scalar_lea.vmem %s7, %s335
        %v337 = vld [vmem:[%s328] sm:$0x1f]
        %v338 = vld [vmem:[%s332] sm:$0x1f]
        %v339 = vpack.c.bf16 %v337, %v337
        %v340 = vld [vmem:[%s2] sm:$0xff]
        %v341 = vld [vmem:[%s2 + $0x8] sm:$0xff]
        %v342 = vld [vmem:[%s2 + $0x10] sm:$0xff]
        %v343 = vld [vmem:[%s2 + $0x18] sm:$0xff]
        %v344 = vld [vmem:[%s2 + $0x20] sm:$0xff]
        %v345 = vld [vmem:[%s2 + $0x28] sm:$0xff]
        %v346 = vld [vmem:[%s2 + $0x30] sm:$0xff]
        %v347 = vld [vmem:[%s2 + $0x38] sm:$0xff]
        %v348 = vld [vmem:[%s2 + $0x40] sm:$0xff]
        %v349 = vld [vmem:[%s2 + $0x48] sm:$0xff]
        %v350 = vld [vmem:[%s2 + $0x50] sm:$0xff]
        %v351 = vld [vmem:[%s2 + $0x58] sm:$0xff]
        %v352 = vld [vmem:[%s2 + $0x60] sm:$0xff]
        %v353 = vld [vmem:[%s2 + $0x68] sm:$0xff]
        %v354 = vld [vmem:[%s2 + $0x70] sm:$0xff]
        %v355 = vld [vmem:[%s2 + $0x78] sm:$0xff]
        %v356 = vpack.c.bf16 %v341, %v340
        %v357 = vpack.c.bf16 %v343, %v342
        %v358 = vpack.c.bf16 %v345, %v344
        %v359 = vpack.c.bf16 %v347, %v346
        %v360 = vpack.c.bf16 %v349, %v348
        %v361 = vpack.c.bf16 %v351, %v350
        %v362 = vpack.c.bf16 %v353, %v352
        %v363 = vpack.c.bf16 %v355, %v354
        %s364 = scalar_lea.vmem %s2, 128
        %v365 = vld [vmem:[%s364] sm:$0xff]
        %v366 = vld [vmem:[%s364 + $0x8] sm:$0xff]
        %v367 = vld [vmem:[%s364 + $0x10] sm:$0xff]
        %v368 = vld [vmem:[%s364 + $0x18] sm:$0xff]
        %v369 = vld [vmem:[%s364 + $0x20] sm:$0xff]
        %v370 = vld [vmem:[%s364 + $0x28] sm:$0xff]
        %v371 = vld [vmem:[%s364 + $0x30] sm:$0xff]
        %v372 = vld [vmem:[%s364 + $0x38] sm:$0xff]
        %v373 = vld [vmem:[%s364 + $0x40] sm:$0xff]
        %v374 = vld [vmem:[%s364 + $0x48] sm:$0xff]
        %v375 = vld [vmem:[%s364 + $0x50] sm:$0xff]
        %v376 = vld [vmem:[%s364 + $0x58] sm:$0xff]
        %v377 = vld [vmem:[%s364 + $0x60] sm:$0xff]
        %v378 = vld [vmem:[%s364 + $0x68] sm:$0xff]
        %v379 = vld [vmem:[%s364 + $0x70] sm:$0xff]
        %v380 = vld [vmem:[%s364 + $0x78] sm:$0xff]
        %v381 = vpack.c.bf16 %v366, %v365
        %v382 = vpack.c.bf16 %v368, %v367
        %v383 = vpack.c.bf16 %v370, %v369
        %v384 = vpack.c.bf16 %v372, %v371
        %v385 = vpack.c.bf16 %v374, %v373
        %v386 = vpack.c.bf16 %v376, %v375
        %v387 = vpack.c.bf16 %v378, %v377
        %v388 = vpack.c.bf16 %v380, %v379
        %v390 = vshrl.u32 %v339, 16
        %v392 = vshll.u32 %v339, 16
        %v394 = vrot.slane %v392, 1
        %v395 = vor.u32 %v390, %v394
        %397 = vmatpush.bf16.msra.mxu0 %v388
        %398 = vmatpush.bf16.msra.mxu0 %v387
        %399 = vmatpush.bf16.msra.mxu0 %v386
        %400 = vmatpush.bf16.msra.mxu0 %v385
        %401 = vmatpush.bf16.msra.mxu0 %v384
        %402 = vmatpush.bf16.msra.mxu0 %v383
        %403 = vmatpush.bf16.msra.mxu0 %v382
        %404 = vmatpush.bf16.msra.mxu0 %v381
        %405 = vmatmul.bf16.gmra.mxu0 %v395
        %v406 = vpop.f32.mrf.mxu0
        %v407 = vadd.f32 0.0, %v406
        %v408 = vpop.f32.mrf.mxu0
        %409 = vdwg.mxu0
        %410 = vmatpush.bf16.msra.mxu0 %v363
        %411 = vmatpush.bf16.msra.mxu0 %v362
        %412 = vmatpush.bf16.msra.mxu0 %v361
        %413 = vmatpush.bf16.msra.mxu0 %v360
        %414 = vmatpush.bf16.msra.mxu0 %v359
        %415 = vmatpush.bf16.msra.mxu0 %v358
        %416 = vmatpush.bf16.msra.mxu0 %v357
        %417 = vmatpush.bf16.msra.mxu0 %v356
        %418 = vmatmul.bf16.gmra.mxu0 %v339
        %v419 = vpop.f32.mrf.mxu0
        %v420 = vadd.f32 %v407, %v419
        %v421 = vpop.f32.mrf.mxu0
        %422 = vdwg.mxu0
        %v423 = vpack.c.bf16 %v338, %v338
        %v424 = vld [vmem:[#allocation2] sm:$0xff]
        %v425 = vld [vmem:[#allocation2 + $0x8] sm:$0xff]
        %v426 = vld [vmem:[#allocation2 + $0x10] sm:$0xff]
        %v427 = vld [vmem:[#allocation2 + $0x18] sm:$0xff]
        %v428 = vld [vmem:[#allocation2 + $0x20] sm:$0xff]
        %v429 = vld [vmem:[#allocation2 + $0x28] sm:$0xff]
        %v430 = vld [vmem:[#allocation2 + $0x30] sm:$0xff]
        %v431 = vld [vmem:[#allocation2 + $0x38] sm:$0xff]
        %v432 = vld [vmem:[#allocation2 + $0x40] sm:$0xff]
        %v433 = vld [vmem:[#allocation2 + $0x48] sm:$0xff]
        %v434 = vld [vmem:[#allocation2 + $0x50] sm:$0xff]
        %v435 = vld [vmem:[#allocation2 + $0x58] sm:$0xff]
        %v436 = vld [vmem:[#allocation2 + $0x60] sm:$0xff]
        %v437 = vld [vmem:[#allocation2 + $0x68] sm:$0xff]
        %v438 = vld [vmem:[#allocation2 + $0x70] sm:$0xff]
        %v439 = vld [vmem:[#allocation2 + $0x78] sm:$0xff]
        %v440 = vpack.c.bf16 %v425, %v424
        %v441 = vpack.c.bf16 %v427, %v426
        %v442 = vpack.c.bf16 %v429, %v428
        %v443 = vpack.c.bf16 %v431, %v430
        %v444 = vpack.c.bf16 %v433, %v432
        %v445 = vpack.c.bf16 %v435, %v434
        %v446 = vpack.c.bf16 %v437, %v436
        %v447 = vpack.c.bf16 %v439, %v438
        %448 = vmatpush.bf16.msra.mxu0 %v447
        %449 = vmatpush.bf16.msra.mxu0 %v446
        %450 = vmatpush.bf16.msra.mxu0 %v445
        %451 = vmatpush.bf16.msra.mxu0 %v444
        %452 = vmatpush.bf16.msra.mxu0 %v443
        %453 = vmatpush.bf16.msra.mxu0 %v442
        %454 = vmatpush.bf16.msra.mxu0 %v441
        %455 = vmatpush.bf16.msra.mxu0 %v440
        %456 = vmatmul.bf16.gmra.mxu0 %v423
        %v457 = vpop.f32.mrf.mxu0
        %v458 = vadd.f32 0.0, %v457
        %v459 = vpop.f32.mrf.mxu0
        %460 = vdwg.mxu0
        %v461 = vadd.f32 %v420, %v458
        %v462 = vld [vmem:[%s4] sm:$0x1]
        %v464 = vperm.slane %v462, 0
        %v466 = vadd.f32 %v461, %v464
        %v467 = vld [vmem:[#allocation4] sm:$0x1]
        %v468 = vld [vmem:[#allocation6] sm:$0x1]
        %v469 = vlaneseq
        %v470 = vand.u32 %v469, 127
        %vm471 = vcmp.lt.s32.totalorder %v470, 32
        %v472 = vsel %vm471, 1, 0
        %v473 = vcvt.s32.f32 %v472
        %v474 = vmul.f32 %v466, %v473
        %vm475 = vcmask 1043456
        %v476 = vsel %vm475, %v474, 0.0
        %477 = vadd.xlane.f32.xlu0 %v476
        %v478 = vpop.xlane.xlu0 %477
        %v479 = vrcp.pop 32.0
        %v480 = vmul.f32 32.0, %v479
        %v481 = vsub.f32 1.0, %v480
        %v482 = vmul.f32 %v479, %v481
        %v483 = vadd.f32 %v479, %v482
        %vm484 = vweird.f32 %v479
        %v485 = vsel %vm484, %v479, %v483
        %v486 = vmul.f32 %v478, %v485
        %v487 = vsub.f32 %v466, %v486
        %v488 = vmul.f32 %v487, %v487
        %v489 = vmul.f32 %v488, %v473
        %v490 = vsel %vm475, %v489, 0.0
        %491 = vadd.xlane.f32.xlu0 %v490
        %v492 = vpop.xlane.xlu0 %491
        %v493 = vmul.f32 %v492, %v485
        %v494 = vadd.f32 %v493, 1e-05
        %v495 = vrsqrt.pop %v494
        %v496 = vmul.f32 %v495, %v494
        %v497 = vmul.f32 %v496, %v495
        %v498 = vmul.f32 0.5, %v497
        %v499 = vsub.f32 1.5, %v498
        %v500 = vmul.f32 %v495, %v499
        %vm501 = vweird.f32 %v494
        %vm502 = vweird.f32 %v495
        %vm503 = vmor %vm501, %vm502
        %v504 = vsel %vm503, %v495, %v500
        %v505 = vmul.f32 %v487, %v504
        %v507 = vperm.slane %v467, 0
        %v509 = vmul.f32 %v505, %v507
        %v511 = vperm.slane %v468, 0
        %v513 = vadd.f32 %v509, %v511
        %514 = vst [vmem:[%s336] sm:$0xf] %v513
        %p515 = scmp.lt.s32.totalorder %s20, 1
        %s516 = scalar_select %p515, %s20, 1
        %s517 = smul.addr %s516, 4
        %s518 = scalar_lea.vmem %s7, %s517
        // Predicated region
        $region61: #{forward.8} parent=47 // pred_check
          %p519 = pneg %p195
        $region62: #{forward.8} parent=47 // pred_check_branch
          %521 = sbr.rel (%p519) target = $region64
        $region63: #{forward.8} parent=47 // pred_region
          _
        $region64: #{forward.8} parent=47 // pred_fallthru
          _
      $region48: #{forward.8} parent=5 // pred_fallthru
        _
      %p522 = scmp.le.s32.totalorder 2, %s15
      // Predicated region
      $region65: #{forward.8} parent=5 // pred_check
        %p523 = pneg %p522
      $region66: #{forward.8} parent=5 // pred_check_branch
        %525 = sbr.rel (%p523) target = $region68
      $region67: #{forward.8} parent=5 // pred_region
        %s526 = ssub.s32 %s15, 2
        // Predicated region
        $region69: #{forward.8} parent=67 // pred_check
          %p527 = pneg %p201
        $region70: #{forward.8} parent=67 // pred_check_branch
          %529 = sbr.rel (%p527) target = $region72
        $region71: #{forward.8} parent=67 // pred_region
          %p530 = scmp.lt.s32.totalorder %s21, 1
          %s531 = scalar_select %p530, %s21, 1
          %s532 = smul.addr %s531, 4
          %s533 = scalar_lea.vmem %s7, %s532
        $region72: #{forward.8} parent=67 // pred_fallthru
          _
      $region68: #{forward.8} parent=5 // pred_fallthru
        _
    $region6: #{forward.8} parent=1 // loop_footer
      %s19 = sadd.s32 1, %s15
    $region7: #{forward.8} parent=1 // loop_footer_branch
      %14 = sbr.rel target = $region3
    $region8: #{forward.8} parent=1 // loop_exit
      _
    %534 = vsyncpa [#allocation3], 1
    %s535 = scalar_lea.sflag [#allocation3], 1
    %536 = vsyncpa %s535, 1
    %537 = vsyncpa [#allocation5], 1

// kernel: forward.10
$region0: #{forward.10}
  #allocation0 [shape = 'u32[]', space=smem, size = 0x4, offset = 0x4, fixed_abs, tag = 'smem constant byte address 0x4 - core index']
  #allocation1 [shape = 'u32[72,128]{1,0:T(1,128)}', space=vmem, size = 0x9000, scoped, tag = 'internal scratch']
  #allocation2 [shape = 'f32[1,128]{1,0:T(1,128)}', space=vmem, size = 0x200, scoped, tag = 'scratch operand']
  #allocation3 [shape = 'f32[1,128]{1,0:T(1,128)}', space=vmem, size = 0x200, scoped, tag = 'scratch operand']
  #allocation4 [shape = 'f32[4,128]{1,0:T(4,128)}', space=vmem, size = 0x800, scoped, tag = 'scratch operand']
  %s0 = inlined_call_operand.vmem [shape: f32[2,4,512], index: 0, kind: input, shape index: {}]
  %s1 = inlined_call_operand.hbm [shape: f32[128,512], index: 1, kind: input, shape index: {}]
  %s2 = inlined_call_operand.vmem [shape: f32[1,128], index: 2, kind: input, shape index: {}]
  %s3 = inlined_call_operand.vmem [shape: f32[1,128], index: 3, kind: input, shape index: {}]
  %s4 = inlined_call_operand.vmem [shape: f32[2,4,128], index: 4, kind: output, shape index: {}]
  %s5 = sld [smem:[#allocation0]]
  $region57: #{forward.10} parent=0
    _
  %s7 = ssub.s32 1, %s5
  %s8 = scalar_select 0, %s7, %s5
  $region1: #{forward.10} parent=0
    #allocation5 [shape = 'u8[262144]{0}', space=vmem, size = 0x40000, scoped, tag = 'input window, operand 1, single buffered']
    #allocation6 [shape = 's32[2]{0}', space=sflag, size = 0x8, scoped, tag = 'scoped memory for forward.10']
    %9 = vsyncpa [#allocation6], 0
    loop: start=0, step=1, limit=4
    $region2: #{forward.10} parent=1 // loop_pre_header
      _
    $region3: #{forward.10} parent=1 // loop_header
      %s11 = sphi 0, %s15
      %p12 = scmp.ge.s32.totalorder %s11, 4
      %s18 = sphi 0, %s30
      %s19 = sphi 0, %s26
      %s20 = sphi 0, %s18
      %s21 = sphi 0, %s19
      %s22 = sphi 0, %s20
      %s23 = sphi 0, %s21
      %s35 = sphi 0, %s37
      %s38 = sphi 0, %s35
      %s39 = sphi 0, %s38
      %s55 = sphi 0, %s39
      %s59 = sphi 0, %s59
      %s61 = sphi 0, %s59
      %s62 = sphi 0, %s61
      %s76 = sphi 0, %s62
      %s80 = sphi 0, %s80
      %s82 = sphi 0, %s80
      %s83 = sphi 0, %s82
      %s97 = sphi 0, %s83
      %s101 = sphi 0, %s101
      %s103 = sphi 0, %s101
      %s104 = sphi 0, %s103
      %s118 = sphi 0, %s104
      %s126 = sphi 0, %s128
      %s129 = sphi 0, %s126
      %s130 = sphi 0, %s129
      %s146 = sphi 0, %s130
    $region4: #{forward.10} parent=1 // loop_header_branch
      %14 = sbr.rel (%p12) target = $region8
    $region5: #{forward.10} parent=1 // loop_body
      %s16 = ssub.s32 %s11, 1
      %s17 = ssub.s32 %s11, 2
      %s24 = sadd.s32 1, %s19
      %p25 = scmp.ge.s32.totalorder %s24, 1
      %s26 = scalar_select %p25, 0, %s24
      %s27 = sadd.s32 1, %s18
      %s28 = scalar_select %p25, %s27, %s18
      %p29 = scmp.ge.s32.totalorder %s28, 2
      %s30 = scalar_select %p29, 0, %s28
      %s31 = ssub.s32 %s18, %s30
      %s32 = ssub.s32 %s19, %s26
      %s33 = sor.u32 %s31, %s32
      %p34 = scmp.eq.s32.totalorder %s33, 0
      %s36 = sadd.s32 %s35, 1
      %s37 = scalar_select %p34, %s35, %s36
      %p40 = pneg %p34
      %p41 = scmp.eq.s32.totalorder %s11, 1
      %p42 = por %p40, %p41
      %p43 = scmp.ne.s32.totalorder %s35, %s38
      %p44 = scmp.eq.s32.totalorder %s11, 0
      %p45 = por %p43, %p44
      %p46 = scmp.ne.s32.totalorder %s35, %s38
      %p47 = scmp.eq.s32.totalorder %s16, 1
      %p48 = por %p46, %p47
      %p49 = scmp.ne.s32.totalorder %s38, %s39
      %p50 = scmp.eq.s32.totalorder %s16, 0
      %p51 = por %p49, %p50
      %p52 = scmp.ne.s32.totalorder %s38, %s39
      %p53 = scmp.eq.s32.totalorder %s17, 1
      %p54 = por %p52, %p53
      %p56 = scmp.ne.s32.totalorder %s39, %s55
      %p57 = scmp.eq.s32.totalorder %s17, 0
      %p58 = por %p56, %p57
      %s60 = sadd.s32 %s59, 1
      %p63 = scmp.eq.s32.totalorder %s11, 1
      %p64 = scmp.ne.s32.totalorder %s59, %s61
      %p65 = scmp.eq.s32.totalorder %s11, 0
      %p66 = por %p64, %p65
      %p67 = scmp.ne.s32.totalorder %s59, %s61
      %p68 = scmp.eq.s32.totalorder %s16, 1
      %p69 = por %p67, %p68
      %p70 = scmp.ne.s32.totalorder %s61, %s62
      %p71 = scmp.eq.s32.totalorder %s16, 0
      %p72 = por %p70, %p71
      %p73 = scmp.ne.s32.totalorder %s61, %s62
      %p74 = scmp.eq.s32.totalorder %s17, 1
      %p75 = por %p73, %p74
      %p77 = scmp.ne.s32.totalorder %s62, %s76
      %p78 = scmp.eq.s32.totalorder %s17, 0
      %p79 = por %p77, %p78
      %s81 = sadd.s32 %s80, 1
      %p84 = scmp.eq.s32.totalorder %s11, 1
      %p85 = scmp.ne.s32.totalorder %s80, %s82
      %p86 = scmp.eq.s32.totalorder %s11, 0
      %p87 = por %p85, %p86
      %p88 = scmp.ne.s32.totalorder %s80, %s82
      %p89 = scmp.eq.s32.totalorder %s16, 1
      %p90 = por %p88, %p89
      %p91 = scmp.ne.s32.totalorder %s82, %s83
      %p92 = scmp.eq.s32.totalorder %s16, 0
      %p93 = por %p91, %p92
      %p94 = scmp.ne.s32.totalorder %s82, %s83
      %p95 = scmp.eq.s32.totalorder %s17, 1
      %p96 = por %p94, %p95
      %p98 = scmp.ne.s32.totalorder %s83, %s97
      %p99 = scmp.eq.s32.totalorder %s17, 0
      %p100 = por %p98, %p99
      %s102 = sadd.s32 %s101, 1
      %p105 = scmp.eq.s32.totalorder %s11, 1
      %p106 = scmp.ne.s32.totalorder %s101, %s103
      %p107 = scmp.eq.s32.totalorder %s11, 0
      %p108 = por %p106, %p107
      %p109 = scmp.ne.s32.totalorder %s101, %s103
      %p110 = scmp.eq.s32.totalorder %s16, 1
      %p111 = por %p109, %p110
      %p112 = scmp.ne.s32.totalorder %s103, %s104
      %p113 = scmp.eq.s32.totalorder %s16, 0
      %p114 = por %p112, %p113
      %p115 = scmp.ne.s32.totalorder %s103, %s104
      %p116 = scmp.eq.s32.totalorder %s17, 1
      %p117 = por %p115, %p116
      %p119 = scmp.ne.s32.totalorder %s104, %s118
      %p120 = scmp.eq.s32.totalorder %s17, 0
      %p121 = por %p119, %p120
      %s122 = ssub.s32 %s18, %s30
      %s123 = ssub.s32 %s19, %s26
      %s124 = sor.u32 %s122, %s123
      %p125 = scmp.eq.s32.totalorder %s124, 0
      %s127 = sadd.s32 %s126, 1
      %s128 = scalar_select %p125, %s126, %s127
      %p131 = pneg %p125
      %p132 = scmp.eq.s32.totalorder %s11, 1
      %p133 = por %p131, %p132
      %p134 = scmp.ne.s32.totalorder %s126, %s129
      %p135 = scmp.eq.s32.totalorder %s11, 0
      %p136 = por %p134, %p135
      %p137 = scmp.ne.s32.totalorder %s126, %s129
      %p138 = scmp.eq.s32.totalorder %s16, 1
      %p139 = por %p137, %p138
      %p140 = scmp.ne.s32.totalorder %s129, %s130
      %p141 = scmp.eq.s32.totalorder %s16, 0
      %p142 = por %p140, %p141
      %p143 = scmp.ne.s32.totalorder %s129, %s130
      %p144 = scmp.eq.s32.totalorder %s17, 1
      %p145 = por %p143, %p144
      %p147 = scmp.ne.s32.totalorder %s130, %s146
      %p148 = scmp.eq.s32.totalorder %s17, 0
      %p149 = por %p147, %p148
      %p150 = scmp.le.s32.totalorder 1, %s11
      %p151 = scmp.lt.s32.totalorder %s11, 3
      %p152 = pnand %p150, %p151
      %p153 = pneg %p152
      // Predicated region
      $region9: #{forward.10} parent=5 // pred_check
        _
      $region10: #{forward.10} parent=5 // pred_check_branch
        %155 = sbr.rel (%p152) target = $region12
      $region11: #{forward.10} parent=5 // pred_region
        %s156 = ssub.s32 %s11, 1
        // Predicated region
        $region13: #{forward.10} parent=11 // pred_check
          %p157 = pneg %p72
        $region14: #{forward.10} parent=11 // pred_check_branch
          %159 = sbr.rel (%p157) target = $region16
        $region15: #{forward.10} parent=11 // pred_region
          %161 = vsyncadd [#allocation6], 0
          %s162 = sshll.u32 %s1, 4
          %s163 = int_to_ptr.hbm [resolvable:$true] %s162
          %s164 = sshll.u32 [#allocation5], 4
          %s165 = int_to_ptr.vmem [resolvable:$true] %s164
          %170 = dma.hbm_to_vmem [thread:$0]  %s163, 8192, %s165, [#allocation6], 512, 512, 32
        $region16: #{forward.10} parent=11 // pred_fallthru
          _
        // Predicated region
        $region17: #{forward.10} parent=11 // pred_check
          %p171 = pneg %p93
        $region18: #{forward.10} parent=11 // pred_check_branch
          %173 = sbr.rel (%p171) target = $region20
        $region19: #{forward.10} parent=11 // pred_region
          _
        $region20: #{forward.10} parent=11 // pred_fallthru
          _
        // Predicated region
        $region21: #{forward.10} parent=11 // pred_check
          %p174 = pneg %p114
        $region22: #{forward.10} parent=11 // pred_check_branch
          %176 = sbr.rel (%p174) target = $region24
        $region23: #{forward.10} parent=11 // pred_region
          _
        $region24: #{forward.10} parent=11 // pred_fallthru
          _
      $region12: #{forward.10} parent=5 // pred_fallthru
        _
      %p177 = scmp.lt.s32.totalorder %s11, 2
      // Predicated region
      $region25: #{forward.10} parent=5 // pred_check
        %p178 = pneg %p177
      $region26: #{forward.10} parent=5 // pred_check_branch
        %180 = sbr.rel (%p178) target = $region28
      $region27: #{forward.10} parent=5 // pred_region
        // Predicated region
        $region29: #{forward.10} parent=27 // pred_check
          %p181 = pneg %p45
        $region30: #{forward.10} parent=27 // pred_check_branch
          %183 = sbr.rel (%p181) target = $region32
        $region31: #{forward.10} parent=27 // pred_region
          %p184 = scmp.lt.s32.totalorder %s18, 1
          %s185 = scalar_select %p184, %s18, 1
          %p186 = scmp.lt.s32.totalorder %s19, 0
          %s187 = scalar_select %p186, %s19, 0
          %s188 = smul.addr %s187, 4
          %s189 = smul.addr %s185, 4
          %s190 = sadd.s32 %s188, %s189
          %s191 = smul.addr %s190, 4
          %s192 = scalar_lea.vmem %s0, %s191
        $region32: #{forward.10} parent=27 // pred_fallthru
          _
      $region28: #{forward.10} parent=5 // pred_fallthru
        _
      %p193 = scmp.le.s32.totalorder 1, %s11
      %p194 = scmp.lt.s32.totalorder %s11, 3
      %p195 = pnand %p193, %p194
      %p196 = pneg %p195
      // Predicated region
      $region33: #{forward.10} parent=5 // pred_check
        _
      $region34: #{forward.10} parent=5 // pred_check_branch
        %198 = sbr.rel (%p195) target = $region36
      $region35: #{forward.10} parent=5 // pred_region
        %s199 = ssub.s32 %s11, 1
        // Predicated region
        $region37: #{forward.10} parent=35 // pred_check
          %p200 = pneg %p72
        $region38: #{forward.10} parent=35 // pred_check_branch
          %202 = sbr.rel (%p200) target = $region40
        $region39: #{forward.10} parent=35 // pred_region
          %204 = dma.done [#allocation6], 8192
        $region40: #{forward.10} parent=35 // pred_fallthru
          _
        %p205 = scmp.lt.s32.totalorder %s20, 1
        %s206 = scalar_select %p205, %s20, 1
        %p207 = scmp.lt.s32.totalorder %s21, 0
        %s208 = scalar_select %p207, %s21, 0
        %s209 = smul.addr %s208, 4
        %s210 = smul.addr %s206, 4
        %s211 = sadd.s32 %s209, %s210
        %s212 = smul.addr %s211, 4
        %s213 = scalar_lea.vmem %s0, %s212
        %p214 = pneg %p51
        %p215 = pneg %p48
        %p216 = pneg %p72
        %p217 = pneg %p69
        %p218 = pneg %p93
        %p219 = pneg %p90
        %p220 = pneg %p114
        %p221 = pneg %p111
        %p222 = pneg %p142
        %p223 = pneg %p139
        %p224 = scmp.lt.s32.totalorder %s20, 1
        %s225 = scalar_select %p224, %s20, 1
        %p226 = scmp.lt.s32.totalorder %s21, 0
        %s227 = scalar_select %p226, %s21, 0
        %s228 = sadd.s32 %s227, %s225
        %s229 = smul.addr %s228, 4
        %s230 = scalar_lea.vmem %s4, %s229
        %p231 = scmp.lt.s32.totalorder %s20, 1
        %s232 = scalar_select %p231, %s20, 1
        %p233 = scmp.lt.s32.totalorder %s21, 0
        %s234 = scalar_select %p233, %s21, 0
        %s235 = smul.addr %s234, 4
        %s236 = smul.addr %s232, 4
        %s237 = sadd.s32 %s235, %s236
        %s238 = smul.addr %s237, 4
        %s239 = scalar_lea.vmem %s0, %s238
        %p240 = scmp.lt.s32.totalorder %s20, 1
        %s241 = scalar_select %p240, %s20, 1
        %p242 = scmp.lt.s32.totalorder %s21, 0
        %s243 = scalar_select %p242, %s21, 0
        %s244 = sadd.s32 %s243, %s241
        %s245 = smul.addr %s244, 4
        %s246 = scalar_lea.vmem %s4, %s245
        %p247 = scmp.eq.s32.totalorder %s21, 0
        // Predicated region
        $region41: #{forward.10} parent=35 // pred_check
          %p248 = pneg %p247
        $region42: #{forward.10} parent=35 // pred_check_branch
          %250 = sbr.rel (%p248) target = $region44
        $region43: #{forward.10} parent=35 // pred_region
          %251 = vst [vmem:[#allocation2] sm:$0x1] 0.0
          %252 = vst [vmem:[#allocation3] sm:$0x1] 0.0
        $region44: #{forward.10} parent=35 // pred_fallthru
          _
        %v253 = vld [vmem:[%s239] sm:$0xff]
        %v254 = vld [vmem:[%s239 + $0x8] sm:$0xff]
        %v255 = vld [vmem:[#allocation5] sm:$0xff]
        %v256 = vld [vmem:[#allocation5 + $0x8] sm:$0xff]
        %v257 = vld [vmem:[#allocation5 + $0x10] sm:$0xff]
        %v258 = vld [vmem:[#allocation5 + $0x18] sm:$0xff]
        %v259 = vld [vmem:[#allocation5 + $0x20] sm:$0xff]
        %v260 = vld [vmem:[#allocation5 + $0x28] sm:$0xff]
        %v261 = vld [vmem:[#allocation5 + $0x30] sm:$0xff]
        %v262 = vld [vmem:[#allocation5 + $0x38] sm:$0xff]
        %v263 = vld [vmem:[#allocation5 + $0x40] sm:$0xff]
        %v264 = vld [vmem:[#allocation5 + $0x48] sm:$0xff]
        %v265 = vld [vmem:[#allocation5 + $0x50] sm:$0xff]
        %v266 = vld [vmem:[#allocation5 + $0x58] sm:$0xff]
        %v267 = vld [vmem:[#allocation5 + $0x60] sm:$0xff]
        %v268 = vld [vmem:[#allocation5 + $0x68] sm:$0xff]
        %v269 = vld [vmem:[#allocation5 + $0x70] sm:$0xff]
        %v270 = vld [vmem:[#allocation5 + $0x78] sm:$0xff]
        %v271 = vld [vmem:[#allocation5 + $0x80] sm:$0xff]
        %v272 = vld [vmem:[#allocation5 + $0x88] sm:$0xff]
        %v273 = vld [vmem:[#allocation5 + $0x90] sm:$0xff]
        %v274 = vld [vmem:[#allocation5 + $0x98] sm:$0xff]
        %v275 = vld [vmem:[#allocation5 + $0xa0] sm:$0xff]
        %v276 = vld [vmem:[#allocation5 + $0xa8] sm:$0xff]
        %v277 = vld [vmem:[#allocation5 + $0xb0] sm:$0xff]
        %v278 = vld [vmem:[#allocation5 + $0xb8] sm:$0xff]
        %v279 = vld [vmem:[#allocation5 + $0xc0] sm:$0xff]
        %v280 = vld [vmem:[#allocation5 + $0xc8] sm:$0xff]
        %v281 = vld [vmem:[#allocation5 + $0xd0] sm:$0xff]
        %v282 = vld [vmem:[#allocation5 + $0xd8] sm:$0xff]
        %v283 = vld [vmem:[#allocation5 + $0xe0] sm:$0xff]
        %v284 = vld [vmem:[#allocation5 + $0xe8] sm:$0xff]
        %v285 = vld [vmem:[#allocation5 + $0xf0] sm:$0xff]
        %v286 = vld [vmem:[#allocation5 + $0xf8] sm:$0xff]
        %v287 = vld [vmem:[#allocation5 + $0x100] sm:$0xff]
        %v288 = vld [vmem:[#allocation5 + $0x108] sm:$0xff]
        %v289 = vld [vmem:[#allocation5 + $0x110] sm:$0xff]
        %v290 = vld [vmem:[#allocation5 + $0x118] sm:$0xff]
        %v291 = vld [vmem:[#allocation5 + $0x120] sm:$0xff]
        %v292 = vld [vmem:[#allocation5 + $0x128] sm:$0xff]
        %v293 = vld [vmem:[#allocation5 + $0x130] sm:$0xff]
        %v294 = vld [vmem:[#allocation5 + $0x138] sm:$0xff]
        %v295 = vld [vmem:[#allocation5 + $0x140] sm:$0xff]
        %v296 = vld [vmem:[#allocation5 + $0x148] sm:$0xff]
        %v297 = vld [vmem:[#allocation5 + $0x150] sm:$0xff]
        %v298 = vld [vmem:[#allocation5 + $0x158] sm:$0xff]
        %v299 = vld [vmem:[#allocation5 + $0x160] sm:$0xff]
        %v300 = vld [vmem:[#allocation5 + $0x168] sm:$0xff]
        %v301 = vld [vmem:[#allocation5 + $0x170] sm:$0xff]
        %v302 = vld [vmem:[#allocation5 + $0x178] sm:$0xff]
        %v303 = vld [vmem:[#allocation5 + $0x180] sm:$0xff]
        %v304 = vld [vmem:[#allocation5 + $0x188] sm:$0xff]
        %v305 = vld [vmem:[#allocation5 + $0x190] sm:$0xff]
        %v306 = vld [vmem:[#allocation5 + $0x198] sm:$0xff]
        %v307 = vld [vmem:[#allocation5 + $0x1a0] sm:$0xff]
        %v308 = vld [vmem:[#allocation5 + $0x1a8] sm:$0xff]
        %v309 = vld [vmem:[#allocation5 + $0x1b0] sm:$0xff]
        %v310 = vld [vmem:[#allocation5 + $0x1b8] sm:$0xff]
        %v311 = vld [vmem:[#allocation5 + $0x1c0] sm:$0xff]
        %v312 = vld [vmem:[#allocation5 + $0x1c8] sm:$0xff]
        %v313 = vld [vmem:[#allocation5 + $0x1d0] sm:$0xff]
        %v314 = vld [vmem:[#allocation5 + $0x1d8] sm:$0xff]
        %v315 = vld [vmem:[#allocation5 + $0x1e0] sm:$0xff]
        %v316 = vld [vmem:[#allocation5 + $0x1e8] sm:$0xff]
        %v317 = vld [vmem:[#allocation5 + $0x1f0] sm:$0xff]
        %v318 = vld [vmem:[#allocation5 + $0x1f8] sm:$0xff]
        %v319 = vpack.c.bf16 %v259, %v255
        %v320 = vpack.c.bf16 %v260, %v256
        %v321 = vpack.c.bf16 %v261, %v257
        %v322 = vpack.c.bf16 %v262, %v258
        %v323 = vpack.c.bf16 %v267, %v263
        %v324 = vpack.c.bf16 %v268, %v264
        %v325 = vpack.c.bf16 %v269, %v265
        %v326 = vpack.c.bf16 %v270, %v266
        %v327 = vpack.c.bf16 %v275, %v271
        %v328 = vpack.c.bf16 %v276, %v272
        %v329 = vpack.c.bf16 %v277, %v273
        %v330 = vpack.c.bf16 %v278, %v274
        %v331 = vpack.c.bf16 %v283, %v279
        %v332 = vpack.c.bf16 %v284, %v280
        %v333 = vpack.c.bf16 %v285, %v281
        %v334 = vpack.c.bf16 %v286, %v282
        %v335 = vpack.c.bf16 %v291, %v287
        %v336 = vpack.c.bf16 %v292, %v288
        %v337 = vpack.c.bf16 %v293, %v289
        %v338 = vpack.c.bf16 %v294, %v290
        %v339 = vpack.c.bf16 %v299, %v295
        %v340 = vpack.c.bf16 %v300, %v296
        %v341 = vpack.c.bf16 %v301, %v297
        %v342 = vpack.c.bf16 %v302, %v298
        %v343 = vpack.c.bf16 %v307, %v303
        %v344 = vpack.c.bf16 %v308, %v304
        %v345 = vpack.c.bf16 %v309, %v305
        %v346 = vpack.c.bf16 %v310, %v306
        %v347 = vpack.c.bf16 %v315, %v311
        %v348 = vpack.c.bf16 %v316, %v312
        %v349 = vpack.c.bf16 %v317, %v313
        %v350 = vpack.c.bf16 %v318, %v314
        %v351 = vld [vmem:[%s2] sm:$0x1]
        %v352 = vld [vmem:[%s3] sm:$0x1]
        %v353 = vld [vmem:[#allocation2] sm:$0x1]
        %v354 = vpack.c.bf16 %v353, %v353
        %355 = vmatpush.bf16.msra.mxu0 %v347
        %356 = vmatpush.bf16.msra.mxu0 %v343
        %357 = vmatpush.bf16.msra.mxu0 %v339
        %358 = vmatpush.bf16.msra.mxu0 %v335
        %359 = vmatpush.bf16.msra.mxu0 %v331
        %360 = vmatpush.bf16.msra.mxu0 %v327
        %361 = vmatpush.bf16.msra.mxu0 %v323
        %362 = vmatpush.bf16.msra.mxu0 %v319
        %363 = vmatmul.bf16.gmra.mxu0 %v354
        %v364 = vpop.f32.mrf.mxu0
        %v365 = vadd.f32 0.0, %v364
        %v366 = vpop.f32.mrf.mxu0
        %367 = vdwg.mxu0
        %368 = vmatpush.bf16.msra.mxu0 %v348
        %369 = vmatpush.bf16.msra.mxu0 %v344
        %370 = vmatpush.bf16.msra.mxu0 %v340
        %371 = vmatpush.bf16.msra.mxu0 %v336
        %372 = vmatpush.bf16.msra.mxu0 %v332
        %373 = vmatpush.bf16.msra.mxu0 %v328
        %374 = vmatpush.bf16.msra.mxu0 %v324
        %375 = vmatpush.bf16.msra.mxu0 %v320
        %376 = vmatmul.bf16.gmra.mxu0 %v354
        %v377 = vpop.f32.mrf.mxu0
        %v378 = vadd.f32 0.0, %v377
        %v379 = vpop.f32.mrf.mxu0
        %380 = vdwg.mxu0
        %381 = vmatpush.bf16.msra.mxu0 %v349
        %382 = vmatpush.bf16.msra.mxu0 %v345
        %383 = vmatpush.bf16.msra.mxu0 %v341
        %384 = vmatpush.bf16.msra.mxu0 %v337
        %385 = vmatpush.bf16.msra.mxu0 %v333
        %386 = vmatpush.bf16.msra.mxu0 %v329
        %387 = vmatpush.bf16.msra.mxu0 %v325
        %388 = vmatpush.bf16.msra.mxu0 %v321
        %389 = vmatmul.bf16.gmra.mxu0 %v354
        %v390 = vpop.f32.mrf.mxu0
        %v391 = vadd.f32 0.0, %v390
        %v392 = vpop.f32.mrf.mxu0
        %393 = vdwg.mxu0
        %394 = vmatpush.bf16.msra.mxu0 %v350
        %395 = vmatpush.bf16.msra.mxu0 %v346
        %396 = vmatpush.bf16.msra.mxu0 %v342
        %397 = vmatpush.bf16.msra.mxu0 %v338
        %398 = vmatpush.bf16.msra.mxu0 %v334
        %399 = vmatpush.bf16.msra.mxu0 %v330
        %400 = vmatpush.bf16.msra.mxu0 %v326
        %401 = vmatpush.bf16.msra.mxu0 %v322
        %402 = vmatmul.bf16.gmra.mxu0 %v354
        %v403 = vpop.f32.mrf.mxu0
        %v404 = vadd.f32 0.0, %v403
        %v405 = vpop.f32.mrf.mxu0
        %406 = vdwg.mxu0
        %v411 = vrot.slane %v378, 4
        %v412 = vrot.slane %v404, 4
        %vm413 = vcmask 1043456
        %v414 = vsel %vm413, %v365, %v411
        %v415 = vsel %vm413, %v391, %v412
        %v418 = vadd.f32 %v253, %v414
        %v419 = vadd.f32 %v254, %v415
        %v420 = vxor.u32 %v418, 2147483648
        %v421 = vmul.f32 %v420, 1.442695
        %v422 = vpow.pop %v421
        %v423 = vadd.f32 %v422, 1.0
        %v424 = vrcp.pop %v423
        %v425 = vmul.f32 %v423, %v424
        %v426 = vsub.f32 1.0, %v425
        %v427 = vmul.f32 %v424, %v426
        %v428 = vadd.f32 %v424, %v427
        %vm429 = vweird.f32 %v423
        %vm430 = vweird.f32 %v424
        %vm431 = vmor %vm429, %vm430
        %v432 = vsel %vm431, %v424, %v428
        %v433 = vand.u32 2147483647, %v423
        %vm434 = vcmp.eq.f32.partialorder %v433, 8.507059e+37
        %v435 = vand.u32 %v423, 2147483648
        %v436 = vor.u32 1.1754944e-38, %v435
        %v437 = vsel %vm434, %v436, %v432
        %v438 = vmul.f32 1.0, %v437
        %v440 = vrot.slane %v418, 4
        %v442 = vxor.u32 %v440, 2147483648
        %v443 = vmul.f32 %v442, 1.442695
        %v444 = vpow.pop %v443
        %v445 = vadd.f32 %v444, 1.0
        %v446 = vrcp.pop %v445
        %v447 = vmul.f32 %v445, %v446
        %v448 = vsub.f32 1.0, %v447
        %v449 = vmul.f32 %v446, %v448
        %v450 = vadd.f32 %v446, %v449
        %vm451 = vweird.f32 %v445
        %vm452 = vweird.f32 %v446
        %vm453 = vmor %vm451, %vm452
        %v454 = vsel %vm453, %v446, %v450
        %v455 = vand.u32 2147483647, %v445
        %vm456 = vcmp.eq.f32.partialorder %v455, 8.507059e+37
        %v457 = vand.u32 %v445, 2147483648
        %v458 = vor.u32 1.1754944e-38, %v457
        %v459 = vsel %vm456, %v458, %v454
        %v460 = vmul.f32 1.0, %v459
        %v461 = vtanh.pop %v419
        %v463 = vrot.slane %v419, 4
        %v465 = vxor.u32 %v463, 2147483648
        %v466 = vmul.f32 %v465, 1.442695
        %v467 = vpow.pop %v466
        %v468 = vadd.f32 %v467, 1.0
        %v469 = vrcp.pop %v468
        %v470 = vmul.f32 %v468, %v469
        %v471 = vsub.f32 1.0, %v470
        %v472 = vmul.f32 %v469, %v471
        %v473 = vadd.f32 %v469, %v472
        %vm474 = vweird.f32 %v468
        %vm475 = vweird.f32 %v469
        %vm476 = vmor %vm474, %vm475
        %v477 = vsel %vm476, %v469, %v473
        %v478 = vand.u32 2147483647, %v468
        %vm479 = vcmp.eq.f32.partialorder %v478, 8.507059e+37
        %v480 = vand.u32 %v468, 2147483648
        %v481 = vor.u32 1.1754944e-38, %v480
        %v482 = vsel %vm479, %v481, %v477
        %v483 = vmul.f32 1.0, %v482
        %v484 = vld [vmem:[#allocation3] sm:$0x1]
        %v485 = vmul.f32 %v460, %v484
        %v486 = vmul.f32 %v438, %v461
        %v487 = vadd.f32 %v485, %v486
        %v488 = vtanh.pop %v487
        %v489 = vmul.f32 %v483, %v488
        %490 = vst [vmem:[#allocation3] sm:$0x1] %v487
        %491 = vst [vmem:[#allocation2] sm:$0x1] %v489
        %v492 = vlaneseq
        %v493 = vand.u32 %v492, 127
        %vm494 = vcmp.lt.s32.totalorder %v493, 32
        %v495 = vsel %vm494, 1, 0
        %v496 = vcvt.s32.f32 %v495
        %v497 = vmul.f32 %v489, %v496
        %vm498 = vcmask 1040384
        %v499 = vsel %vm498, %v497, 0.0
        %500 = vadd.xlane.f32.xlu0 %v499
        %v501 = vpop.xlane.xlu0 %500
        %v502 = vrcp.pop 32.0
        %v503 = vmul.f32 32.0, %v502
        %v504 = vsub.f32 1.0, %v503
        %v505 = vmul.f32 %v502, %v504
        %v506 = vadd.f32 %v502, %v505
        %vm507 = vweird.f32 %v502
        %v508 = vsel %vm507, %v502, %v506
        %v509 = vmul.f32 %v501, %v508
        %v510 = vsub.f32 %v489, %v509
        %v511 = vmul.f32 %v510, %v510
        %v512 = vmul.f32 %v511, %v496
        %v513 = vsel %vm498, %v512, 0.0
        %514 = vadd.xlane.f32.xlu0 %v513
        %v515 = vpop.xlane.xlu0 %514
        %v516 = vmul.f32 %v515, %v508
        %v517 = vadd.f32 %v516, 1e-05
        %v518 = vrsqrt.pop %v517
        %v519 = vmul.f32 %v518, %v517
        %v520 = vmul.f32 %v519, %v518
        %v521 = vmul.f32 0.5, %v520
        %v522 = vsub.f32 1.5, %v521
        %v523 = vmul.f32 %v518, %v522
        %vm524 = vweird.f32 %v517
        %vm525 = vweird.f32 %v518
        %vm526 = vmor %vm524, %vm525
        %v527 = vsel %vm526, %v518, %v523
        %v528 = vmul.f32 %v510, %v527
        %v529 = vmul.f32 %v528, %v351
        %v530 = vadd.f32 %v529, %v352
        %531 = vst [vmem:[#allocation4] sm:$0x1] %v530
        %v532 = vld [vmem:[#allocation2] sm:$0x1]
        %v533 = vpack.c.bf16 %v532, %v532
        %534 = vmatpush.bf16.msra.mxu0 %v347
        %535 = vmatpush.bf16.msra.mxu0 %v343
        %536 = vmatpush.bf16.msra.mxu0 %v339
        %537 = vmatpush.bf16.msra.mxu0 %v335
        %538 = vmatpush.bf16.msra.mxu0 %v331
        %539 = vmatpush.bf16.msra.mxu0 %v327
        %540 = vmatpush.bf16.msra.mxu0 %v323
        %541 = vmatpush.bf16.msra.mxu0 %v319
        %542 = vmatmul.bf16.gmra.mxu0 %v533
        %v543 = vpop.f32.mrf.mxu0
        %v544 = vadd.f32 0.0, %v543
        %v545 = vpop.f32.mrf.mxu0
        %546 = vdwg.mxu0
        %547 = vmatpush.bf16.msra.mxu0 %v348
        %548 = vmatpush.bf16.msra.mxu0 %v344
        %549 = vmatpush.bf16.msra.mxu0 %v340
        %550 = vmatpush.bf16.msra.mxu0 %v336
        %551 = vmatpush.bf16.msra.mxu0 %v332
        %552 = vmatpush.bf16.msra.mxu0 %v328
        %553 = vmatpush.bf16.msra.mxu0 %v324
        %554 = vmatpush.bf16.msra.mxu0 %v320
        %555 = vmatmul.bf16.gmra.mxu0 %v533
        %v556 = vpop.f32.mrf.mxu0
        %v557 = vadd.f32 0.0, %v556
        %v558 = vpop.f32.mrf.mxu0
        %559 = vdwg.mxu0
        %560 = vmatpush.bf16.msra.mxu0 %v349
        %561 = vmatpush.bf16.msra.mxu0 %v345
        %562 = vmatpush.bf16.msra.mxu0 %v341
        %563 = vmatpush.bf16.msra.mxu0 %v337
        %564 = vmatpush.bf16.msra.mxu0 %v333
        %565 = vmatpush.bf16.msra.mxu0 %v329
        %566 = vmatpush.bf16.msra.mxu0 %v325
        %567 = vmatpush.bf16.msra.mxu0 %v321
        %568 = vmatmul.bf16.gmra.mxu0 %v533
        %v569 = vpop.f32.mrf.mxu0
        %v570 = vadd.f32 0.0, %v569
        %v571 = vpop.f32.mrf.mxu0
        %572 = vdwg.mxu0
        %573 = vmatpush.bf16.msra.mxu0 %v350
        %574 = vmatpush.bf16.msra.mxu0 %v346
        %575 = vmatpush.bf16.msra.mxu0 %v342
        %576 = vmatpush.bf16.msra.mxu0 %v338
        %577 = vmatpush.bf16.msra.mxu0 %v334
        %578 = vmatpush.bf16.msra.mxu0 %v330
        %579 = vmatpush.bf16.msra.mxu0 %v326
        %580 = vmatpush.bf16.msra.mxu0 %v322
        %581 = vmatmul.bf16.gmra.mxu0 %v533
        %v582 = vpop.f32.mrf.mxu0
        %v583 = vadd.f32 0.0, %v582
        %v584 = vpop.f32.mrf.mxu0
        %585 = vdwg.mxu0
        %v590 = vrot.slane %v557, 4
        %v591 = vrot.slane %v583, 4
        %v592 = vsel %vm413, %v544, %v590
        %v593 = vsel %vm413, %v570, %v591
        %v594 = vrot.slane %v592, 7
        %v595 = vrot.slane %v593, 7
        %v598 = vadd.f32 %v253, %v594
        %v599 = vadd.f32 %v254, %v595
        %v600 = vxor.u32 %v598, 2147483648
        %v601 = vmul.f32 %v600, 1.442695
        %v602 = vpow.pop %v601
        %v603 = vadd.f32 %v602, 1.0
        %v604 = vrcp.pop %v603
        %v605 = vmul.f32 %v603, %v604
        %v606 = vsub.f32 1.0, %v605
        %v607 = vmul.f32 %v604, %v606
        %v608 = vadd.f32 %v604, %v607
        %vm609 = vweird.f32 %v603
        %vm610 = vweird.f32 %v604
        %vm611 = vmor %vm609, %vm610
        %v612 = vsel %vm611, %v604, %v608
        %v613 = vand.u32 2147483647, %v603
        %vm614 = vcmp.eq.f32.partialorder %v613, 8.507059e+37
        %v615 = vand.u32 %v603, 2147483648
        %v616 = vor.u32 1.1754944e-38, %v615
        %v617 = vsel %vm614, %v616, %v612
        %v618 = vmul.f32 1.0, %v617
        %v620 = vrot.slane %v598, 4
        %v622 = vxor.u32 %v620, 2147483648
        %v623 = vmul.f32 %v622, 1.442695
        %v624 = vpow.pop %v623
        %v625 = vadd.f32 %v624, 1.0
        %v626 = vrcp.pop %v625
        %v627 = vmul.f32 %v625, %v626
        %v628 = vsub.f32 1.0, %v627
        %v629 = vmul.f32 %v626, %v628
        %v630 = vadd.f32 %v626, %v629
        %vm631 = vweird.f32 %v625
        %vm632 = vweird.f32 %v626
        %vm633 = vmor %vm631, %vm632
        %v634 = vsel %vm633, %v626, %v630
        %v635 = vand.u32 2147483647, %v625
        %vm636 = vcmp.eq.f32.partialorder %v635, 8.507059e+37
        %v637 = vand.u32 %v625, 2147483648
        %v638 = vor.u32 1.1754944e-38, %v637
        %v639 = vsel %vm636, %v638, %v634
        %v640 = vmul.f32 1.0, %v639
        %v641 = vtanh.pop %v599
        %v643 = vrot.slane %v599, 4
        %v645 = vxor.u32 %v643, 2147483648
        %v646 = vmul.f32 %v645, 1.442695
        %v647 = vpow.pop %v646
        %v648 = vadd.f32 %v647, 1.0
        %v649 = vrcp.pop %v648
        %v650 = vmul.f32 %v648, %v649
        %v651 = vsub.f32 1.0, %v650
        %v652 = vmul.f32 %v649, %v651
        %v653 = vadd.f32 %v649, %v652
        %vm654 = vweird.f32 %v648
        %vm655 = vweird.f32 %v649
        %vm656 = vmor %vm654, %vm655
        %v657 = vsel %vm656, %v649, %v653
        %v658 = vand.u32 2147483647, %v648
        %vm659 = vcmp.eq.f32.partialorder %v658, 8.507059e+37
        %v660 = vand.u32 %v648, 2147483648
        %v661 = vor.u32 1.1754944e-38, %v660
        %v662 = vsel %vm659, %v661, %v657
        %v663 = vmul.f32 1.0, %v662
        %v664 = vld [vmem:[#allocation3] sm:$0x1]
        %v667 = vunpack.c.l.s4 286326784
        %v668 = vunpack.c.0.s8 %v667
        %v669 = vperm.slane %v664, %v668
        %v671 = vmul.f32 %v640, %v669
        %v672 = vmul.f32 %v618, %v641
        %v673 = vadd.f32 %v671, %v672
        %v674 = vtanh.pop %v673
        %v675 = vmul.f32 %v663, %v674
        %676 = vst [vmem:[#allocation3 - $0x1] sm:$0x2] %v673
        %677 = vst [vmem:[#allocation2 - $0x1] sm:$0x2] %v675
        %v678 = vmul.f32 %v675, %v496
        %vm679 = vcmask 1041409
        %v680 = vsel %vm679, %v678, 0.0
        %681 = vadd.xlane.f32.xlu0 %v680
        %v682 = vpop.xlane.xlu0 %681
        %v683 = vmul.f32 %v682, %v508
        %v684 = vsub.f32 %v675, %v683
        %v685 = vmul.f32 %v684, %v684
        %v686 = vmul.f32 %v685, %v496
        %v687 = vsel %vm679, %v686, 0.0
        %688 = vadd.xlane.f32.xlu0 %v687
        %v689 = vpop.xlane.xlu0 %688
        %v690 = vmul.f32 %v689, %v508
        %v691 = vadd.f32 %v690, 1e-05
        %v692 = vrsqrt.pop %v691
        %v693 = vmul.f32 %v692, %v691
        %v694 = vmul.f32 %v693, %v692
        %v695 = vmul.f32 0.5, %v694
        %v696 = vsub.f32 1.5, %v695
        %v697 = vmul.f32 %v692, %v696
        %vm698 = vweird.f32 %v691
        %vm699 = vweird.f32 %v692
        %vm700 = vmor %vm698, %vm699
        %v701 = vsel %vm700, %v692, %v697
        %v702 = vmul.f32 %v684, %v701
        %v705 = vunpack.c.l.s4 286326784
        %v706 = vunpack.c.0.s8 %v705
        %v707 = vperm.slane %v351, %v706
        %v709 = vmul.f32 %v702, %v707
        %v712 = vunpack.c.l.s4 286326784
        %v713 = vunpack.c.0.s8 %v712
        %v714 = vperm.slane %v352, %v713
        %v716 = vadd.f32 %v709, %v714
        %717 = vst [vmem:[#allocation4] sm:$0x2] %v716
        %v718 = vld [vmem:[#allocation2] sm:$0x1]
        %v719 = vpack.c.bf16 %v718, %v718
        %720 = vmatpush.bf16.msra.mxu0 %v347
        %721 = vmatpush.bf16.msra.mxu0 %v343
        %722 = vmatpush.bf16.msra.mxu0 %v339
        %723 = vmatpush.bf16.msra.mxu0 %v335
        %724 = vmatpush.bf16.msra.mxu0 %v331
        %725 = vmatpush.bf16.msra.mxu0 %v327
        %726 = vmatpush.bf16.msra.mxu0 %v323
        %727 = vmatpush.bf16.msra.mxu0 %v319
        %728 = vmatmul.bf16.gmra.mxu0 %v719
        %v729 = vpop.f32.mrf.mxu0
        %v730 = vadd.f32 0.0, %v729
        %v731 = vpop.f32.mrf.mxu0
        %732 = vdwg.mxu0
        %733 = vmatpush.bf16.msra.mxu0 %v348
        %734 = vmatpush.bf16.msra.mxu0 %v344
        %735 = vmatpush.bf16.msra.mxu0 %v340
        %736 = vmatpush.bf16.msra.mxu0 %v336
        %737 = vmatpush.bf16.msra.mxu0 %v332
        %738 = vmatpush.bf16.msra.mxu0 %v328
        %739 = vmatpush.bf16.msra.mxu0 %v324
        %740 = vmatpush.bf16.msra.mxu0 %v320
        %741 = vmatmul.bf16.gmra.mxu0 %v719
        %v742 = vpop.f32.mrf.mxu0
        %v743 = vadd.f32 0.0, %v742
        %v744 = vpop.f32.mrf.mxu0
        %745 = vdwg.mxu0
        %746 = vmatpush.bf16.msra.mxu0 %v349
        %747 = vmatpush.bf16.msra.mxu0 %v345
        %748 = vmatpush.bf16.msra.mxu0 %v341
        %749 = vmatpush.bf16.msra.mxu0 %v337
        %750 = vmatpush.bf16.msra.mxu0 %v333
        %751 = vmatpush.bf16.msra.mxu0 %v329
        %752 = vmatpush.bf16.msra.mxu0 %v325
        %753 = vmatpush.bf16.msra.mxu0 %v321
        %754 = vmatmul.bf16.gmra.mxu0 %v719
        %v755 = vpop.f32.mrf.mxu0
        %v756 = vadd.f32 0.0, %v755
        %v757 = vpop.f32.mrf.mxu0
        %758 = vdwg.mxu0
        %759 = vmatpush.bf16.msra.mxu0 %v350
        %760 = vmatpush.bf16.msra.mxu0 %v346
        %761 = vmatpush.bf16.msra.mxu0 %v342
        %762 = vmatpush.bf16.msra.mxu0 %v338
        %763 = vmatpush.bf16.msra.mxu0 %v334
        %764 = vmatpush.bf16.msra.mxu0 %v330
        %765 = vmatpush.bf16.msra.mxu0 %v326
        %766 = vmatpush.bf16.msra.mxu0 %v322
        %767 = vmatmul.bf16.gmra.mxu0 %v719
        %v768 = vpop.f32.mrf.mxu0
        %v769 = vadd.f32 0.0, %v768
        %v770 = vpop.f32.mrf.mxu0
        %771 = vdwg.mxu0
        %v776 = vrot.slane %v743, 4
        %v777 = vrot.slane %v769, 4
        %v778 = vsel %vm413, %v730, %v776
        %v779 = vsel %vm413, %v756, %v777
        %v780 = vrot.slane %v778, 6
        %v781 = vrot.slane %v779, 6
        %v784 = vadd.f32 %v253, %v780
        %v785 = vadd.f32 %v254, %v781
        %v786 = vxor.u32 %v784, 2147483648
        %v787 = vmul.f32 %v786, 1.442695
        %v788 = vpow.pop %v787
        %v789 = vadd.f32 %v788, 1.0
        %v790 = vrcp.pop %v789
        %v791 = vmul.f32 %v789, %v790
        %v792 = vsub.f32 1.0, %v791
        %v793 = vmul.f32 %v790, %v792
        %v794 = vadd.f32 %v790, %v793
        %vm795 = vweird.f32 %v789
        %vm796 = vweird.f32 %v790
        %vm797 = vmor %vm795, %vm796
        %v798 = vsel %vm797, %v790, %v794
        %v799 = vand.u32 2147483647, %v789
        %vm800 = vcmp.eq.f32.partialorder %v799, 8.507059e+37
        %v801 = vand.u32 %v789, 2147483648
        %v802 = vor.u32 1.1754944e-38, %v801
        %v803 = vsel %vm800, %v802, %v798
        %v804 = vmul.f32 1.0, %v803
        %v806 = vrot.slane %v784, 4
        %v808 = vxor.u32 %v806, 2147483648
        %v809 = vmul.f32 %v808, 1.442695
        %v810 = vpow.pop %v809
        %v811 = vadd.f32 %v810, 1.0
        %v812 = vrcp.pop %v811
        %v813 = vmul.f32 %v811, %v812
        %v814 = vsub.f32 1.0, %v813
        %v815 = vmul.f32 %v812, %v814
        %v816 = vadd.f32 %v812, %v815
        %vm817 = vweird.f32 %v811
        %vm818 = vweird.f32 %v812
        %vm819 = vmor %vm817, %vm818
        %v820 = vsel %vm819, %v812, %v816
        %v821 = vand.u32 2147483647, %v811
        %vm822 = vcmp.eq.f32.partialorder %v821, 8.507059e+37
        %v823 = vand.u32 %v811, 2147483648
        %v824 = vor.u32 1.1754944e-38, %v823
        %v825 = vsel %vm822, %v824, %v820
        %v826 = vmul.f32 1.0, %v825
        %v827 = vtanh.pop %v785
        %v829 = vrot.slane %v785, 4
        %v831 = vxor.u32 %v829, 2147483648
        %v832 = vmul.f32 %v831, 1.442695
        %v833 = vpow.pop %v832
        %v834 = vadd.f32 %v833, 1.0
        %v835 = vrcp.pop %v834
        %v836 = vmul.f32 %v834, %v835
        %v837 = vsub.f32 1.0, %v836
        %v838 = vmul.f32 %v835, %v837
        %v839 = vadd.f32 %v835, %v838
        %vm840 = vweird.f32 %v834
        %vm841 = vweird.f32 %v835
        %vm842 = vmor %vm840, %vm841
        %v843 = vsel %vm842, %v835, %v839
        %v844 = vand.u32 2147483647, %v834
        %vm845 = vcmp.eq.f32.partialorder %v844, 8.507059e+37
        %v846 = vand.u32 %v834, 2147483648
        %v847 = vor.u32 1.1754944e-38, %v846
        %v848 = vsel %vm845, %v847, %v843
        %v849 = vmul.f32 1.0, %v848
        %v850 = vld [vmem:[#allocation3] sm:$0x1]
        %v853 = vunpack.c.l.s4 286326784
        %v854 = vunpack.c.0.s8 %v853
        %v855 = vperm.slane %v850, %v854
        %v857 = vmul.f32 %v826, %v855
        %v858 = vmul.f32 %v804, %v827
        %v859 = vadd.f32 %v857, %v858
        %v860 = vtanh.pop %v859
        %v861 = vmul.f32 %v849, %v860
        %862 = vst [vmem:[#allocation3 - $0x2] sm:$0x4] %v859
        %863 = vst [vmem:[#allocation2 - $0x2] sm:$0x4] %v861
        %v864 = vmul.f32 %v861, %v496
        %vm865 = vcmask 1042434
        %v866 = vsel %vm865, %v864, 0.0
        %867 = vadd.xlane.f32.xlu0 %v866
        %v868 = vpop.xlane.xlu0 %867
        %v869 = vmul.f32 %v868, %v508
        %v870 = vsub.f32 %v861, %v869
        %v871 = vmul.f32 %v870, %v870
        %v872 = vmul.f32 %v871, %v496
        %v873 = vsel %vm865, %v872, 0.0
        %874 = vadd.xlane.f32.xlu0 %v873
        %v875 = vpop.xlane.xlu0 %874
        %v876 = vmul.f32 %v875, %v508
        %v877 = vadd.f32 %v876, 1e-05
        %v878 = vrsqrt.pop %v877
        %v879 = vmul.f32 %v878, %v877
        %v880 = vmul.f32 %v879, %v878
        %v881 = vmul.f32 0.5, %v880
        %v882 = vsub.f32 1.5, %v881
        %v883 = vmul.f32 %v878, %v882
        %vm884 = vweird.f32 %v877
        %vm885 = vweird.f32 %v878
        %vm886 = vmor %vm884, %vm885
        %v887 = vsel %vm886, %v878, %v883
        %v888 = vmul.f32 %v870, %v887
        %v889 = vmul.f32 %v888, %v707
        %v890 = vadd.f32 %v889, %v714
        %891 = vst [vmem:[#allocation4] sm:$0x4] %v890
        %v892 = vld [vmem:[#allocation2] sm:$0x1]
        %v893 = vpack.c.bf16 %v892, %v892
        %894 = vmatpush.bf16.msra.mxu0 %v347
        %895 = vmatpush.bf16.msra.mxu0 %v343
        %896 = vmatpush.bf16.msra.mxu0 %v339
        %897 = vmatpush.bf16.msra.mxu0 %v335
        %898 = vmatpush.bf16.msra.mxu0 %v331
        %899 = vmatpush.bf16.msra.mxu0 %v327
        %900 = vmatpush.bf16.msra.mxu0 %v323
        %901 = vmatpush.bf16.msra.mxu0 %v319
        %902 = vmatmul.bf16.gmra.mxu0 %v893
        %v903 = vpop.f32.mrf.mxu0
        %v904 = vadd.f32 0.0, %v903
        %v905 = vpop.f32.mrf.mxu0
        %906 = vdwg.mxu0
        %907 = vmatpush.bf16.msra.mxu0 %v348
        %908 = vmatpush.bf16.msra.mxu0 %v344
        %909 = vmatpush.bf16.msra.mxu0 %v340
        %910 = vmatpush.bf16.msra.mxu0 %v336
        %911 = vmatpush.bf16.msra.mxu0 %v332
        %912 = vmatpush.bf16.msra.mxu0 %v328
        %913 = vmatpush.bf16.msra.mxu0 %v324
        %914 = vmatpush.bf16.msra.mxu0 %v320
        %915 = vmatmul.bf16.gmra.mxu0 %v893
        %v916 = vpop.f32.mrf.mxu0
        %v917 = vadd.f32 0.0, %v916
        %v918 = vpop.f32.mrf.mxu0
        %919 = vdwg.mxu0
        %920 = vmatpush.bf16.msra.mxu0 %v349
        %921 = vmatpush.bf16.msra.mxu0 %v345
        %922 = vmatpush.bf16.msra.mxu0 %v341
        %923 = vmatpush.bf16.msra.mxu0 %v337
        %924 = vmatpush.bf16.msra.mxu0 %v333
        %925 = vmatpush.bf16.msra.mxu0 %v329
        %926 = vmatpush.bf16.msra.mxu0 %v325
        %927 = vmatpush.bf16.msra.mxu0 %v321
        %928 = vmatmul.bf16.gmra.mxu0 %v893
        %v929 = vpop.f32.mrf.mxu0
        %v930 = vadd.f32 0.0, %v929
        %v931 = vpop.f32.mrf.mxu0
        %932 = vdwg.mxu0
        %933 = vmatpush.bf16.msra.mxu0 %v350
        %934 = vmatpush.bf16.msra.mxu0 %v346
        %935 = vmatpush.bf16.msra.mxu0 %v342
        %936 = vmatpush.bf16.msra.mxu0 %v338
        %937 = vmatpush.bf16.msra.mxu0 %v334
        %938 = vmatpush.bf16.msra.mxu0 %v330
        %939 = vmatpush.bf16.msra.mxu0 %v326
        %940 = vmatpush.bf16.msra.mxu0 %v322
        %941 = vmatmul.bf16.gmra.mxu0 %v893
        %v942 = vpop.f32.mrf.mxu0
        %v943 = vadd.f32 0.0, %v942
        %v944 = vpop.f32.mrf.mxu0
        %945 = vdwg.mxu0
        %v950 = vrot.slane %v917, 4
        %v951 = vrot.slane %v943, 4
        %v952 = vsel %vm413, %v904, %v950
        %v953 = vsel %vm413, %v930, %v951
        %v954 = vrot.slane %v952, 5
        %v955 = vrot.slane %v953, 5
        %v958 = vadd.f32 %v253, %v954
        %v959 = vadd.f32 %v254, %v955
        %v960 = vxor.u32 %v958, 2147483648
        %v961 = vmul.f32 %v960, 1.442695
        %v962 = vpow.pop %v961
        %v963 = vadd.f32 %v962, 1.0
        %v964 = vrcp.pop %v963
        %v965 = vmul.f32 %v963, %v964
        %v966 = vsub.f32 1.0, %v965
        %v967 = vmul.f32 %v964, %v966
        %v968 = vadd.f32 %v964, %v967
        %vm969 = vweird.f32 %v963
        %vm970 = vweird.f32 %v964
        %vm971 = vmor %vm969, %vm970
        %v972 = vsel %vm971, %v964, %v968
        %v973 = vand.u32 2147483647, %v963
        %vm974 = vcmp.eq.f32.partialorder %v973, 8.507059e+37
        %v975 = vand.u32 %v963, 2147483648
        %v976 = vor.u32 1.1754944e-38, %v975
        %v977 = vsel %vm974, %v976, %v972
        %v978 = vmul.f32 1.0, %v977
        %v980 = vrot.slane %v958, 4
        %v982 = vxor.u32 %v980, 2147483648
        %v983 = vmul.f32 %v982, 1.442695
        %v984 = vpow.pop %v983
        %v985 = vadd.f32 %v984, 1.0
        %v986 = vrcp.pop %v985
        %v987 = vmul.f32 %v985, %v986
        %v988 = vsub.f32 1.0, %v987
        %v989 = vmul.f32 %v986, %v988
        %v990 = vadd.f32 %v986, %v989
        %vm991 = vweird.f32 %v985
        %vm992 = vweird.f32 %v986
        %vm993 = vmor %vm991, %vm992
        %v994 = vsel %vm993, %v986, %v990
        %v995 = vand.u32 2147483647, %v985
        %vm996 = vcmp.eq.f32.partialorder %v995, 8.507059e+37
        %v997 = vand.u32 %v985, 2147483648
        %v998 = vor.u32 1.1754944e-38, %v997
        %v999 = vsel %vm996, %v998, %v994
        %v1000 = vmul.f32 1.0, %v999
        %v1001 = vtanh.pop %v959
        %v1003 = vrot.slane %v959, 4
        %v1005 = vxor.u32 %v1003, 2147483648
        %v1006 = vmul.f32 %v1005, 1.442695
        %v1007 = vpow.pop %v1006
        %v1008 = vadd.f32 %v1007, 1.0
        %v1009 = vrcp.pop %v1008
        %v1010 = vmul.f32 %v1008, %v1009
        %v1011 = vsub.f32 1.0, %v1010
        %v1012 = vmul.f32 %v1009, %v1011
        %v1013 = vadd.f32 %v1009, %v1012
        %vm1014 = vweird.f32 %v1008
        %vm1015 = vweird.f32 %v1009
        %vm1016 = vmor %vm1014, %vm1015
        %v1017 = vsel %vm1016, %v1009, %v1013
        %v1018 = vand.u32 2147483647, %v1008
        %vm1019 = vcmp.eq.f32.partialorder %v1018, 8.507059e+37
        %v1020 = vand.u32 %v1008, 2147483648
        %v1021 = vor.u32 1.1754944e-38, %v1020
        %v1022 = vsel %vm1019, %v1021, %v1017
        %v1023 = vmul.f32 1.0, %v1022
        %v1024 = vld [vmem:[#allocation3] sm:$0x1]
        %v1027 = vunpack.c.l.s4 286326784
        %v1028 = vunpack.c.0.s8 %v1027
        %v1029 = vperm.slane %v1024, %v1028
        %v1031 = vmul.f32 %v1000, %v1029
        %v1032 = vmul.f32 %v978, %v1001
        %v1033 = vadd.f32 %v1031, %v1032
        %v1034 = vtanh.pop %v1033
        %v1035 = vmul.f32 %v1023, %v1034
        %1036 = vst [vmem:[#allocation3 - $0x3] sm:$0x8] %v1033
        %1037 = vst [vmem:[#allocation2 - $0x3] sm:$0x8] %v1035
        %v1038 = vmul.f32 %v1035, %v496
        %vm1039 = vcmask 1043459
        %v1040 = vsel %vm1039, %v1038, 0.0
        %1041 = vadd.xlane.f32.xlu0 %v1040
        %v1042 = vpop.xlane.xlu0 %1041
        %v1043 = vmul.f32 %v1042, %v508
        %v1044 = vsub.f32 %v1035, %v1043
        %v1045 = vmul.f32 %v1044, %v1044
        %v1046 = vmul.f32 %v1045, %v496
        %v1047 = vsel %vm1039, %v1046, 0.0
        %1048 = vadd.xlane.f32.xlu0 %v1047
        %v1049 = vpop.xlane.xlu0 %1048
        %v1050 = vmul.f32 %v1049, %v508
        %v1051 = vadd.f32 %v1050, 1e-05
        %v1052 = vrsqrt.pop %v1051
        %v1053 = vmul.f32 %v1052, %v1051
        %v1054 = vmul.f32 %v1053, %v1052
        %v1055 = vmul.f32 0.5, %v1054
        %v1056 = vsub.f32 1.5, %v1055
        %v1057 = vmul.f32 %v1052, %v1056
        %vm1058 = vweird.f32 %v1051
        %vm1059 = vweird.f32 %v1052
        %vm1060 = vmor %vm1058, %vm1059
        %v1061 = vsel %vm1060, %v1052, %v1057
        %v1062 = vmul.f32 %v1044, %v1061
        %v1063 = vmul.f32 %v1062, %v707
        %v1064 = vadd.f32 %v1063, %v714
        %1065 = vst [vmem:[#allocation4] sm:$0x8] %v1064
        %v1066 = vld [vmem:[#allocation4] sm:$0xf]
        %1067 = vst [vmem:[%s246] sm:$0xf] %v1066
        %p1068 = scmp.lt.s32.totalorder %s20, 1
        %s1069 = scalar_select %p1068, %s20, 1
        %p1070 = scmp.lt.s32.totalorder %s21, 0
        %s1071 = scalar_select %p1070, %s21, 0
        %s1072 = sadd.s32 %s1071, %s1069
        %s1073 = smul.addr %s1072, 4
        %s1074 = scalar_lea.vmem %s4, %s1073
        // Predicated region
        $region45: #{forward.10} parent=35 // pred_check
          %p1075 = pneg %p139
        $region46: #{forward.10} parent=35 // pred_check_branch
          %1077 = sbr.rel (%p1075) target = $region48
        $region47: #{forward.10} parent=35 // pred_region
          _
        $region48: #{forward.10} parent=35 // pred_fallthru
          _
      $region36: #{forward.10} parent=5 // pred_fallthru
        _
      %p1078 = scmp.le.s32.totalorder 2, %s11
      // Predicated region
      $region49: #{forward.10} parent=5 // pred_check
        %p1079 = pneg %p1078
      $region50: #{forward.10} parent=5 // pred_check_branch
        %1081 = sbr.rel (%p1079) target = $region52
      $region51: #{forward.10} parent=5 // pred_region
        %s1082 = ssub.s32 %s11, 2
        // Predicated region
        $region53: #{forward.10} parent=51 // pred_check
          %p1083 = pneg %p145
        $region54: #{forward.10} parent=51 // pred_check_branch
          %1085 = sbr.rel (%p1083) target = $region56
        $region55: #{forward.10} parent=51 // pred_region
          %p1086 = scmp.lt.s32.totalorder %s22, 1
          %s1087 = scalar_select %p1086, %s22, 1
          %p1088 = scmp.lt.s32.totalorder %s23, 0
          %s1089 = scalar_select %p1088, %s23, 0
          %s1090 = sadd.s32 %s1089, %s1087
          %s1091 = smul.addr %s1090, 4
          %s1092 = scalar_lea.vmem %s4, %s1091
        $region56: #{forward.10} parent=51 // pred_fallthru
          _
      $region52: #{forward.10} parent=5 // pred_fallthru
        _
    $region6: #{forward.10} parent=1 // loop_footer
      %s15 = sadd.s32 1, %s11
    $region7: #{forward.10} parent=1 // loop_footer_branch
      %10 = sbr.rel target = $region3
    $region8: #{forward.10} parent=1 // loop_exit
      _
    %1093 = vsyncpa [#allocation6], 1
    %s1094 = scalar_lea.sflag [#allocation6], 1
    %1095 = vsyncpa %s1094, 1

// kernel: forward.13
$region0: #{forward.13}
  #allocation0 [shape = 'u32[]', space=smem, size = 0x4, offset = 0x4, fixed_abs, tag = 'smem constant byte address 0x4 - core index']
  #allocation1 [shape = 'u32[72,128]{1,0:T(1,128)}', space=vmem, size = 0x9000, scoped, tag = 'internal scratch']
  #allocation2 [shape = 'f32[8,128]{1,0:T(8,128)}', space=vmem, size = 0x1000, scoped, tag = 'scratch operand']
  %s0 = inlined_call_operand.vmem [shape: f32[8,128], index: 0, kind: input, shape index: {}]
  %s1 = inlined_call_operand.hbm [shape: f32[128,128], index: 1, kind: input, shape index: {}]
  %s2 = inlined_call_operand.vmem [shape: f32[1,128], index: 2, kind: input, shape index: {}]
  %s3 = inlined_call_operand.hbm [shape: f32[8,128], index: 3, kind: output, shape index: {}]
  %s4 = sld [smem:[#allocation0]]
  $region34: #{forward.13} parent=0
    _
  %s6 = ssub.s32 1, %s4
  %s7 = scalar_select 0, %s6, %s4
  $region1: #{forward.13} parent=0
    #allocation3 [shape = 'u8[65536]{0}', space=vmem, size = 0x10000, scoped, tag = 'input window, operand 1, single buffered']
    #allocation4 [shape = 's32[1]{0}', space=sflag, size = 0x4, scoped, tag = 'scoped memory for forward.13']
    #allocation5 [shape = 's32[1]{0}', space=sflag, size = 0x4, scoped, tag = 'scoped memory for forward.13']
    #allocation6 [shape = 'u8[4096]{0}', space=vmem, size = 0x1000, scoped, tag = 'output window, operand 0, single buffered']
    %8 = vsyncpa [#allocation4], 0
    %9 = vsyncpa [#allocation5], 0
    // Predicated region
    $region2: #{forward.13} parent=1 // pred_check
      _
    $region3: #{forward.13} parent=1 // pred_check_branch
      %11 = sbr.rel (0) target = $region5
    $region4: #{forward.13} parent=1 // pred_region
      _
    $region5: #{forward.13} parent=1 // pred_fallthru
      _
    // Predicated region
    $region6: #{forward.13} parent=1 // pred_check
      _
    $region7: #{forward.13} parent=1 // pred_check_branch
      %13 = sbr.rel (0) target = $region9
    $region8: #{forward.13} parent=1 // pred_region
      %15 = vsyncadd [#allocation4], 0
      %s16 = sshll.u32 %s1, 4
      %s17 = int_to_ptr.hbm [resolvable:$true] %s16
      %s18 = sshll.u32 [#allocation3], 4
      %s19 = int_to_ptr.vmem [resolvable:$true] %s18
      %24 = dma.hbm_to_vmem [thread:$0]  %s17, 2048, %s19, [#allocation4], 128, 128, 8
    $region9: #{forward.13} parent=1 // pred_fallthru
      _
    // Predicated region
    $region10: #{forward.13} parent=1 // pred_check
      _
    $region11: #{forward.13} parent=1 // pred_check_branch
      %26 = sbr.rel (0) target = $region13
    $region12: #{forward.13} parent=1 // pred_region
      _
    $region13: #{forward.13} parent=1 // pred_fallthru
      _
    // Predicated region
    $region14: #{forward.13} parent=1 // pred_check
      _
    $region15: #{forward.13} parent=1 // pred_check_branch
      %28 = sbr.rel (0) target = $region17
    $region16: #{forward.13} parent=1 // pred_region
      %30 = dma.done [#allocation4], 2048
    $region17: #{forward.13} parent=1 // pred_fallthru
      _
    %p31 = scmp.eq.s32.totalorder 0, 0
    // Predicated region
    $region18: #{forward.13} parent=1 // pred_check
      %p32 = pneg %p31
    $region19: #{forward.13} parent=1 // pred_check_branch
      %34 = sbr.rel (%p32) target = $region21
    $region20: #{forward.13} parent=1 // pred_region
      %35 = vst [vmem:[#allocation2] sm:$0xff] 0.0
    $region21: #{forward.13} parent=1 // pred_fallthru
      _
    %v36 = vld [vmem:[#allocation2] sm:$0xff]
    %v37 = vld [vmem:[%s0] sm:$0xff]
    %v38 = vpack.c.bf16 %v37, %v37
    %v39 = vld [vmem:[#allocation3] sm:$0xff]
    %v40 = vld [vmem:[#allocation3 + $0x8] sm:$0xff]
    %v41 = vld [vmem:[#allocation3 + $0x10] sm:$0xff]
    %v42 = vld [vmem:[#allocation3 + $0x18] sm:$0xff]
    %v43 = vld [vmem:[#allocation3 + $0x20] sm:$0xff]
    %v44 = vld [vmem:[#allocation3 + $0x28] sm:$0xff]
    %v45 = vld [vmem:[#allocation3 + $0x30] sm:$0xff]
    %v46 = vld [vmem:[#allocation3 + $0x38] sm:$0xff]
    %v47 = vld [vmem:[#allocation3 + $0x40] sm:$0xff]
    %v48 = vld [vmem:[#allocation3 + $0x48] sm:$0xff]
    %v49 = vld [vmem:[#allocation3 + $0x50] sm:$0xff]
    %v50 = vld [vmem:[#allocation3 + $0x58] sm:$0xff]
    %v51 = vld [vmem:[#allocation3 + $0x60] sm:$0xff]
    %v52 = vld [vmem:[#allocation3 + $0x68] sm:$0xff]
    %v53 = vld [vmem:[#allocation3 + $0x70] sm:$0xff]
    %v54 = vld [vmem:[#allocation3 + $0x78] sm:$0xff]
    %v55 = vpack.c.bf16 %v40, %v39
    %v56 = vpack.c.bf16 %v42, %v41
    %v57 = vpack.c.bf16 %v44, %v43
    %v58 = vpack.c.bf16 %v46, %v45
    %v59 = vpack.c.bf16 %v48, %v47
    %v60 = vpack.c.bf16 %v50, %v49
    %v61 = vpack.c.bf16 %v52, %v51
    %v62 = vpack.c.bf16 %v54, %v53
    %63 = vmatpush.bf16.msra.mxu0 %v62
    %64 = vmatpush.bf16.msra.mxu0 %v61
    %65 = vmatpush.bf16.msra.mxu0 %v60
    %66 = vmatpush.bf16.msra.mxu0 %v59
    %67 = vmatpush.bf16.msra.mxu0 %v58
    %68 = vmatpush.bf16.msra.mxu0 %v57
    %69 = vmatpush.bf16.msra.mxu0 %v56
    %70 = vmatpush.bf16.msra.mxu0 %v55
    %71 = vmatmul.bf16.gmra.mxu0 %v38
    %v72 = vpop.f32.mrf.mxu0
    %v73 = vadd.f32 0.0, %v72
    %v74 = vpop.f32.mrf.mxu0
    %75 = vdwg.mxu0
    %v76 = vadd.f32 %v36, %v73
    %77 = vst [vmem:[#allocation2] sm:$0xff] %v76
    // Predicated region
    $region22: #{forward.13} parent=1 // pred_check
      %p78 = pneg %p31
    $region23: #{forward.13} parent=1 // pred_check_branch
      %80 = sbr.rel (%p78) target = $region25
    $region24: #{forward.13} parent=1 // pred_region
      %v81 = vld [vmem:[#allocation2] sm:$0xff]
      %v82 = vld [vmem:[%s2] sm:$0x1]
      %v84 = vperm.slane %v82, 0
      %v86 = vadd.f32 %v81, %v84
      %87 = vst [vmem:[#allocation6] sm:$0xff] %v86
    $region25: #{forward.13} parent=1 // pred_fallthru
      _
    // Predicated region
    $region26: #{forward.13} parent=1 // pred_check
      _
    $region27: #{forward.13} parent=1 // pred_check_branch
      %89 = sbr.rel (0) target = $region29
    $region28: #{forward.13} parent=1 // pred_region
      %91 = vsyncadd [#allocation5], 0
      %s93 = sshll.u32 [#allocation6], 4
      %s94 = int_to_ptr.vmem [resolvable:$true] %s93
      %s95 = sshll.u32 %s3, 4
      %s96 = int_to_ptr.hbm [resolvable:$true] %s95
      %98 = dma.vmem_to_hbm [thread:$0]  %s94, 128, %s96, [#allocation5]
    $region29: #{forward.13} parent=1 // pred_fallthru
      _
    // Predicated region
    $region30: #{forward.13} parent=1 // pred_check
      _
    $region31: #{forward.13} parent=1 // pred_check_branch
      %100 = sbr.rel (0) target = $region33
    $region32: #{forward.13} parent=1 // pred_region
      %102 = dma.done [#allocation5], 128
    $region33: #{forward.13} parent=1 // pred_fallthru
      _
    %103 = vsyncpa [#allocation4], 1
    %104 = vsyncpa [#allocation5], 1

// kernel: forward.11
$region0: #{forward.11}
  #allocation0 [shape = 'u32[]', space=smem, size = 0x4, offset = 0x4, fixed_abs, tag = 'smem constant byte address 0x4 - core index']
  #allocation1 [shape = 'u32[72,128]{1,0:T(1,128)}', space=vmem, size = 0x9000, scoped, tag = 'internal scratch']
  #allocation2 [shape = 'f32[8,128]{1,0:T(8,128)}', space=vmem, size = 0x1000, scoped, tag = 'scratch operand']
  %s0 = inlined_call_operand.vmem [shape: f32[2,4,128], index: 0, kind: input, shape index: {}]
  %s1 = inlined_call_operand.vmem [shape: f32[128,128], index: 1, kind: input, shape index: {}]
  %s2 = inlined_call_operand.hbm [shape: f32[1,128], index: 2, kind: input, shape index: {}]
  %s3 = inlined_call_operand.hbm [shape: f32[128,128], index: 3, kind: input, shape index: {}]
  %s4 = inlined_call_operand.vmem [shape: f32[5,128], index: 4, kind: input, shape index: {}]
  %s5 = inlined_call_operand.vmem [shape: f32[2,4,128], index: 5, kind: output, shape index: {}]
  %s6 = sld [smem:[#allocation0]]
  $region65: #{forward.11} parent=0
    _
  %s8 = ssub.s32 1, %s6
  %s9 = scalar_select 0, %s8, %s6
  $region1: #{forward.11} parent=0
    #allocation3 [shape = 'u8[512]{0}', space=vmem, size = 0x400, scoped, tag = 'input window, operand 2, single buffered']
    #allocation4 [shape = 's32[2]{0}', space=sflag, size = 0x8, scoped, tag = 'scoped memory for forward.11']
    #allocation5 [shape = 'u8[65536]{0}', space=vmem, size = 0x10000, scoped, tag = 'input window, operand 3, single buffered']
    #allocation6 [shape = 's32[1]{0}', space=sflag, size = 0x4, scoped, tag = 'scoped memory for forward.11']
    %10 = vsyncpa [#allocation4], 0
    %11 = vsyncpa [#allocation6], 0
    loop: start=0, step=1, limit=4
    $region2: #{forward.11} parent=1 // loop_pre_header
      _
    $region3: #{forward.11} parent=1 // loop_header
      %s13 = sphi 0, %s17
      %p14 = scmp.ge.s32.totalorder %s13, 4
      %s20 = sphi 0, %s32
      %s21 = sphi 0, %s28
      %s22 = sphi 0, %s20
      %s23 = sphi 0, %s21
      %s24 = sphi 0, %s22
      %s25 = sphi 0, %s23
      %s37 = sphi 0, %s39
      %s40 = sphi 0, %s37
      %s41 = sphi 0, %s40
      %s57 = sphi 0, %s41
      %s61 = sphi 0, %s61
      %s63 = sphi 0, %s61
      %s64 = sphi 0, %s63
      %s78 = sphi 0, %s64
      %s82 = sphi 0, %s82
      %s84 = sphi 0, %s82
      %s85 = sphi 0, %s84
      %s99 = sphi 0, %s85
      %s103 = sphi 0, %s103
      %s105 = sphi 0, %s103
      %s106 = sphi 0, %s105
      %s120 = sphi 0, %s106
      %s124 = sphi 0, %s124
      %s126 = sphi 0, %s124
      %s127 = sphi 0, %s126
      %s141 = sphi 0, %s127
      %s149 = sphi 0, %s151
      %s152 = sphi 0, %s149
      %s153 = sphi 0, %s152
      %s169 = sphi 0, %s153
    $region4: #{forward.11} parent=1 // loop_header_branch
      %16 = sbr.rel (%p14) target = $region8
    $region5: #{forward.11} parent=1 // loop_body
      %s18 = ssub.s32 %s13, 1
      %s19 = ssub.s32 %s13, 2
      %s26 = sadd.s32 1, %s21
      %p27 = scmp.ge.s32.totalorder %s26, 1
      %s28 = scalar_select %p27, 0, %s26
      %s29 = sadd.s32 1, %s20
      %s30 = scalar_select %p27, %s29, %s20
      %p31 = scmp.ge.s32.totalorder %s30, 2
      %s32 = scalar_select %p31, 0, %s30
      %s33 = ssub.s32 %s20, %s32
      %s34 = ssub.s32 %s21, %s28
      %s35 = sor.u32 %s33, %s34
      %p36 = scmp.eq.s32.totalorder %s35, 0
      %s38 = sadd.s32 %s37, 1
      %s39 = scalar_select %p36, %s37, %s38
      %p42 = pneg %p36
      %p43 = scmp.eq.s32.totalorder %s13, 1
      %p44 = por %p42, %p43
      %p45 = scmp.ne.s32.totalorder %s37, %s40
      %p46 = scmp.eq.s32.totalorder %s13, 0
      %p47 = por %p45, %p46
      %p48 = scmp.ne.s32.totalorder %s37, %s40
      %p49 = scmp.eq.s32.totalorder %s18, 1
      %p50 = por %p48, %p49
      %p51 = scmp.ne.s32.totalorder %s40, %s41
      %p52 = scmp.eq.s32.totalorder %s18, 0
      %p53 = por %p51, %p52
      %p54 = scmp.ne.s32.totalorder %s40, %s41
      %p55 = scmp.eq.s32.totalorder %s19, 1
      %p56 = por %p54, %p55
      %p58 = scmp.ne.s32.totalorder %s41, %s57
      %p59 = scmp.eq.s32.totalorder %s19, 0
      %p60 = por %p58, %p59
      %s62 = sadd.s32 %s61, 1
      %p65 = scmp.eq.s32.totalorder %s13, 1
      %p66 = scmp.ne.s32.totalorder %s61, %s63
      %p67 = scmp.eq.s32.totalorder %s13, 0
      %p68 = por %p66, %p67
      %p69 = scmp.ne.s32.totalorder %s61, %s63
      %p70 = scmp.eq.s32.totalorder %s18, 1
      %p71 = por %p69, %p70
      %p72 = scmp.ne.s32.totalorder %s63, %s64
      %p73 = scmp.eq.s32.totalorder %s18, 0
      %p74 = por %p72, %p73
      %p75 = scmp.ne.s32.totalorder %s63, %s64
      %p76 = scmp.eq.s32.totalorder %s19, 1
      %p77 = por %p75, %p76
      %p79 = scmp.ne.s32.totalorder %s64, %s78
      %p80 = scmp.eq.s32.totalorder %s19, 0
      %p81 = por %p79, %p80
      %s83 = sadd.s32 %s82, 1
      %p86 = scmp.eq.s32.totalorder %s13, 1
      %p87 = scmp.ne.s32.totalorder %s82, %s84
      %p88 = scmp.eq.s32.totalorder %s13, 0
      %p89 = por %p87, %p88
      %p90 = scmp.ne.s32.totalorder %s82, %s84
      %p91 = scmp.eq.s32.totalorder %s18, 1
      %p92 = por %p90, %p91
      %p93 = scmp.ne.s32.totalorder %s84, %s85
      %p94 = scmp.eq.s32.totalorder %s18, 0
      %p95 = por %p93, %p94
      %p96 = scmp.ne.s32.totalorder %s84, %s85
      %p97 = scmp.eq.s32.totalorder %s19, 1
      %p98 = por %p96, %p97
      %p100 = scmp.ne.s32.totalorder %s85, %s99
      %p101 = scmp.eq.s32.totalorder %s19, 0
      %p102 = por %p100, %p101
      %s104 = sadd.s32 %s103, 1
      %p107 = scmp.eq.s32.totalorder %s13, 1
      %p108 = scmp.ne.s32.totalorder %s103, %s105
      %p109 = scmp.eq.s32.totalorder %s13, 0
      %p110 = por %p108, %p109
      %p111 = scmp.ne.s32.totalorder %s103, %s105
      %p112 = scmp.eq.s32.totalorder %s18, 1
      %p113 = por %p111, %p112
      %p114 = scmp.ne.s32.totalorder %s105, %s106
      %p115 = scmp.eq.s32.totalorder %s18, 0
      %p116 = por %p114, %p115
      %p117 = scmp.ne.s32.totalorder %s105, %s106
      %p118 = scmp.eq.s32.totalorder %s19, 1
      %p119 = por %p117, %p118
      %p121 = scmp.ne.s32.totalorder %s106, %s120
      %p122 = scmp.eq.s32.totalorder %s19, 0
      %p123 = por %p121, %p122
      %s125 = sadd.s32 %s124, 1
      %p128 = scmp.eq.s32.totalorder %s13, 1
      %p129 = scmp.ne.s32.totalorder %s124, %s126
      %p130 = scmp.eq.s32.totalorder %s13, 0
      %p131 = por %p129, %p130
      %p132 = scmp.ne.s32.totalorder %s124, %s126
      %p133 = scmp.eq.s32.totalorder %s18, 1
      %p134 = por %p132, %p133
      %p135 = scmp.ne.s32.totalorder %s126, %s127
      %p136 = scmp.eq.s32.totalorder %s18, 0
      %p137 = por %p135, %p136
      %p138 = scmp.ne.s32.totalorder %s126, %s127
      %p139 = scmp.eq.s32.totalorder %s19, 1
      %p140 = por %p138, %p139
      %p142 = scmp.ne.s32.totalorder %s127, %s141
      %p143 = scmp.eq.s32.totalorder %s19, 0
      %p144 = por %p142, %p143
      %s145 = ssub.s32 %s20, %s32
      %s146 = ssub.s32 %s21, %s28
      %s147 = sor.u32 %s145, %s146
      %p148 = scmp.eq.s32.totalorder %s147, 0
      %s150 = sadd.s32 %s149, 1
      %s151 = scalar_select %p148, %s149, %s150
      %p154 = pneg %p148
      %p155 = scmp.eq.s32.totalorder %s13, 1
      %p156 = por %p154, %p155
      %p157 = scmp.ne.s32.totalorder %s149, %s152
      %p158 = scmp.eq.s32.totalorder %s13, 0
      %p159 = por %p157, %p158
      %p160 = scmp.ne.s32.totalorder %s149, %s152
      %p161 = scmp.eq.s32.totalorder %s18, 1
      %p162 = por %p160, %p161
      %p163 = scmp.ne.s32.totalorder %s152, %s153
      %p164 = scmp.eq.s32.totalorder %s18, 0
      %p165 = por %p163, %p164
      %p166 = scmp.ne.s32.totalorder %s152, %s153
      %p167 = scmp.eq.s32.totalorder %s19, 1
      %p168 = por %p166, %p167
      %p170 = scmp.ne.s32.totalorder %s153, %s169
      %p171 = scmp.eq.s32.totalorder %s19, 0
      %p172 = por %p170, %p171
      %p173 = scmp.le.s32.totalorder 1, %s13
      %p174 = scmp.lt.s32.totalorder %s13, 3
      %p175 = pnand %p173, %p174
      %p176 = pneg %p175
      // Predicated region
      $region9: #{forward.11} parent=5 // pred_check
        _
      $region10: #{forward.11} parent=5 // pred_check_branch
        %178 = sbr.rel (%p175) target = $region12
      $region11: #{forward.11} parent=5 // pred_region
        %s179 = ssub.s32 %s13, 1
        // Predicated region
        $region13: #{forward.11} parent=11 // pred_check
          %p180 = pneg %p74
        $region14: #{forward.11} parent=11 // pred_check_branch
          %182 = sbr.rel (%p180) target = $region16
        $region15: #{forward.11} parent=11 // pred_region
          _
        $region16: #{forward.11} parent=11 // pred_fallthru
          _
        // Predicated region
        $region17: #{forward.11} parent=11 // pred_check
          %p183 = pneg %p95
        $region18: #{forward.11} parent=11 // pred_check_branch
          %185 = sbr.rel (%p183) target = $region20
        $region19: #{forward.11} parent=11 // pred_region
          %187 = vsyncadd [#allocation4], 0
          %s189 = sshll.u32 %s2, 4
          %s190 = int_to_ptr.hbm [resolvable:$true] %s189
          %s191 = sshll.u32 [#allocation3], 4
          %s192 = int_to_ptr.vmem [resolvable:$true] %s191
          %194 = dma.hbm_to_vmem [thread:$0]  %s190, 16, %s192, [#allocation4]
        $region20: #{forward.11} parent=11 // pred_fallthru
          _
        // Predicated region
        $region21: #{forward.11} parent=11 // pred_check
          %p195 = pneg %p116
        $region22: #{forward.11} parent=11 // pred_check_branch
          %197 = sbr.rel (%p195) target = $region24
        $region23: #{forward.11} parent=11 // pred_region
          %199 = vsyncadd [#allocation6], 0
          %s200 = sshll.u32 %s3, 4
          %s201 = int_to_ptr.hbm [resolvable:$true] %s200
          %s202 = sshll.u32 [#allocation5], 4
          %s203 = int_to_ptr.vmem [resolvable:$true] %s202
          %208 = dma.hbm_to_vmem [thread:$0]  %s201, 2048, %s203, [#allocation6], 128, 128, 8
        $region24: #{forward.11} parent=11 // pred_fallthru
          _
        // Predicated region
        $region25: #{forward.11} parent=11 // pred_check
          %p209 = pneg %p137
        $region26: #{forward.11} parent=11 // pred_check_branch
          %211 = sbr.rel (%p209) target = $region28
        $region27: #{forward.11} parent=11 // pred_region
          _
        $region28: #{forward.11} parent=11 // pred_fallthru
          _
      $region12: #{forward.11} parent=5 // pred_fallthru
        _
      %p212 = scmp.lt.s32.totalorder %s13, 2
      // Predicated region
      $region29: #{forward.11} parent=5 // pred_check
        %p213 = pneg %p212
      $region30: #{forward.11} parent=5 // pred_check_branch
        %215 = sbr.rel (%p213) target = $region32
      $region31: #{forward.11} parent=5 // pred_region
        // Predicated region
        $region33: #{forward.11} parent=31 // pred_check
          %p216 = pneg %p47
        $region34: #{forward.11} parent=31 // pred_check_branch
          %218 = sbr.rel (%p216) target = $region36
        $region35: #{forward.11} parent=31 // pred_region
          %p219 = scmp.lt.s32.totalorder %s20, 1
          %s220 = scalar_select %p219, %s20, 1
          %p221 = scmp.lt.s32.totalorder %s21, 0
          %s222 = scalar_select %p221, %s21, 0
          %s223 = sadd.s32 %s222, %s220
          %s224 = smul.addr %s223, 4
          %s225 = scalar_lea.vmem %s0, %s224
        $region36: #{forward.11} parent=31 // pred_fallthru
          _
      $region32: #{forward.11} parent=5 // pred_fallthru
        _
      %p226 = scmp.le.s32.totalorder 1, %s13
      %p227 = scmp.lt.s32.totalorder %s13, 3
      %p228 = pnand %p226, %p227
      %p229 = pneg %p228
      // Predicated region
      $region37: #{forward.11} parent=5 // pred_check
        _
      $region38: #{forward.11} parent=5 // pred_check_branch
        %231 = sbr.rel (%p228) target = $region40
      $region39: #{forward.11} parent=5 // pred_region
        %s232 = ssub.s32 %s13, 1
        // Predicated region
        $region41: #{forward.11} parent=39 // pred_check
          %p233 = pneg %p95
        $region42: #{forward.11} parent=39 // pred_check_branch
          %235 = sbr.rel (%p233) target = $region44
        $region43: #{forward.11} parent=39 // pred_region
          %237 = dma.done [#allocation4], 16
        $region44: #{forward.11} parent=39 // pred_fallthru
          _
        // Predicated region
        $region45: #{forward.11} parent=39 // pred_check
          %p238 = pneg %p116
        $region46: #{forward.11} parent=39 // pred_check_branch
          %240 = sbr.rel (%p238) target = $region48
        $region47: #{forward.11} parent=39 // pred_region
          %242 = dma.done [#allocation6], 2048
        $region48: #{forward.11} parent=39 // pred_fallthru
          _
        %p243 = scmp.lt.s32.totalorder %s22, 1
        %s244 = scalar_select %p243, %s22, 1
        %p245 = scmp.lt.s32.totalorder %s23, 0
        %s246 = scalar_select %p245, %s23, 0
        %s247 = sadd.s32 %s246, %s244
        %s248 = smul.addr %s247, 4
        %s249 = scalar_lea.vmem %s0, %s248
        %p250 = pneg %p53
        %p251 = pneg %p50
        %p252 = pneg %p74
        %p253 = pneg %p71
        %p254 = pneg %p95
        %p255 = pneg %p92
        %p256 = pneg %p116
        %p257 = pneg %p113
        %p258 = pneg %p137
        %p259 = pneg %p134
        %p260 = pneg %p165
        %p261 = pneg %p162
        %p262 = scmp.lt.s32.totalorder %s22, 1
        %s263 = scalar_select %p262, %s22, 1
        %p264 = scmp.lt.s32.totalorder %s23, 0
        %s265 = scalar_select %p264, %s23, 0
        %s266 = sadd.s32 %s265, %s263
        %s267 = smul.addr %s266, 4
        %s268 = scalar_lea.vmem %s5, %s267
        %p269 = scmp.lt.s32.totalorder %s22, 1
        %s270 = scalar_select %p269, %s22, 1
        %p271 = scmp.lt.s32.totalorder %s23, 0
        %s272 = scalar_select %p271, %s23, 0
        %s273 = sadd.s32 %s272, %s270
        %s274 = smul.addr %s273, 4
        %s275 = scalar_lea.vmem %s0, %s274
        %p276 = scmp.lt.s32.totalorder %s22, 1
        %s277 = scalar_select %p276, %s22, 1
        %p278 = scmp.lt.s32.totalorder %s23, 0
        %s279 = scalar_select %p278, %s23, 0
        %s280 = sadd.s32 %s279, %s277
        %s281 = smul.addr %s280, 4
        %s282 = scalar_lea.vmem %s5, %s281
        %v283 = vld [vmem:[%s275] sm:$0xf]
        %v284 = vpack.c.bf16 %v283, %v283
        %v285 = vld [vmem:[%s1] sm:$0xff]
        %v286 = vld [vmem:[%s1 + $0x8] sm:$0xff]
        %v287 = vld [vmem:[%s1 + $0x10] sm:$0xff]
        %v288 = vld [vmem:[%s1 + $0x18] sm:$0xff]
        %v289 = vld [vmem:[%s1 + $0x20] sm:$0xff]
        %v290 = vld [vmem:[%s1 + $0x28] sm:$0xff]
        %v291 = vld [vmem:[%s1 + $0x30] sm:$0xff]
        %v292 = vld [vmem:[%s1 + $0x38] sm:$0xff]
        %v293 = vld [vmem:[%s1 + $0x40] sm:$0xff]
        %v294 = vld [vmem:[%s1 + $0x48] sm:$0xff]
        %v295 = vld [vmem:[%s1 + $0x50] sm:$0xff]
        %v296 = vld [vmem:[%s1 + $0x58] sm:$0xff]
        %v297 = vld [vmem:[%s1 + $0x60] sm:$0xff]
        %v298 = vld [vmem:[%s1 + $0x68] sm:$0xff]
        %v299 = vld [vmem:[%s1 + $0x70] sm:$0xff]
        %v300 = vld [vmem:[%s1 + $0x78] sm:$0xff]
        %v301 = vpack.c.bf16 %v286, %v285
        %v302 = vpack.c.bf16 %v288, %v287
        %v303 = vpack.c.bf16 %v290, %v289
        %v304 = vpack.c.bf16 %v292, %v291
        %v305 = vpack.c.bf16 %v294, %v293
        %v306 = vpack.c.bf16 %v296, %v295
        %v307 = vpack.c.bf16 %v298, %v297
        %v308 = vpack.c.bf16 %v300, %v299
        %v309 = vld [vmem:[#allocation3] sm:$0x1]
        %v311 = vperm.slane %v309, 0
        %313 = vmatpush.bf16.msra.mxu0 %v308
        %314 = vmatpush.bf16.msra.mxu0 %v307
        %315 = vmatpush.bf16.msra.mxu0 %v306
        %316 = vmatpush.bf16.msra.mxu0 %v305
        %317 = vmatpush.bf16.msra.mxu0 %v304
        %318 = vmatpush.bf16.msra.mxu0 %v303
        %319 = vmatpush.bf16.msra.mxu0 %v302
        %320 = vmatpush.bf16.msra.mxu0 %v301
        %321 = vmatmul.bf16.gmra.mxu0 %v284
        %v322 = vpop.f32.mrf.mxu0
        %v323 = vadd.f32 %v311, %v322
        %v324 = vpop.f32.mrf.mxu0
        %325 = vdwg.mxu0
        %v326 = vmax.f32 %v323, 0.0
        %v327 = vpack.c.bf16 %v326, %v326
        %v328 = vld [vmem:[#allocation5] sm:$0xff]
        %v329 = vld [vmem:[#allocation5 + $0x8] sm:$0xff]
        %v330 = vld [vmem:[#allocation5 + $0x10] sm:$0xff]
        %v331 = vld [vmem:[#allocation5 + $0x18] sm:$0xff]
        %v332 = vld [vmem:[#allocation5 + $0x20] sm:$0xff]
        %v333 = vld [vmem:[#allocation5 + $0x28] sm:$0xff]
        %v334 = vld [vmem:[#allocation5 + $0x30] sm:$0xff]
        %v335 = vld [vmem:[#allocation5 + $0x38] sm:$0xff]
        %v336 = vld [vmem:[#allocation5 + $0x40] sm:$0xff]
        %v337 = vld [vmem:[#allocation5 + $0x48] sm:$0xff]
        %v338 = vld [vmem:[#allocation5 + $0x50] sm:$0xff]
        %v339 = vld [vmem:[#allocation5 + $0x58] sm:$0xff]
        %v340 = vld [vmem:[#allocation5 + $0x60] sm:$0xff]
        %v341 = vld [vmem:[#allocation5 + $0x68] sm:$0xff]
        %v342 = vld [vmem:[#allocation5 + $0x70] sm:$0xff]
        %v343 = vld [vmem:[#allocation5 + $0x78] sm:$0xff]
        %v344 = vpack.c.bf16 %v329, %v328
        %v345 = vpack.c.bf16 %v331, %v330
        %v346 = vpack.c.bf16 %v333, %v332
        %v347 = vpack.c.bf16 %v335, %v334
        %v348 = vpack.c.bf16 %v337, %v336
        %v349 = vpack.c.bf16 %v339, %v338
        %v350 = vpack.c.bf16 %v341, %v340
        %v351 = vpack.c.bf16 %v343, %v342
        %352 = vmatpush.bf16.msra.mxu0 %v351
        %353 = vmatpush.bf16.msra.mxu0 %v350
        %354 = vmatpush.bf16.msra.mxu0 %v349
        %355 = vmatpush.bf16.msra.mxu0 %v348
        %356 = vmatpush.bf16.msra.mxu0 %v347
        %357 = vmatpush.bf16.msra.mxu0 %v346
        %358 = vmatpush.bf16.msra.mxu0 %v345
        %359 = vmatpush.bf16.msra.mxu0 %v344
        %360 = vmatmul.bf16.gmra.mxu0 %v327
        %v361 = vpop.f32.mrf.mxu0
        %v362 = vadd.f32 0.0, %v361
        %v363 = vpop.f32.mrf.mxu0
        %364 = vdwg.mxu0
        %p365 = scmp.eq.s32.totalorder %s23, 0
        // Predicated region
        $region49: #{forward.11} parent=39 // pred_check
          %p366 = pneg %p365
        $region50: #{forward.11} parent=39 // pred_check_branch
          %368 = sbr.rel (%p366) target = $region52
        $region51: #{forward.11} parent=39 // pred_region
          %369 = vst [vmem:[#allocation2] sm:$0xf] 0.0
        $region52: #{forward.11} parent=39 // pred_fallthru
          _
        %370 = vst [vmem:[#allocation2 + $0x4] sm:$0xf] %v362
        %v371 = vld [vmem:[#allocation2] sm:$0xff]
        %v372 = vld [vmem:[%s4] sm:$0x1f]
        %v373 = vperm.slane %v372, 0
        %v374 = vmul.f32 %v373, %v371
        %v376 = vrot.slane %v374, 4
        %v378 = vadd.f32 %v362, %v376
        %v379 = vperm.slane %v372, 1
        %v380 = vmul.f32 %v379, %v371
        %v382 = vrot.slane %v380, 3
        %v384 = vadd.f32 %v378, %v382
        %v385 = vperm.slane %v372, 2
        %v386 = vmul.f32 %v385, %v371
        %v388 = vrot.slane %v386, 2
        %v390 = vadd.f32 %v384, %v388
        %v391 = vperm.slane %v372, 3
        %v392 = vmul.f32 %v391, %v371
        %v394 = vrot.slane %v392, 1
        %v396 = vadd.f32 %v390, %v394
        %v397 = vperm.slane %v372, 4
        %v398 = vmul.f32 %v397, %v371
        %v399 = vadd.f32 %v396, %v398
        %400 = vst [vmem:[%s282] sm:$0xf] %v399
        %401 = vst [vmem:[#allocation2 - $0x4] sm:$0xf0] %v371
        %p402 = scmp.lt.s32.totalorder %s22, 1
        %s403 = scalar_select %p402, %s22, 1
        %p404 = scmp.lt.s32.totalorder %s23, 0
        %s405 = scalar_select %p404, %s23, 0
        %s406 = sadd.s32 %s405, %s403
        %s407 = smul.addr %s406, 4
        %s408 = scalar_lea.vmem %s5, %s407
        // Predicated region
        $region53: #{forward.11} parent=39 // pred_check
          %p409 = pneg %p162
        $region54: #{forward.11} parent=39 // pred_check_branch
          %411 = sbr.rel (%p409) target = $region56
        $region55: #{forward.11} parent=39 // pred_region
          _
        $region56: #{forward.11} parent=39 // pred_fallthru
          _
      $region40: #{forward.11} parent=5 // pred_fallthru
        _
      %p412 = scmp.le.s32.totalorder 2, %s13
      // Predicated region
      $region57: #{forward.11} parent=5 // pred_check
        %p413 = pneg %p412
      $region58: #{forward.11} parent=5 // pred_check_branch
        %415 = sbr.rel (%p413) target = $region60
      $region59: #{forward.11} parent=5 // pred_region
        %s416 = ssub.s32 %s13, 2
        // Predicated region
        $region61: #{forward.11} parent=59 // pred_check
          %p417 = pneg %p168
        $region62: #{forward.11} parent=59 // pred_check_branch
          %419 = sbr.rel (%p417) target = $region64
        $region63: #{forward.11} parent=59 // pred_region
          %p420 = scmp.lt.s32.totalorder %s24, 1
          %s421 = scalar_select %p420, %s24, 1
          %p422 = scmp.lt.s32.totalorder %s25, 0
          %s423 = scalar_select %p422, %s25, 0
          %s424 = sadd.s32 %s423, %s421
          %s425 = smul.addr %s424, 4
          %s426 = scalar_lea.vmem %s5, %s425
        $region64: #{forward.11} parent=59 // pred_fallthru
          _
      $region60: #{forward.11} parent=5 // pred_fallthru
        _
    $region6: #{forward.11} parent=1 // loop_footer
      %s17 = sadd.s32 1, %s13
    $region7: #{forward.11} parent=1 // loop_footer_branch
      %12 = sbr.rel target = $region3
    $region8: #{forward.11} parent=1 // loop_exit
      _
    %427 = vsyncpa [#allocation4], 1
    %s428 = scalar_lea.sflag [#allocation4], 1
    %429 = vsyncpa %s428, 1
    %430 = vsyncpa [#allocation6], 1

// kernel: forward.12
$region0: #{forward.12}
  #allocation0 [shape = 'u32[]', space=smem, size = 0x4, offset = 0x4, fixed_abs, tag = 'smem constant byte address 0x4 - core index']
  #allocation1 [shape = 'u32[72,128]{1,0:T(1,128)}', space=vmem, size = 0x9000, scoped, tag = 'internal scratch']
  #allocation2 [shape = 'f32[8,128]{1,0:T(8,128)}', space=vmem, size = 0x1000, scoped, tag = 'scratch operand']
  %s0 = inlined_call_operand.vmem [shape: f32[2,4,128], index: 0, kind: input, shape index: {}]
  %s1 = inlined_call_operand.hbm [shape: f32[128,128], index: 1, kind: input, shape index: {}]
  %s2 = inlined_call_operand.vmem [shape: f32[1,128], index: 2, kind: input, shape index: {}]
  %s3 = inlined_call_operand.hbm [shape: f32[128,128], index: 3, kind: input, shape index: {}]
  %s4 = inlined_call_operand.vmem [shape: f32[5,128], index: 4, kind: input, shape index: {}]
  %s5 = inlined_call_operand.vmem [shape: f32[2,4,128], index: 5, kind: output, shape index: {}]
  %s6 = sld [smem:[#allocation0]]
  $region65: #{forward.12} parent=0
    _
  %s8 = ssub.s32 1, %s6
  %s9 = scalar_select 0, %s8, %s6
  $region1: #{forward.12} parent=0
    #allocation3 [shape = 'u8[65536]{0}', space=vmem, size = 0x10000, scoped, tag = 'input window, operand 1, single buffered']
    #allocation4 [shape = 's32[2]{0}', space=sflag, size = 0x8, scoped, tag = 'scoped memory for forward.12']
    #allocation5 [shape = 'u8[65536]{0}', space=vmem, size = 0x10000, scoped, tag = 'input window, operand 3, single buffered']
    #allocation6 [shape = 's32[1]{0}', space=sflag, size = 0x4, scoped, tag = 'scoped memory for forward.12']
    %10 = vsyncpa [#allocation4], 0
    %11 = vsyncpa [#allocation6], 0
    loop: start=0, step=1, limit=4
    $region2: #{forward.12} parent=1 // loop_pre_header
      _
    $region3: #{forward.12} parent=1 // loop_header
      %s13 = sphi 0, %s17
      %p14 = scmp.ge.s32.totalorder %s13, 4
      %s20 = sphi 0, %s32
      %s21 = sphi 0, %s28
      %s22 = sphi 0, %s20
      %s23 = sphi 0, %s21
      %s24 = sphi 0, %s22
      %s25 = sphi 0, %s23
      %s37 = sphi 0, %s39
      %s40 = sphi 0, %s37
      %s41 = sphi 0, %s40
      %s57 = sphi 0, %s41
      %s61 = sphi 0, %s61
      %s63 = sphi 0, %s61
      %s64 = sphi 0, %s63
      %s78 = sphi 0, %s64
      %s82 = sphi 0, %s82
      %s84 = sphi 0, %s82
      %s85 = sphi 0, %s84
      %s99 = sphi 0, %s85
      %s103 = sphi 0, %s103
      %s105 = sphi 0, %s103
      %s106 = sphi 0, %s105
      %s120 = sphi 0, %s106
      %s124 = sphi 0, %s124
      %s126 = sphi 0, %s124
      %s127 = sphi 0, %s126
      %s141 = sphi 0, %s127
      %s149 = sphi 0, %s151
      %s152 = sphi 0, %s149
      %s153 = sphi 0, %s152
      %s169 = sphi 0, %s153
    $region4: #{forward.12} parent=1 // loop_header_branch
      %16 = sbr.rel (%p14) target = $region8
    $region5: #{forward.12} parent=1 // loop_body
      %s18 = ssub.s32 %s13, 1
      %s19 = ssub.s32 %s13, 2
      %s26 = sadd.s32 1, %s21
      %p27 = scmp.ge.s32.totalorder %s26, 1
      %s28 = scalar_select %p27, 0, %s26
      %s29 = sadd.s32 1, %s20
      %s30 = scalar_select %p27, %s29, %s20
      %p31 = scmp.ge.s32.totalorder %s30, 2
      %s32 = scalar_select %p31, 0, %s30
      %s33 = ssub.s32 %s20, %s32
      %s34 = ssub.s32 %s21, %s28
      %s35 = sor.u32 %s33, %s34
      %p36 = scmp.eq.s32.totalorder %s35, 0
      %s38 = sadd.s32 %s37, 1
      %s39 = scalar_select %p36, %s37, %s38
      %p42 = pneg %p36
      %p43 = scmp.eq.s32.totalorder %s13, 1
      %p44 = por %p42, %p43
      %p45 = scmp.ne.s32.totalorder %s37, %s40
      %p46 = scmp.eq.s32.totalorder %s13, 0
      %p47 = por %p45, %p46
      %p48 = scmp.ne.s32.totalorder %s37, %s40
      %p49 = scmp.eq.s32.totalorder %s18, 1
      %p50 = por %p48, %p49
      %p51 = scmp.ne.s32.totalorder %s40, %s41
      %p52 = scmp.eq.s32.totalorder %s18, 0
      %p53 = por %p51, %p52
      %p54 = scmp.ne.s32.totalorder %s40, %s41
      %p55 = scmp.eq.s32.totalorder %s19, 1
      %p56 = por %p54, %p55
      %p58 = scmp.ne.s32.totalorder %s41, %s57
      %p59 = scmp.eq.s32.totalorder %s19, 0
      %p60 = por %p58, %p59
      %s62 = sadd.s32 %s61, 1
      %p65 = scmp.eq.s32.totalorder %s13, 1
      %p66 = scmp.ne.s32.totalorder %s61, %s63
      %p67 = scmp.eq.s32.totalorder %s13, 0
      %p68 = por %p66, %p67
      %p69 = scmp.ne.s32.totalorder %s61, %s63
      %p70 = scmp.eq.s32.totalorder %s18, 1
      %p71 = por %p69, %p70
      %p72 = scmp.ne.s32.totalorder %s63, %s64
      %p73 = scmp.eq.s32.totalorder %s18, 0
      %p74 = por %p72, %p73
      %p75 = scmp.ne.s32.totalorder %s63, %s64
      %p76 = scmp.eq.s32.totalorder %s19, 1
      %p77 = por %p75, %p76
      %p79 = scmp.ne.s32.totalorder %s64, %s78
      %p80 = scmp.eq.s32.totalorder %s19, 0
      %p81 = por %p79, %p80
      %s83 = sadd.s32 %s82, 1
      %p86 = scmp.eq.s32.totalorder %s13, 1
      %p87 = scmp.ne.s32.totalorder %s82, %s84
      %p88 = scmp.eq.s32.totalorder %s13, 0
      %p89 = por %p87, %p88
      %p90 = scmp.ne.s32.totalorder %s82, %s84
      %p91 = scmp.eq.s32.totalorder %s18, 1
      %p92 = por %p90, %p91
      %p93 = scmp.ne.s32.totalorder %s84, %s85
      %p94 = scmp.eq.s32.totalorder %s18, 0
      %p95 = por %p93, %p94
      %p96 = scmp.ne.s32.totalorder %s84, %s85
      %p97 = scmp.eq.s32.totalorder %s19, 1
      %p98 = por %p96, %p97
      %p100 = scmp.ne.s32.totalorder %s85, %s99
      %p101 = scmp.eq.s32.totalorder %s19, 0
      %p102 = por %p100, %p101
      %s104 = sadd.s32 %s103, 1
      %p107 = scmp.eq.s32.totalorder %s13, 1
      %p108 = scmp.ne.s32.totalorder %s103, %s105
      %p109 = scmp.eq.s32.totalorder %s13, 0
      %p110 = por %p108, %p109
      %p111 = scmp.ne.s32.totalorder %s103, %s105
      %p112 = scmp.eq.s32.totalorder %s18, 1
      %p113 = por %p111, %p112
      %p114 = scmp.ne.s32.totalorder %s105, %s106
      %p115 = scmp.eq.s32.totalorder %s18, 0
      %p116 = por %p114, %p115
      %p117 = scmp.ne.s32.totalorder %s105, %s106
      %p118 = scmp.eq.s32.totalorder %s19, 1
      %p119 = por %p117, %p118
      %p121 = scmp.ne.s32.totalorder %s106, %s120
      %p122 = scmp.eq.s32.totalorder %s19, 0
      %p123 = por %p121, %p122
      %s125 = sadd.s32 %s124, 1
      %p128 = scmp.eq.s32.totalorder %s13, 1
      %p129 = scmp.ne.s32.totalorder %s124, %s126
      %p130 = scmp.eq.s32.totalorder %s13, 0
      %p131 = por %p129, %p130
      %p132 = scmp.ne.s32.totalorder %s124, %s126
      %p133 = scmp.eq.s32.totalorder %s18, 1
      %p134 = por %p132, %p133
      %p135 = scmp.ne.s32.totalorder %s126, %s127
      %p136 = scmp.eq.s32.totalorder %s18, 0
      %p137 = por %p135, %p136
      %p138 = scmp.ne.s32.totalorder %s126, %s127
      %p139 = scmp.eq.s32.totalorder %s19, 1
      %p140 = por %p138, %p139
      %p142 = scmp.ne.s32.totalorder %s127, %s141
      %p143 = scmp.eq.s32.totalorder %s19, 0
      %p144 = por %p142, %p143
      %s145 = ssub.s32 %s20, %s32
      %s146 = ssub.s32 %s21, %s28
      %s147 = sor.u32 %s145, %s146
      %p148 = scmp.eq.s32.totalorder %s147, 0
      %s150 = sadd.s32 %s149, 1
      %s151 = scalar_select %p148, %s149, %s150
      %p154 = pneg %p148
      %p155 = scmp.eq.s32.totalorder %s13, 1
      %p156 = por %p154, %p155
      %p157 = scmp.ne.s32.totalorder %s149, %s152
      %p158 = scmp.eq.s32.totalorder %s13, 0
      %p159 = por %p157, %p158
      %p160 = scmp.ne.s32.totalorder %s149, %s152
      %p161 = scmp.eq.s32.totalorder %s18, 1
      %p162 = por %p160, %p161
      %p163 = scmp.ne.s32.totalorder %s152, %s153
      %p164 = scmp.eq.s32.totalorder %s18, 0
      %p165 = por %p163, %p164
      %p166 = scmp.ne.s32.totalorder %s152, %s153
      %p167 = scmp.eq.s32.totalorder %s19, 1
      %p168 = por %p166, %p167
      %p170 = scmp.ne.s32.totalorder %s153, %s169
      %p171 = scmp.eq.s32.totalorder %s19, 0
      %p172 = por %p170, %p171
      %p173 = scmp.le.s32.totalorder 1, %s13
      %p174 = scmp.lt.s32.totalorder %s13, 3
      %p175 = pnand %p173, %p174
      %p176 = pneg %p175
      // Predicated region
      $region9: #{forward.12} parent=5 // pred_check
        _
      $region10: #{forward.12} parent=5 // pred_check_branch
        %178 = sbr.rel (%p175) target = $region12
      $region11: #{forward.12} parent=5 // pred_region
        %s179 = ssub.s32 %s13, 1
        // Predicated region
        $region13: #{forward.12} parent=11 // pred_check
          %p180 = pneg %p74
        $region14: #{forward.12} parent=11 // pred_check_branch
          %182 = sbr.rel (%p180) target = $region16
        $region15: #{forward.12} parent=11 // pred_region
          %184 = vsyncadd [#allocation4], 0
          %s185 = sshll.u32 %s1, 4
          %s186 = int_to_ptr.hbm [resolvable:$true] %s185
          %s187 = sshll.u32 [#allocation3], 4
          %s188 = int_to_ptr.vmem [resolvable:$true] %s187
          %193 = dma.hbm_to_vmem [thread:$0]  %s186, 2048, %s188, [#allocation4], 128, 128, 8
        $region16: #{forward.12} parent=11 // pred_fallthru
          _
        // Predicated region
        $region17: #{forward.12} parent=11 // pred_check
          %p194 = pneg %p95
        $region18: #{forward.12} parent=11 // pred_check_branch
          %196 = sbr.rel (%p194) target = $region20
        $region19: #{forward.12} parent=11 // pred_region
          _
        $region20: #{forward.12} parent=11 // pred_fallthru
          _
        // Predicated region
        $region21: #{forward.12} parent=11 // pred_check
          %p197 = pneg %p116
        $region22: #{forward.12} parent=11 // pred_check_branch
          %199 = sbr.rel (%p197) target = $region24
        $region23: #{forward.12} parent=11 // pred_region
          %201 = vsyncadd [#allocation6], 0
          %s202 = sshll.u32 %s3, 4
          %s203 = int_to_ptr.hbm [resolvable:$true] %s202
          %s204 = sshll.u32 [#allocation5], 4
          %s205 = int_to_ptr.vmem [resolvable:$true] %s204
          %210 = dma.hbm_to_vmem [thread:$0]  %s203, 2048, %s205, [#allocation6], 128, 128, 8
        $region24: #{forward.12} parent=11 // pred_fallthru
          _
        // Predicated region
        $region25: #{forward.12} parent=11 // pred_check
          %p211 = pneg %p137
        $region26: #{forward.12} parent=11 // pred_check_branch
          %213 = sbr.rel (%p211) target = $region28
        $region27: #{forward.12} parent=11 // pred_region
          _
        $region28: #{forward.12} parent=11 // pred_fallthru
          _
      $region12: #{forward.12} parent=5 // pred_fallthru
        _
      %p214 = scmp.lt.s32.totalorder %s13, 2
      // Predicated region
      $region29: #{forward.12} parent=5 // pred_check
        %p215 = pneg %p214
      $region30: #{forward.12} parent=5 // pred_check_branch
        %217 = sbr.rel (%p215) target = $region32
      $region31: #{forward.12} parent=5 // pred_region
        // Predicated region
        $region33: #{forward.12} parent=31 // pred_check
          %p218 = pneg %p47
        $region34: #{forward.12} parent=31 // pred_check_branch
          %220 = sbr.rel (%p218) target = $region36
        $region35: #{forward.12} parent=31 // pred_region
          %p221 = scmp.lt.s32.totalorder %s20, 1
          %s222 = scalar_select %p221, %s20, 1
          %p223 = scmp.lt.s32.totalorder %s21, 0
          %s224 = scalar_select %p223, %s21, 0
          %s225 = sadd.s32 %s224, %s222
          %s226 = smul.addr %s225, 4
          %s227 = scalar_lea.vmem %s0, %s226
        $region36: #{forward.12} parent=31 // pred_fallthru
          _
      $region32: #{forward.12} parent=5 // pred_fallthru
        _
      %p228 = scmp.le.s32.totalorder 1, %s13
      %p229 = scmp.lt.s32.totalorder %s13, 3
      %p230 = pnand %p228, %p229
      %p231 = pneg %p230
      // Predicated region
      $region37: #{forward.12} parent=5 // pred_check
        _
      $region38: #{forward.12} parent=5 // pred_check_branch
        %233 = sbr.rel (%p230) target = $region40
      $region39: #{forward.12} parent=5 // pred_region
        %s234 = ssub.s32 %s13, 1
        // Predicated region
        $region41: #{forward.12} parent=39 // pred_check
          %p235 = pneg %p74
        $region42: #{forward.12} parent=39 // pred_check_branch
          %237 = sbr.rel (%p235) target = $region44
        $region43: #{forward.12} parent=39 // pred_region
          %239 = dma.done [#allocation4], 2048
        $region44: #{forward.12} parent=39 // pred_fallthru
          _
        // Predicated region
        $region45: #{forward.12} parent=39 // pred_check
          %p240 = pneg %p116
        $region46: #{forward.12} parent=39 // pred_check_branch
          %242 = sbr.rel (%p240) target = $region48
        $region47: #{forward.12} parent=39 // pred_region
          %244 = dma.done [#allocation6], 2048
        $region48: #{forward.12} parent=39 // pred_fallthru
          _
        %p245 = scmp.lt.s32.totalorder %s22, 1
        %s246 = scalar_select %p245, %s22, 1
        %p247 = scmp.lt.s32.totalorder %s23, 0
        %s248 = scalar_select %p247, %s23, 0
        %s249 = sadd.s32 %s248, %s246
        %s250 = smul.addr %s249, 4
        %s251 = scalar_lea.vmem %s0, %s250
        %p252 = pneg %p53
        %p253 = pneg %p50
        %p254 = pneg %p74
        %p255 = pneg %p71
        %p256 = pneg %p95
        %p257 = pneg %p92
        %p258 = pneg %p116
        %p259 = pneg %p113
        %p260 = pneg %p137
        %p261 = pneg %p134
        %p262 = pneg %p165
        %p263 = pneg %p162
        %p264 = scmp.lt.s32.totalorder %s22, 1
        %s265 = scalar_select %p264, %s22, 1
        %p266 = scmp.lt.s32.totalorder %s23, 0
        %s267 = scalar_select %p266, %s23, 0
        %s268 = sadd.s32 %s267, %s265
        %s269 = smul.addr %s268, 4
        %s270 = scalar_lea.vmem %s5, %s269
        %p271 = scmp.lt.s32.totalorder %s22, 1
        %s272 = scalar_select %p271, %s22, 1
        %p273 = scmp.lt.s32.totalorder %s23, 0
        %s274 = scalar_select %p273, %s23, 0
        %s275 = sadd.s32 %s274, %s272
        %s276 = smul.addr %s275, 4
        %s277 = scalar_lea.vmem %s0, %s276
        %p278 = scmp.lt.s32.totalorder %s22, 1
        %s279 = scalar_select %p278, %s22, 1
        %p280 = scmp.lt.s32.totalorder %s23, 0
        %s281 = scalar_select %p280, %s23, 0
        %s282 = sadd.s32 %s281, %s279
        %s283 = smul.addr %s282, 4
        %s284 = scalar_lea.vmem %s5, %s283
        %v285 = vld [vmem:[%s277] sm:$0xf]
        %v286 = vpack.c.bf16 %v285, %v285
        %v287 = vld [vmem:[#allocation3] sm:$0xff]
        %v288 = vld [vmem:[#allocation3 + $0x8] sm:$0xff]
        %v289 = vld [vmem:[#allocation3 + $0x10] sm:$0xff]
        %v290 = vld [vmem:[#allocation3 + $0x18] sm:$0xff]
        %v291 = vld [vmem:[#allocation3 + $0x20] sm:$0xff]
        %v292 = vld [vmem:[#allocation3 + $0x28] sm:$0xff]
        %v293 = vld [vmem:[#allocation3 + $0x30] sm:$0xff]
        %v294 = vld [vmem:[#allocation3 + $0x38] sm:$0xff]
        %v295 = vld [vmem:[#allocation3 + $0x40] sm:$0xff]
        %v296 = vld [vmem:[#allocation3 + $0x48] sm:$0xff]
        %v297 = vld [vmem:[#allocation3 + $0x50] sm:$0xff]
        %v298 = vld [vmem:[#allocation3 + $0x58] sm:$0xff]
        %v299 = vld [vmem:[#allocation3 + $0x60] sm:$0xff]
        %v300 = vld [vmem:[#allocation3 + $0x68] sm:$0xff]
        %v301 = vld [vmem:[#allocation3 + $0x70] sm:$0xff]
        %v302 = vld [vmem:[#allocation3 + $0x78] sm:$0xff]
        %v303 = vpack.c.bf16 %v288, %v287
        %v304 = vpack.c.bf16 %v290, %v289
        %v305 = vpack.c.bf16 %v292, %v291
        %v306 = vpack.c.bf16 %v294, %v293
        %v307 = vpack.c.bf16 %v296, %v295
        %v308 = vpack.c.bf16 %v298, %v297
        %v309 = vpack.c.bf16 %v300, %v299
        %v310 = vpack.c.bf16 %v302, %v301
        %v311 = vld [vmem:[%s2] sm:$0x1]
        %v313 = vperm.slane %v311, 0
        %315 = vmatpush.bf16.msra.mxu0 %v310
        %316 = vmatpush.bf16.msra.mxu0 %v309
        %317 = vmatpush.bf16.msra.mxu0 %v308
        %318 = vmatpush.bf16.msra.mxu0 %v307
        %319 = vmatpush.bf16.msra.mxu0 %v306
        %320 = vmatpush.bf16.msra.mxu0 %v305
        %321 = vmatpush.bf16.msra.mxu0 %v304
        %322 = vmatpush.bf16.msra.mxu0 %v303
        %323 = vmatmul.bf16.gmra.mxu0 %v286
        %v324 = vpop.f32.mrf.mxu0
        %v325 = vadd.f32 %v313, %v324
        %v326 = vpop.f32.mrf.mxu0
        %327 = vdwg.mxu0
        %v328 = vmax.f32 %v325, 0.0
        %v329 = vpack.c.bf16 %v328, %v328
        %v330 = vld [vmem:[#allocation5] sm:$0xff]
        %v331 = vld [vmem:[#allocation5 + $0x8] sm:$0xff]
        %v332 = vld [vmem:[#allocation5 + $0x10] sm:$0xff]
        %v333 = vld [vmem:[#allocation5 + $0x18] sm:$0xff]
        %v334 = vld [vmem:[#allocation5 + $0x20] sm:$0xff]
        %v335 = vld [vmem:[#allocation5 + $0x28] sm:$0xff]
        %v336 = vld [vmem:[#allocation5 + $0x30] sm:$0xff]
        %v337 = vld [vmem:[#allocation5 + $0x38] sm:$0xff]
        %v338 = vld [vmem:[#allocation5 + $0x40] sm:$0xff]
        %v339 = vld [vmem:[#allocation5 + $0x48] sm:$0xff]
        %v340 = vld [vmem:[#allocation5 + $0x50] sm:$0xff]
        %v341 = vld [vmem:[#allocation5 + $0x58] sm:$0xff]
        %v342 = vld [vmem:[#allocation5 + $0x60] sm:$0xff]
        %v343 = vld [vmem:[#allocation5 + $0x68] sm:$0xff]
        %v344 = vld [vmem:[#allocation5 + $0x70] sm:$0xff]
        %v345 = vld [vmem:[#allocation5 + $0x78] sm:$0xff]
        %v346 = vpack.c.bf16 %v331, %v330
        %v347 = vpack.c.bf16 %v333, %v332
        %v348 = vpack.c.bf16 %v335, %v334
        %v349 = vpack.c.bf16 %v337, %v336
        %v350 = vpack.c.bf16 %v339, %v338
        %v351 = vpack.c.bf16 %v341, %v340
        %v352 = vpack.c.bf16 %v343, %v342
        %v353 = vpack.c.bf16 %v345, %v344
        %354 = vmatpush.bf16.msra.mxu0 %v353
        %355 = vmatpush.bf16.msra.mxu0 %v352
        %356 = vmatpush.bf16.msra.mxu0 %v351
        %357 = vmatpush.bf16.msra.mxu0 %v350
        %358 = vmatpush.bf16.msra.mxu0 %v349
        %359 = vmatpush.bf16.msra.mxu0 %v348
        %360 = vmatpush.bf16.msra.mxu0 %v347
        %361 = vmatpush.bf16.msra.mxu0 %v346
        %362 = vmatmul.bf16.gmra.mxu0 %v329
        %v363 = vpop.f32.mrf.mxu0
        %v364 = vadd.f32 0.0, %v363
        %v365 = vpop.f32.mrf.mxu0
        %366 = vdwg.mxu0
        %p367 = scmp.eq.s32.totalorder %s23, 0
        // Predicated region
        $region49: #{forward.12} parent=39 // pred_check
          %p368 = pneg %p367
        $region50: #{forward.12} parent=39 // pred_check_branch
          %370 = sbr.rel (%p368) target = $region52
        $region51: #{forward.12} parent=39 // pred_region
          %371 = vst [vmem:[#allocation2] sm:$0xf] 0.0
        $region52: #{forward.12} parent=39 // pred_fallthru
          _
        %372 = vst [vmem:[#allocation2 + $0x4] sm:$0xf] %v364
        %v373 = vld [vmem:[#allocation2] sm:$0xff]
        %v374 = vadd.f32 %v364, %v285
        %v375 = vld [vmem:[%s4] sm:$0x1f]
        %v376 = vperm.slane %v375, 0
        %v377 = vmul.f32 %v376, %v373
        %v379 = vrot.slane %v377, 4
        %v381 = vadd.f32 %v374, %v379
        %v382 = vperm.slane %v375, 1
        %v383 = vmul.f32 %v382, %v373
        %v385 = vrot.slane %v383, 3
        %v387 = vadd.f32 %v381, %v385
        %v388 = vperm.slane %v375, 2
        %v389 = vmul.f32 %v388, %v373
        %v391 = vrot.slane %v389, 2
        %v393 = vadd.f32 %v387, %v391
        %v394 = vperm.slane %v375, 3
        %v395 = vmul.f32 %v394, %v373
        %v397 = vrot.slane %v395, 1
        %v399 = vadd.f32 %v393, %v397
        %v400 = vperm.slane %v375, 4
        %v401 = vmul.f32 %v400, %v373
        %v402 = vadd.f32 %v399, %v401
        %403 = vst [vmem:[%s284] sm:$0xf] %v402
        %404 = vst [vmem:[#allocation2 - $0x4] sm:$0xf0] %v373
        %p405 = scmp.lt.s32.totalorder %s22, 1
        %s406 = scalar_select %p405, %s22, 1
        %p407 = scmp.lt.s32.totalorder %s23, 0
        %s408 = scalar_select %p407, %s23, 0
        %s409 = sadd.s32 %s408, %s406
        %s410 = smul.addr %s409, 4
        %s411 = scalar_lea.vmem %s5, %s410
        // Predicated region
        $region53: #{forward.12} parent=39 // pred_check
          %p412 = pneg %p162
        $region54: #{forward.12} parent=39 // pred_check_branch
          %414 = sbr.rel (%p412) target = $region56
        $region55: #{forward.12} parent=39 // pred_region
          _
        $region56: #{forward.12} parent=39 // pred_fallthru
          _
      $region40: #{forward.12} parent=5 // pred_fallthru
        _
      %p415 = scmp.le.s32.totalorder 2, %s13
      // Predicated region
      $region57: #{forward.12} parent=5 // pred_check
        %p416 = pneg %p415
      $region58: #{forward.12} parent=5 // pred_check_branch
        %418 = sbr.rel (%p416) target = $region60
      $region59: #{forward.12} parent=5 // pred_region
        %s419 = ssub.s32 %s13, 2
        // Predicated region
        $region61: #{forward.12} parent=59 // pred_check
          %p420 = pneg %p168
        $region62: #{forward.12} parent=59 // pred_check_branch
          %422 = sbr.rel (%p420) target = $region64
        $region63: #{forward.12} parent=59 // pred_region
          %p423 = scmp.lt.s32.totalorder %s24, 1
          %s424 = scalar_select %p423, %s24, 1
          %p425 = scmp.lt.s32.totalorder %s25, 0
          %s426 = scalar_select %p425, %s25, 0
          %s427 = sadd.s32 %s426, %s424
          %s428 = smul.addr %s427, 4
          %s429 = scalar_lea.vmem %s5, %s428
        $region64: #{forward.12} parent=59 // pred_fallthru
          _
      $region60: #{forward.12} parent=5 // pred_fallthru
        _
    $region6: #{forward.12} parent=1 // loop_footer
      %s17 = sadd.s32 1, %s13
    $region7: #{forward.12} parent=1 // loop_footer_branch
      %12 = sbr.rel target = $region3
    $region8: #{forward.12} parent=1 // loop_exit
      _
    %430 = vsyncpa [#allocation4], 1
    %s431 = scalar_lea.sflag [#allocation4], 1
    %432 = vsyncpa %s431, 1
    %433 = vsyncpa [#allocation6], 1

</llo_original>
